<compile_context>
chip_gen: v6e
topology: v6e:2x2x1
jax: 0.10.0
libtpu: 0.0.40
codegen_flags: <defaults>
</compile_context>

<pallas_src>
import functools

import jax
import jax.numpy as jnp
from jax.experimental import pallas as pl
from jax.experimental.pallas import tpu as pltpu


# ----------------------------------------------------------------------------
# helpers
# ----------------------------------------------------------------------------
def _round_up(x, m):
    return (x + m - 1) // m * m


def _choose_tile(d, max_tile, unit):
    """Return (tile, padded_dim) with tile | padded_dim and tile % unit == 0."""
    dp = _round_up(max(d, unit), unit)
    if dp <= max_tile:
        return dp, dp
    for t in range(max_tile, unit - 1, -unit):
        if dp % t == 0:
            return t, dp
    dp = _round_up(dp, max_tile)
    return max_tile, dp


def _tpu_caps():
    """Generation-aware (tm_cap, vmem_limit_bytes)."""
    phys = 64 * 1024 * 1024                      # conservative default (v7x/unknown)
    try:
        info = pltpu.get_tpu_info()
        phys = int(getattr(info, "vmem_capacity_bytes", phys) or phys)
    except Exception:
        pass
    if phys >= 100 * 1024 * 1024:                # v5e / v6e: 128 MiB physical VMEM
        return 512, 96 * 1024 * 1024
    return 512, 48 * 1024 * 1024                 # v7x: 64 MiB per TensorCore


# ----------------------------------------------------------------------------
# Kernel 1: weight-resident matmul, fused bias + optional residual add + ReLU.
# Grid = (Mp // tm,); the full (Kp, Np) weight lives in VMEM with a constant
# block index (fetched once), so no accumulator scratch or RMW is needed.
# ----------------------------------------------------------------------------
def _mm_resident_kernel(*refs, relu, has_residual):
    if has_residual:
        x_ref, w_ref, b_ref, res_ref, o_ref = refs
    else:
        x_ref, w_ref, b_ref, o_ref = refs
        res_ref = None
    acc = jnp.dot(x_ref[...], w_ref[...], preferred_element_type=jnp.float32)
    acc = acc + b_ref[...]
    if has_residual:
        acc = acc + res_ref[...].astype(jnp.float32)
    if relu:
        acc = jnp.maximum(acc, 0.0)
    o_ref[...] = acc.astype(o_ref.dtype)


# ----------------------------------------------------------------------------
# Kernel 1b: fallback k-split matmul (only when the weight cannot be made VMEM
# resident).  Correctness of the write-at-last-k pattern requires k to stay
# the innermost grid axis.
# ----------------------------------------------------------------------------
def _mm_tiled_kernel(*refs, relu, has_residual):
    if has_residual:
        x_ref, w_ref, b_ref, res_ref, o_ref, acc_ref = refs
    else:
        x_ref, w_ref, b_ref, o_ref, acc_ref = refs
        res_ref = None
    k = pl.program_id(2)
    part = jnp.dot(x_ref[...], w_ref[...], preferred_element_type=jnp.float32)

    @pl.when(k == 0)
    def _():
        acc_ref[...] = part

    @pl.when(k > 0)
    def _():
        acc_ref[...] = acc_ref[...] + part

    @pl.when(k == pl.num_programs(2) - 1)
    def _():
        r = acc_ref[...] + b_ref[...]
        if has_residual:
            r = r + res_ref[...].astype(jnp.float32)
        if relu:
            r = jnp.maximum(r, 0.0)
        o_ref[...] = r.astype(o_ref.dtype)


def matmul_bias_act(lhs, w, b, *, relu, residual=None, out_dtype=None):
    """out = act(lhs @ w + b [+ residual]).

    lhs: [M, Kp]  (channels already padded to the weight's Kp)
    w:   [Kp, Np] pre-packed bf16, Kp/Np multiples of 128
    b:   [1, Np]  f32 (folded BN shift)
    residual: optional [M, Np] (added in f32 before the activation)
    """
    M, K = lhs.shape
    Kp, Np = w.shape
    assert K == Kp and Kp % 128 == 0 and Np % 128 == 0
    assert b.shape == (1, Np)
    out_dtype = out_dtype if out_dtype is not None else w.dtype
    if lhs.dtype != w.dtype:
        lhs = lhs.astype(w.dtype)

    tm_cap, vmem_budget = _tpu_caps()
    tm, Mp = _choose_tile(M, tm_cap, 16)

    has_residual = residual is not None
    if Mp > M:
        lhs = jnp.pad(lhs, ((0, Mp - M), (0, 0)))
        if has_residual:
            residual = jnp.pad(residual, ((0, Mp - M), (0, 0)))
    if has_residual:
        assert residual.shape == (Mp, Np)

    w_bytes = Kp * Np * w.dtype.itemsize
    resident = 2 * w_bytes <= vmem_budget // 2      # double-buffer estimate

    def _vmem_est(tm_):
        e = 2 * (tm_ * Kp * lhs.dtype.itemsize + w_bytes
                 + tm_ * Np * jnp.dtype(out_dtype).itemsize + Np * 4)
        if has_residual:
            e += 2 * tm_ * Np * residual.dtype.itemsize
        return e

    if resident:
        while _vmem_est(tm) > vmem_budget and tm % 32 == 0 and Mp % (tm // 2) == 0:
            tm //= 2
        grid = (Mp // tm,)
        in_specs = [
            pl.BlockSpec((tm, Kp), lambda i: (i, 0)),
            pl.BlockSpec((Kp, Np), lambda i: (0, 0)),     # constant -> fetched once
            pl.BlockSpec((1, Np), lambda i: (0, 0)),
        ]
        if has_residual:
            in_specs.append(pl.BlockSpec((tm, Np), lambda i: (i, 0)))
        out_specs = pl.BlockSpec((tm, Np), lambda i: (i, 0))
        kernel = functools.partial(_mm_resident_kernel, relu=relu,
                                   has_residual=has_residual)
        scratch = []
        dims = ("parallel",)
    else:
        tk, _ = _choose_tile(Kp, 2048, 128)
        tn, _ = _choose_tile(Np, 512, 128)
        grid = (Mp // tm, Np // tn, Kp // tk)
        in_specs = [
            pl.BlockSpec((tm, tk), lambda i, j, k: (i, k)),
            pl.BlockSpec((tk, tn), lambda i, j, k: (k, j)),
            pl.BlockSpec((1, tn), lambda i, j, k: (0, j)),
        ]
        if has_residual:
            in_specs.append(pl.BlockSpec((tm, tn), lambda i, j, k: (i, j)))
        out_specs = pl.BlockSpec((tm, tn), lambda i, j, k: (i, j))
        kernel = functools.partial(_mm_tiled_kernel, relu=relu,
                                   has_residual=has_residual)
        scratch = [pltpu.VMEM((tm, tn), jnp.float32)]
        dims = ("parallel", "parallel", "arbitrary")   # k must stay innermost

    operands = [lhs, w, b] + ([residual] if has_residual else [])
    out = pl.pallas_call(
        kernel,
        out_shape=jax.ShapeDtypeStruct((Mp, Np), out_dtype),
        grid_spec=pltpu.PrefetchScalarGridSpec(
            num_scalar_prefetch=0,
            grid=grid,
            in_specs=in_specs,
            out_specs=out_specs,
            scratch_shapes=scratch,
        ),
        compiler_params=pltpu.CompilerParams(
            dimension_semantics=dims,
            vmem_limit_bytes=vmem_budget,
        ),
    )(*operands)

    return out[:M] if Mp > M else out


# ----------------------------------------------------------------------------
# Kernel 2: fused 3x3 / stride-1 conv (+ folded BN bias + ReLU).
# One grid step processes one image: the spatially padded NHWC tile and the
# whole (9*Cp, Np) weight are VMEM resident; the nine taps are shifted
# in-VMEM windows accumulated on the MXU -- no im2col tensor touches HBM.
# ----------------------------------------------------------------------------
def _conv3x3_s1_kernel(x_ref, w_ref, b_ref, o_ref, *, H, W, Cp, relu):
    Np = o_ref.shape[-1]
    acc = jnp.zeros((H * W, Np), jnp.float32)
    for dh in range(3):
        for dw in range(3):
            t = dh * 3 + dw
            tap = x_ref[0, dh:dh + H, dw:dw + W, :].reshape(H * W, Cp)
            acc = acc + jnp.dot(tap, w_ref[t * Cp:(t + 1) * Cp, :],
                                preferred_element_type=jnp.float32)
    acc = acc + b_ref[...]
    if relu:
        acc = jnp.maximum(acc, 0.0)
    o_ref[0] = acc.astype(o_ref.dtype)


def conv3x3_s1_fused(x_nhwc, w, b, *, relu, out_dtype=None):
    B, H, W, Cp = x_nhwc.shape
    K9, Np = w.shape
    assert K9 == 9 * Cp and Cp % 128 == 0 and Np % 128 == 0
    out_dtype = out_dtype if out_dtype is not None else w.dtype
    if x_nhwc.dtype != w.dtype:
        x_nhwc = x_nhwc.astype(w.dtype)
    xp = jnp.pad(x_nhwc, ((0, 0), (1, 1), (1, 1), (0, 0)))   # spatial halo only
    _, vmem_budget = _tpu_caps()

    out = pl.pallas_call(
        functools.partial(_conv3x3_s1_kernel, H=H, W=W, Cp=Cp, relu=relu),
        out_shape=jax.ShapeDtypeStruct((B, H * W, Np), out_dtype),
        grid_spec=pltpu.PrefetchScalarGridSpec(
            num_scalar_prefetch=0,
            grid=(B,),
            in_specs=[
                pl.BlockSpec((1, H + 2, W + 2, Cp), lambda i: (i, 0, 0, 0)),
                pl.BlockSpec((9 * Cp, Np), lambda i: (0, 0)),   # resident weight
                pl.BlockSpec((1, Np), lambda i: (0, 0)),
            ],
            out_specs=pl.BlockSpec((1, H * W, Np), lambda i: (i, 0, 0)),
        ),
        compiler_params=pltpu.CompilerParams(
            dimension_semantics=("parallel",),
            vmem_limit_bytes=vmem_budget,
        ),
    )(xp, w, b)
    return out.reshape(B * H * W, Np)


# ----------------------------------------------------------------------------
# Parameter preparation (done ONCE, outside the jitted forward): fold
# eval-mode BN, relayout (kh,kw,Cin,O), pad channels to multiples of 128, bf16.
# ----------------------------------------------------------------------------
def _fold_bn(w_oihw, bn, eps=1e-5):
    gamma, beta, mean, var = bn
    scale = gamma / jnp.sqrt(var + eps)
    w = w_oihw * scale[:, None, None, None]
    b = beta - mean * scale
    return w, b


def _pack_conv(w_oihw, bias, cin_pad, cout_pad, dtype):
    O, C, kh, kw = w_oihw.shape
    w = jnp.transpose(w_oihw, (2, 3, 1, 0))                       # (kh,kw,C,O)
    w = jnp.pad(w, ((0, 0), (0, 0), (0, cin_pad - C), (0, cout_pad - O)))
    w = w.reshape(kh * kw * cin_pad, cout_pad).astype(dtype)
    b = jnp.pad(bias, (0, cout_pad - O)).astype(jnp.float32).reshape(1, cout_pad)
    return w, b


def prepare_bottleneck_params(raw, weight_dtype=jnp.bfloat16, eps=1e-5):
    planes = raw["conv1_w"].shape[0]
    inplanes = raw["conv1_w"].shape[1]
    cin_p = _round_up(inplanes, 128)
    p_p = _round_up(planes, 128)
    o_p = _round_up(4 * planes, 128)

    packed = {}
    w, b = _fold_bn(raw["conv1_w"], raw["bn1"], eps)
    packed["w1"], packed["b1"] = _pack_conv(w, b, cin_p, p_p, weight_dtype)
    w, b = _fold_bn(raw["conv2_w"], raw["bn2"], eps)
    packed["w2"], packed["b2"] = _pack_conv(w, b, p_p, p_p, weight_dtype)
    w, b = _fold_bn(raw["conv3_w"], raw["bn3"], eps)
    packed["w3"], packed["b3"] = _pack_conv(w, b, p_p, o_p, weight_dtype)
    if "down_w" in raw:
        w, b = _fold_bn(raw["down_w"], raw["bn_d"], eps)
        packed["wd"], packed["bd"] = _pack_conv(w, b, cin_p, o_p, weight_dtype)
    return packed


# ----------------------------------------------------------------------------
# im2col, only for the rare stride-2 blocks (channels already 128-aligned
# there in ResNet50, so the K-side padding compounding is moot).
# ----------------------------------------------------------------------------
def _im2col_3x3(x_nhwc, stride):
    B, H, W, C = x_nhwc.shape
    Ho = (H + 2 - 3) // stride + 1
    Wo = (W + 2 - 3) // stride + 1
    xp = jnp.pad(x_nhwc, ((0, 0), (1, 1), (1, 1), (0, 0)))
    taps = []
    for dh in range(3):
        for dw in range(3):
            taps.append(xp[:, dh:dh + (Ho - 1) * stride + 1:stride,
                           dw:dw + (Wo - 1) * stride + 1:stride, :])
    patches = jnp.concatenate(taps, axis=-1)            # [B,Ho,Wo,9*C]
    return patches.reshape(B * Ho * Wo, 9 * C), (Ho, Wo)


# ----------------------------------------------------------------------------
# Bottleneck forward (eval mode).  NCHW in / NCHW out: the layout conversion,
# channel padding and bf16 cast happen once here (in a full network they would
# live at the model boundary and inner blocks would consume padded NHWC bf16).
# ----------------------------------------------------------------------------
def bottleneck_forward(x_nchw, packed, *, stride, planes, out_dtype=jnp.float32):
    compute_dtype = packed["w1"].dtype
    cin_pad = packed["w1"].shape[0]
    p_pad = packed["w1"].shape[1]

    B, C, H, W = x_nchw.shape
    x = jnp.transpose(x_nchw, (0, 2, 3, 1))               # NCHW -> NHWC
    if C < cin_pad:
        x = jnp.pad(x, ((0, 0), (0, 0), (0, 0), (0, cin_pad - C)))
    x = x.astype(compute_dtype)                           # single bf16 cast, reused
    x_flat = x.reshape(B * H * W, cin_pad)

    # conv1 (1x1) + bn1 + relu
    out1 = matmul_bias_act(x_flat, packed["w1"], packed["b1"], relu=True,
                           out_dtype=compute_dtype)

    # conv2 (3x3, stride, pad=1) + bn2 + relu
    if stride == 1:
        out2 = conv3x3_s1_fused(out1.reshape(B, H, W, p_pad),
                                packed["w2"], packed["b2"], relu=True,
                                out_dtype=compute_dtype)
        Ho, Wo = H, W
    else:
        # TODO(synk): stride-2 blocks (3 per ResNet50) still go through an XLA
        # im2col; a fused even/odd-subsampled variant would remove that too.
        patches, (Ho, Wo) = _im2col_3x3(out1.reshape(B, H, W, p_pad), stride)
        out2 = matmul_bias_act(patches, packed["w2"], packed["b2"], relu=True,
                               out_dtype=compute_dtype)

    # residual branch (bf16; the add is done in f32 inside the conv3 kernel)
    if "wd" in packed:
        xs = x[:, ::stride, ::stride, :].reshape(B * Ho * Wo, cin_pad)
        residual = matmul_bias_act(xs, packed["wd"], packed["bd"], relu=False,
                                   out_dtype=compute_dtype)
    else:
        residual = x_flat
    # TODO(synk): for stride==1 blocks that also have a downsample (layer1.0),
    # w1 and wd could be concatenated along N to share the x_flat read.

    # conv3 (1x1) + bn3 + residual add + relu (fused in the kernel epilogue)
    out3 = matmul_bias_act(out2, packed["w3"], packed["b3"], relu=True,
                           residual=residual, out_dtype=out_dtype)

    out3 = out3[:, :4 * planes].reshape(B, Ho, Wo, 4 * planes)
    return jnp.transpose(out3, (0, 3, 1, 2))               # NHWC -> NCHW


# ----------------------------------------------------------------------------
# Pure-JAX reference (eval-mode BN, unfolded) for correctness checking
# ----------------------------------------------------------------------------
def reference_forward(x, raw, *, stride, eps=1e-5):
    def conv(x, w, s, pad):
        return jax.lax.conv_general_dilated(
            x, w, (s, s), [(pad, pad), (pad, pad)],
            dimension_numbers=("NCHW", "OIHW", "NCHW"),
            precision=jax.lax.Precision.HIGHEST)

    def bn(x, p):
        g, b, m, v = p
        inv = g / jnp.sqrt(v + eps)
        return (x - m[None, :, None, None]) * inv[None, :, None, None] \
            + b[None, :, None, None]

    out = jax.nn.relu(bn(conv(x, raw["conv1_w"], 1, 0), raw["bn1"]))
    out = jax.nn.relu(bn(conv(out, raw["conv2_w"], stride, 1), raw["bn2"]))
    out = bn(conv(out, raw["conv3_w"], 1, 0), raw["bn3"])
    if "down_w" in raw:
        residual = bn(conv(x, raw["down_w"], stride, 0), raw["bn_d"])
    else:
        residual = x
    return jax.nn.relu(out + residual)


# ----------------------------------------------------------------------------
# Deterministic parameter init
# ----------------------------------------------------------------------------
def init_bottleneck_params(key, inplanes, planes, *, with_downsample):
    ks = jax.random.split(key, 8)

    def conv_w(k, o, i, kh, kw):
        fan_in = i * kh * kw
        return (jax.random.normal(k, (o, i, kh, kw), jnp.float32)
                / jnp.sqrt(jnp.float32(fan_in)))

    def bn_p(k, c):
        k1, k2, k3, k4 = jax.random.split(k, 4)
        gamma = 1.0 + 0.2 * jax.random.normal(k1, (c,), jnp.float32)
        beta = 0.1 * jax.random.normal(k2, (c,), jnp.float32)
        mean = 0.1 * jax.random.normal(k3, (c,), jnp.float32)
        var = 0.5 + jax.random.uniform(k4, (c,), jnp.float32)
        return (gamma, beta, mean, var)

    raw = {
        "conv1_w": conv_w(ks[0], planes, inplanes, 1, 1), "bn1": bn_p(ks[1], planes),
        "conv2_w": conv_w(ks[2], planes, planes, 3, 3),   "bn2": bn_p(ks[3], planes),
        "conv3_w": conv_w(ks[4], planes * 4, planes, 1, 1),
        "bn3": bn_p(ks[5], planes * 4),
    }
    if with_downsample:
        raw["down_w"] = conv_w(ks[6], planes * 4, inplanes, 1, 1)
        raw["bn_d"] = bn_p(ks[7], planes * 4)
    else:
        assert inplanes == planes * 4, "identity shortcut needs inplanes == 4*planes"
    return raw


# TODO(synk): training-mode BatchNorm (batch statistics + stat updates) is not
# implemented; this is the eval-mode forward with BN folded into the convs.

if __name__ == "__main__":
    key = jax.random.PRNGKey(0)
    k1, k2, k3, k4 = jax.random.split(key, 4)
    batch, hw = 2, 16
    # bf16 weights/activations/residual (f32 accumulate) -> loosened tolerance.
    ATOL, RTOL = 1.5e-1, 1e-1

    # Case 1: identity shortcut (stride=1, downsample=None) -> fused 3x3 path.
    inplanes1, planes1 = 64, 16
    raw1 = init_bottleneck_params(k1, inplanes1, planes1, with_downsample=False)
    packed1 = prepare_bottleneck_params(raw1)
    x1 = jax.random.normal(k2, (batch, inplanes1, hw, hw), jnp.float32)
    fwd1 = jax.jit(functools.partial(bottleneck_forward, stride=1, planes=planes1))
    out1 = jax.block_until_ready(fwd1(x1, packed1))
    assert out1.shape == (batch, 4 * planes1, hw, hw), out1.shape
    ref1 = jax.block_until_ready(
        jax.jit(functools.partial(reference_forward, stride=1))(x1, raw1))
    assert jnp.allclose(out1, ref1, atol=ATOL, rtol=RTOL), \
        float(jnp.max(jnp.abs(out1 - ref1)))

    # Case 2: stride-2 block with a conv downsample shortcut (im2col path).
    inplanes2, planes2 = 64, 32
    raw2 = init_bottleneck_params(k3, inplanes2, planes2, with_downsample=True)
    packed2 = prepare_bottleneck_params(raw2)
    x2 = jax.random.normal(k4, (batch, inplanes2, hw, hw), jnp.float32)
    fwd2 = jax.jit(functools.partial(bottleneck_forward, stride=2, planes=planes2))
    out2 = jax.block_until_ready(fwd2(x2, packed2))
    assert out2.shape == (batch, 4 * planes2, hw // 2, hw // 2), out2.shape
    ref2 = jax.block_until_ready(
        jax.jit(functools.partial(reference_forward, stride=2))(x2, raw2))
    assert jnp.allclose(out2, ref2, atol=ATOL, rtol=RTOL), \
        float(jnp.max(jnp.abs(out2 - ref2)))

    print("KERNEL_OK")
</pallas_src>

<mosaic_0001>
module attributes {stable_mosaic.version = 11 : i64} {
  func.func @_mm_resident_kernel(%arg0: i32, %arg1: memref<512x128xbf16, #tpu.memory_space<vmem>>, %arg2: memref<128x128xbf16, #tpu.memory_space<vmem>>, %arg3: memref<1x128xf32, #tpu.memory_space<vmem>>, %arg4: memref<512x128xbf16, #tpu.memory_space<vmem>>) attributes {dimension_semantics = [#tpu.dimension_semantics<parallel>], iteration_bounds = array<i64: 1>, scalar_prefetch = 0 : i64, scratch_operands = 0 : i64, tpu.core_type = #tpu.core_type<tc>, window_params = [{transform_indices = @transform_0, window_bounds = array<i64: 512, 128>}, {pipeline_mode = #tpu.pipeline_mode<synchronous>, transform_indices = @transform_1, window_bounds = array<i64: 128, 128>}, {pipeline_mode = #tpu.pipeline_mode<synchronous>, transform_indices = @transform_2, window_bounds = array<i64: 1, 128>}, {transform_indices = @transform_3, window_bounds = array<i64: 512, 128>}]} {
    %c0 = arith.constant 0 : index
    %c0_0 = arith.constant 0 : index
    %0 = vector.load %arg1[%c0, %c0_0] : memref<512x128xbf16, #tpu.memory_space<vmem>>, vector<512x128xbf16>
    %c0_1 = arith.constant 0 : index
    %c0_2 = arith.constant 0 : index
    %1 = vector.load %arg2[%c0_1, %c0_2] : memref<128x128xbf16, #tpu.memory_space<vmem>>, vector<128x128xbf16>
    %cst = arith.constant dense<0.000000e+00> : vector<512x128xf32>
    %2 = tpu.matmul %0, %1, %cst {dimension_numbers = #tpu.dot_dimension_numbers<[1], [0], [0], [1], [0, 0, 1, 1], [], []>} : vector<512x128xbf16>, vector<128x128xbf16>, vector<512x128xf32> -> vector<512x128xf32>
    %c0_3 = arith.constant 0 : index
    %c0_4 = arith.constant 0 : index
    %3 = vector.load %arg3[%c0_3, %c0_4] : memref<1x128xf32, #tpu.memory_space<vmem>>, vector<1x128xf32>
    %4 = vector.broadcast %3 : vector<1x128xf32> to vector<512x128xf32>
    %5 = arith.addf %2, %4 : vector<512x128xf32>
    %cst_5 = arith.constant 0.000000e+00 : f32
    %6 = vector.broadcast %cst_5 : f32 to vector<512x128xf32>
    %7 = arith.maximumf %5, %6 : vector<512x128xf32>
    %8 = arith.truncf %7 : vector<512x128xf32> to vector<512x128xbf16>
    %c0_6 = arith.constant 0 : index
    %c0_7 = arith.constant 0 : index
    %9 = vector.load %arg4[%c0_6, %c0_7] : memref<512x128xbf16, #tpu.memory_space<vmem>>, vector<512x128xbf16>
    tpu.vector_store %arg4[%c0_6, %c0_7], %8 {strides = array<i32>} : memref<512x128xbf16, #tpu.memory_space<vmem>>, vector<512x128xbf16>,
    return
  }
  func.func @transform_0(%arg0: i32) -> (i32, i32) {
    %c0_i32 = arith.constant 0 : i32
    %c0_i32_0 = arith.constant 0 : i32
    return %arg0, %c0_i32 : i32, i32
  }
  func.func @transform_1(%arg0: i32) -> (i32, i32) {
    %c0_i32 = arith.constant 0 : i32
    %c0_i32_0 = arith.constant 0 : i32
    %c0_i32_1 = arith.constant 0 : i32
    return %c0_i32, %c0_i32_0 : i32, i32
  }
  func.func @transform_2(%arg0: i32) -> (i32, i32) {
    %c0_i32 = arith.constant 0 : i32
    %c0_i32_0 = arith.constant 0 : i32
    %c0_i32_1 = arith.constant 0 : i32
    return %c0_i32, %c0_i32_0 : i32, i32
  }
  func.func @transform_3(%arg0: i32) -> (i32, i32) {
    %c0_i32 = arith.constant 0 : i32
    %c0_i32_0 = arith.constant 0 : i32
    return %arg0, %c0_i32 : i32, i32
  }
}

module attributes {stable_mosaic.version = 11 : i64} {
  func.func @_mm_resident_kernel(%arg0: i32, %arg1: memref<512x128xbf16, #tpu.memory_space<vmem>>, %arg2: memref<128x128xbf16, #tpu.memory_space<vmem>>, %arg3: memref<1x128xf32, #tpu.memory_space<vmem>>, %arg4: memref<512x128xbf16, #tpu.memory_space<vmem>>, %arg5: memref<512x128xf32, #tpu.memory_space<vmem>>) attributes {dimension_semantics = [#tpu.dimension_semantics<parallel>], iteration_bounds = array<i64: 1>, scalar_prefetch = 0 : i64, scratch_operands = 0 : i64, tpu.core_type = #tpu.core_type<tc>, window_params = [{transform_indices = @transform_0, window_bounds = array<i64: 512, 128>}, {pipeline_mode = #tpu.pipeline_mode<synchronous>, transform_indices = @transform_1, window_bounds = array<i64: 128, 128>}, {pipeline_mode = #tpu.pipeline_mode<synchronous>, transform_indices = @transform_2, window_bounds = array<i64: 1, 128>}, {transform_indices = @transform_3, window_bounds = array<i64: 512, 128>}, {transform_indices = @transform_4, window_bounds = array<i64: 512, 128>}]} {
    %c0 = arith.constant 0 : index
    %c0_0 = arith.constant 0 : index
    %0 = vector.load %arg1[%c0, %c0_0] : memref<512x128xbf16, #tpu.memory_space<vmem>>, vector<512x128xbf16>
    %c0_1 = arith.constant 0 : index
    %c0_2 = arith.constant 0 : index
    %1 = vector.load %arg2[%c0_1, %c0_2] : memref<128x128xbf16, #tpu.memory_space<vmem>>, vector<128x128xbf16>
    %cst = arith.constant dense<0.000000e+00> : vector<512x128xf32>
    %2 = tpu.matmul %0, %1, %cst {dimension_numbers = #tpu.dot_dimension_numbers<[1], [0], [0], [1], [0, 0, 1, 1], [], []>} : vector<512x128xbf16>, vector<128x128xbf16>, vector<512x128xf32> -> vector<512x128xf32>
    %c0_3 = arith.constant 0 : index
    %c0_4 = arith.constant 0 : index
    %3 = vector.load %arg3[%c0_3, %c0_4] : memref<1x128xf32, #tpu.memory_space<vmem>>, vector<1x128xf32>
    %4 = vector.broadcast %3 : vector<1x128xf32> to vector<512x128xf32>
    %5 = arith.addf %2, %4 : vector<512x128xf32>
    %c0_5 = arith.constant 0 : index
    %c0_6 = arith.constant 0 : index
    %6 = vector.load %arg4[%c0_5, %c0_6] : memref<512x128xbf16, #tpu.memory_space<vmem>>, vector<512x128xbf16>
    %7 = arith.extf %6 : vector<512x128xbf16> to vector<512x128xf32>
    %8 = arith.addf %5, %7 : vector<512x128xf32>
    %cst_7 = arith.constant 0.000000e+00 : f32
    %9 = vector.broadcast %cst_7 : f32 to vector<512x128xf32>
    %10 = arith.maximumf %8, %9 : vector<512x128xf32>
    %c0_8 = arith.constant 0 : index
    %c0_9 = arith.constant 0 : index
    %11 = vector.load %arg5[%c0_8, %c0_9] : memref<512x128xf32, #tpu.memory_space<vmem>>, vector<512x128xf32>
    tpu.vector_store %arg5[%c0_8, %c0_9], %10 {strides = array<i32>} : memref<512x128xf32, #tpu.memory_space<vmem>>, vector<512x128xf32>,
    return
  }
  func.func @transform_0(%arg0: i32) -> (i32, i32) {
    %c0_i32 = arith.constant 0 : i32
    %c0_i32_0 = arith.constant 0 : i32
    return %arg0, %c0_i32 : i32, i32
  }
  func.func @transform_1(%arg0: i32) -> (i32, i32) {
    %c0_i32 = arith.constant 0 : i32
    %c0_i32_0 = arith.constant 0 : i32
    %c0_i32_1 = arith.constant 0 : i32
    return %c0_i32, %c0_i32_0 : i32, i32
  }
  func.func @transform_2(%arg0: i32) -> (i32, i32) {
    %c0_i32 = arith.constant 0 : i32
    %c0_i32_0 = arith.constant 0 : i32
    %c0_i32_1 = arith.constant 0 : i32
    return %c0_i32, %c0_i32_0 : i32, i32
  }
  func.func @transform_3(%arg0: i32) -> (i32, i32) {
    %c0_i32 = arith.constant 0 : i32
    %c0_i32_0 = arith.constant 0 : i32
    return %arg0, %c0_i32 : i32, i32
  }
  func.func @transform_4(%arg0: i32) -> (i32, i32) {
    %c0_i32 = arith.constant 0 : i32
    %c0_i32_0 = arith.constant 0 : i32
    return %arg0, %c0_i32 : i32, i32
  }
}

module attributes {stable_mosaic.version = 11 : i64} {
  func.func @_conv3x3_s1_kernel(%arg0: i32, %arg1: memref<1x18x18x128xbf16, #tpu.memory_space<vmem>>, %arg2: memref<1152x128xbf16, #tpu.memory_space<vmem>>, %arg3: memref<1x128xf32, #tpu.memory_space<vmem>>, %arg4: memref<1x256x128xbf16, #tpu.memory_space<vmem>>) attributes {dimension_semantics = [#tpu.dimension_semantics<parallel>], iteration_bounds = array<i64: 2>, scalar_prefetch = 0 : i64, scratch_operands = 0 : i64, tpu.core_type = #tpu.core_type<tc>, window_params = [{transform_indices = @transform_0, window_bounds = array<i64: 1, 18, 18, 128>}, {pipeline_mode = #tpu.pipeline_mode<synchronous>, transform_indices = @transform_1, window_bounds = array<i64: 1152, 128>}, {pipeline_mode = #tpu.pipeline_mode<synchronous>, transform_indices = @transform_2, window_bounds = array<i64: 1, 128>}, {transform_indices = @transform_3, window_bounds = array<i64: 1, 256, 128>}]} {
    %cst = arith.constant 0.000000e+00 : f32
    %0 = vector.broadcast %cst : f32 to vector<256x128xf32>
    %c0 = arith.constant 0 : index
    %c0_0 = arith.constant 0 : index
    %c0_1 = arith.constant 0 : index
    %c0_2 = arith.constant 0 : index
    %1 = vector.load %arg1[%c0, %c0_0, %c0_1, %c0_2] : memref<1x18x18x128xbf16, #tpu.memory_space<vmem>>, vector<1x16x16x128xbf16>
    %2 = vector.shape_cast %1 : vector<1x16x16x128xbf16> to vector<16x16x128xbf16>
    %3 = vector.shape_cast %2 : vector<16x16x128xbf16> to vector<256x128xbf16>
    %c0_3 = arith.constant 0 : index
    %c0_4 = arith.constant 0 : index
    %4 = vector.load %arg2[%c0_3, %c0_4] : memref<1152x128xbf16, #tpu.memory_space<vmem>>, vector<128x128xbf16>
    %cst_5 = arith.constant dense<0.000000e+00> : vector<256x128xf32>
    %5 = tpu.matmul %3, %4, %cst_5 {dimension_numbers = #tpu.dot_dimension_numbers<[1], [0], [0], [1], [0, 0, 1, 1], [], []>} : vector<256x128xbf16>, vector<128x128xbf16>, vector<256x128xf32> -> vector<256x128xf32>
    %6 = arith.addf %0, %5 : vector<256x128xf32>
    %c0_6 = arith.constant 0 : index
    %c0_7 = arith.constant 0 : index
    %c1 = arith.constant 1 : index
    %c0_8 = arith.constant 0 : index
    %7 = vector.load %arg1[%c0_6, %c0_7, %c1, %c0_8] : memref<1x18x18x128xbf16, #tpu.memory_space<vmem>>, vector<1x16x16x128xbf16>
    %8 = vector.shape_cast %7 : vector<1x16x16x128xbf16> to vector<16x16x128xbf16>
    %9 = vector.shape_cast %8 : vector<16x16x128xbf16> to vector<256x128xbf16>
    %c128 = arith.constant 128 : index
    %c0_9 = arith.constant 0 : index
    %10 = vector.load %arg2[%c128, %c0_9] : memref<1152x128xbf16, #tpu.memory_space<vmem>>, vector<128x128xbf16>
    %cst_10 = arith.constant dense<0.000000e+00> : vector<256x128xf32>
    %11 = tpu.matmul %9, %10, %cst_10 {dimension_numbers = #tpu.dot_dimension_numbers<[1], [0], [0], [1], [0, 0, 1, 1], [], []>} : vector<256x128xbf16>, vector<128x128xbf16>, vector<256x128xf32> -> vector<256x128xf32>
    %12 = arith.addf %6, %11 : vector<256x128xf32>
    %c0_11 = arith.constant 0 : index
    %c0_12 = arith.constant 0 : index
    %c2 = arith.constant 2 : index
    %c0_13 = arith.constant 0 : index
    %13 = vector.load %arg1[%c0_11, %c0_12, %c2, %c0_13] : memref<1x18x18x128xbf16, #tpu.memory_space<vmem>>, vector<1x16x16x128xbf16>
    %14 = vector.shape_cast %13 : vector<1x16x16x128xbf16> to vector<16x16x128xbf16>
    %15 = vector.shape_cast %14 : vector<16x16x128xbf16> to vector<256x128xbf16>
    %c256 = arith.constant 256 : index
    %c0_14 = arith.constant 0 : index
    %16 = vector.load %arg2[%c256, %c0_14] : memref<1152x128xbf16, #tpu.memory_space<vmem>>, vector<128x128xbf16>
    %cst_15 = arith.constant dense<0.000000e+00> : vector<256x128xf32>
    %17 = tpu.matmul %15, %16, %cst_15 {dimension_numbers = #tpu.dot_dimension_numbers<[1], [0], [0], [1], [0, 0, 1, 1], [], []>} : vector<256x128xbf16>, vector<128x128xbf16>, vector<256x128xf32> -> vector<256x128xf32>
    %18 = arith.addf %12, %17 : vector<256x128xf32>
    %c0_16 = arith.constant 0 : index
    %c1_17 = arith.constant 1 : index
    %c0_18 = arith.constant 0 : index
    %c0_19 = arith.constant 0 : index
    %19 = vector.load %arg1[%c0_16, %c1_17, %c0_18, %c0_19] : memref<1x18x18x128xbf16, #tpu.memory_space<vmem>>, vector<1x16x16x128xbf16>
    %20 = vector.shape_cast %19 : vector<1x16x16x128xbf16> to vector<16x16x128xbf16>
    %21 = vector.shape_cast %20 : vector<16x16x128xbf16> to vector<256x128xbf16>
    %c384 = arith.constant 384 : index
    %c0_20 = arith.constant 0 : index
    %22 = vector.load %arg2[%c384, %c0_20] : memref<1152x128xbf16, #tpu.memory_space<vmem>>, vector<128x128xbf16>
    %cst_21 = arith.constant dense<0.000000e+00> : vector<256x128xf32>
    %23 = tpu.matmul %21, %22, %cst_21 {dimension_numbers = #tpu.dot_dimension_numbers<[1], [0], [0], [1], [0, 0, 1, 1], [], []>} : vector<256x128xbf16>, vector<128x128xbf16>, vector<256x128xf32> -> vector<256x128xf32>
    %24 = arith.addf %18, %23 : vector<256x128xf32>
    %c0_22 = arith.constant 0 : index
    %c1_23 = arith.constant 1 : index
    %c1_24 = arith.constant 1 : index
    %c0_25 = arith.constant 0 : index
    %25 = vector.load %arg1[%c0_22, %c1_23, %c1_24, %c0_25] : memref<1x18x18x128xbf16, #tpu.memory_space<vmem>>, vector<1x16x16x128xbf16>
    %26 = vector.shape_cast %25 : vector<1x16x16x128xbf16> to vector<16x16x128xbf16>
    %27 = vector.shape_cast %26 : vector<16x16x128xbf16> to vector<256x128xbf16>
    %c512 = arith.constant 512 : index
    %c0_26 = arith.constant 0 : index
    %28 = vector.load %arg2[%c512, %c0_26] : memref<1152x128xbf16, #tpu.memory_space<vmem>>, vector<128x128xbf16>
    %cst_27 = arith.constant dense<0.000000e+00> : vector<256x128xf32>
    %29 = tpu.matmul %27, %28, %cst_27 {dimension_numbers = #tpu.dot_dimension_numbers<[1], [0], [0], [1], [0, 0, 1, 1], [], []>} : vector<256x128xbf16>, vector<128x128xbf16>, vector<256x128xf32> -> vector<256x128xf32>
    %30 = arith.addf %24, %29 : vector<256x128xf32>
    %c0_28 = arith.constant 0 : index
    %c1_29 = arith.constant 1 : index
    %c2_30 = arith.constant 2 : index
    %c0_31 = arith.constant 0 : index
    %31 = vector.load %arg1[%c0_28, %c1_29, %c2_30, %c0_31] : memref<1x18x18x128xbf16, #tpu.memory_space<vmem>>, vector<1x16x16x128xbf16>
    %32 = vector.shape_cast %31 : vector<1x16x16x128xbf16> to vector<16x16x128xbf16>
    %33 = vector.shape_cast %32 : vector<16x16x128xbf16> to vector<256x128xbf16>
    %c640 = arith.constant 640 : index
    %c0_32 = arith.constant 0 : index
    %34 = vector.load %arg2[%c640, %c0_32] : memref<1152x128xbf16, #tpu.memory_space<vmem>>, vector<128x128xbf16>
    %cst_33 = arith.constant dense<0.000000e+00> : vector<256x128xf32>
    %35 = tpu.matmul %33, %34, %cst_33 {dimension_numbers = #tpu.dot_dimension_numbers<[1], [0], [0], [1], [0, 0, 1, 1], [], []>} : vector<256x128xbf16>, vector<128x128xbf16>, vector<256x128xf32> -> vector<256x128xf32>
    %36 = arith.addf %30, %35 : vector<256x128xf32>
    %c0_34 = arith.constant 0 : index
    %c2_35 = arith.constant 2 : index
    %c0_36 = arith.constant 0 : index
    %c0_37 = arith.constant 0 : index
    %37 = vector.load %arg1[%c0_34, %c2_35, %c0_36, %c0_37] : memref<1x18x18x128xbf16, #tpu.memory_space<vmem>>, vector<1x16x16x128xbf16>
    %38 = vector.shape_cast %37 : vector<1x16x16x128xbf16> to vector<16x16x128xbf16>
    %39 = vector.shape_cast %38 : vector<16x16x128xbf16> to vector<256x128xbf16>
    %c768 = arith.constant 768 : index
    %c0_38 = arith.constant 0 : index
    %40 = vector.load %arg2[%c768, %c0_38] : memref<1152x128xbf16, #tpu.memory_space<vmem>>, vector<128x128xbf16>
    %cst_39 = arith.constant dense<0.000000e+00> : vector<256x128xf32>
    %41 = tpu.matmul %39, %40, %cst_39 {dimension_numbers = #tpu.dot_dimension_numbers<[1], [0], [0], [1], [0, 0, 1, 1], [], []>} : vector<256x128xbf16>, vector<128x128xbf16>, vector<256x128xf32> -> vector<256x128xf32>
    %42 = arith.addf %36, %41 : vector<256x128xf32>
    %c0_40 = arith.constant 0 : index
    %c2_41 = arith.constant 2 : index
    %c1_42 = arith.constant 1 : index
    %c0_43 = arith.constant 0 : index
    %43 = vector.load %arg1[%c0_40, %c2_41, %c1_42, %c0_43] : memref<1x18x18x128xbf16, #tpu.memory_space<vmem>>, vector<1x16x16x128xbf16>
    %44 = vector.shape_cast %43 : vector<1x16x16x128xbf16> to vector<16x16x128xbf16>
    %45 = vector.shape_cast %44 : vector<16x16x128xbf16> to vector<256x128xbf16>
    %c896 = arith.constant 896 : index
    %c0_44 = arith.constant 0 : index
    %46 = vector.load %arg2[%c896, %c0_44] : memref<1152x128xbf16, #tpu.memory_space<vmem>>, vector<128x128xbf16>
    %cst_45 = arith.constant dense<0.000000e+00> : vector<256x128xf32>
    %47 = tpu.matmul %45, %46, %cst_45 {dimension_numbers = #tpu.dot_dimension_numbers<[1], [0], [0], [1], [0, 0, 1, 1], [], []>} : vector<256x128xbf16>, vector<128x128xbf16>, vector<256x128xf32> -> vector<256x128xf32>
    %48 = arith.addf %42, %47 : vector<256x128xf32>
    %c0_46 = arith.constant 0 : index
    %c2_47 = arith.constant 2 : index
    %c2_48 = arith.constant 2 : index
    %c0_49 = arith.constant 0 : index
    %49 = vector.load %arg1[%c0_46, %c2_47, %c2_48, %c0_49] : memref<1x18x18x128xbf16, #tpu.memory_space<vmem>>, vector<1x16x16x128xbf16>
    %50 = vector.shape_cast %49 : vector<1x16x16x128xbf16> to vector<16x16x128xbf16>
    %51 = vector.shape_cast %50 : vector<16x16x128xbf16> to vector<256x128xbf16>
    %c1024 = arith.constant 1024 : index
    %c0_50 = arith.constant 0 : index
    %52 = vector.load %arg2[%c1024, %c0_50] : memref<1152x128xbf16, #tpu.memory_space<vmem>>, vector<128x128xbf16>
    %cst_51 = arith.constant dense<0.000000e+00> : vector<256x128xf32>
    %53 = tpu.matmul %51, %52, %cst_51 {dimension_numbers = #tpu.dot_dimension_numbers<[1], [0], [0], [1], [0, 0, 1, 1], [], []>} : vector<256x128xbf16>, vector<128x128xbf16>, vector<256x128xf32> -> vector<256x128xf32>
    %54 = arith.addf %48, %53 : vector<256x128xf32>
    %c0_52 = arith.constant 0 : index
    %c0_53 = arith.constant 0 : index
    %55 = vector.load %arg3[%c0_52, %c0_53] : memref<1x128xf32, #tpu.memory_space<vmem>>, vector<1x128xf32>
    %56 = vector.broadcast %55 : vector<1x128xf32> to vector<256x128xf32>
    %57 = arith.addf %54, %56 : vector<256x128xf32>
    %cst_54 = arith.constant 0.000000e+00 : f32
    %58 = vector.broadcast %cst_54 : f32 to vector<256x128xf32>
    %59 = arith.maximumf %57, %58 : vector<256x128xf32>
    %60 = arith.truncf %59 : vector<256x128xf32> to vector<256x128xbf16>
    %c0_55 = arith.constant 0 : index
    %c0_56 = arith.constant 0 : index
    %c0_57 = arith.constant 0 : index
    %61 = vector.load %arg4[%c0_55, %c0_56, %c0_57] : memref<1x256x128xbf16, #tpu.memory_space<vmem>>, vector<1x256x128xbf16>
    %62 = vector.shape_cast %61 : vector<1x256x128xbf16> to vector<256x128xbf16>
    %63 = vector.shape_cast %60 : vector<256x128xbf16> to vector<1x256x128xbf16>
    tpu.vector_store %arg4[%c0_55, %c0_56, %c0_57], %63 {strides = array<i32>} : memref<1x256x128xbf16, #tpu.memory_space<vmem>>, vector<1x256x128xbf16>,
    return
  }
  func.func @transform_0(%arg0: i32) -> (i32, i32, i32, i32) {
    %c0_i32 = arith.constant 0 : i32
    %c0_i32_0 = arith.constant 0 : i32
    %c0_i32_1 = arith.constant 0 : i32
    %c0_i32_2 = arith.constant 0 : i32
    return %arg0, %c0_i32, %c0_i32_0, %c0_i32_1 : i32, i32, i32, i32
  }
  func.func @transform_1(%arg0: i32) -> (i32, i32) {
    %c0_i32 = arith.constant 0 : i32
    %c0_i32_0 = arith.constant 0 : i32
    %c0_i32_1 = arith.constant 0 : i32
    return %c0_i32, %c0_i32_0 : i32, i32
  }
  func.func @transform_2(%arg0: i32) -> (i32, i32) {
    %c0_i32 = arith.constant 0 : i32
    %c0_i32_0 = arith.constant 0 : i32
    %c0_i32_1 = arith.constant 0 : i32
    return %c0_i32, %c0_i32_0 : i32, i32
  }
  func.func @transform_3(%arg0: i32) -> (i32, i32, i32) {
    %c0_i32 = arith.constant 0 : i32
    %c0_i32_0 = arith.constant 0 : i32
    %c0_i32_1 = arith.constant 0 : i32
    return %arg0, %c0_i32, %c0_i32_0 : i32, i32, i32
  }
}

</mosaic_0001>

<llo_original>
// kernel: bottleneck_forward.3
$region0: #{bottleneck_forward.3}
  #allocation0 [shape = 'u32[]', space=smem, size = 0x4, offset = 0x4, fixed_abs, tag = 'smem constant byte address 0x4 - core index']
  #allocation1 [shape = 'u32[144,128]{1,0:T(1,128)}', space=vmem, size = 0x12000, scoped, tag = 'internal scratch']
  %s0 = inlined_call_operand.vmem [shape: bf16[512,128], index: 0, kind: input, shape index: {}]
  %s1 = inlined_call_operand.vmem [shape: bf16[128,128], index: 1, kind: input, shape index: {}]
  %s2 = inlined_call_operand.vmem [shape: f32[1,128], index: 2, kind: input, shape index: {}]
  %s3 = inlined_call_operand.vmem [shape: bf16[512,128], index: 3, kind: output, shape index: {}]
  %s4 = sld [smem:[#allocation0]]
  $region22: #{bottleneck_forward.3} parent=0
    _
  %s6 = ssub.s32 1, %s4
  %s7 = scalar_select 0, %s6, %s4
  // Predicated region
  $region2: #{bottleneck_forward.3} parent=0 // pred_check
    _
  $region3: #{bottleneck_forward.3} parent=0 // pred_check_branch
    %9 = sbr.rel (0) target = $region5
  $region4: #{bottleneck_forward.3} parent=0 // pred_region
    _
  $region5: #{bottleneck_forward.3} parent=0 // pred_fallthru
    _
  // Predicated region
  $region6: #{bottleneck_forward.3} parent=0 // pred_check
    _
  $region7: #{bottleneck_forward.3} parent=0 // pred_check_branch
    %11 = sbr.rel (0) target = $region9
  $region8: #{bottleneck_forward.3} parent=0 // pred_region
    _
  $region9: #{bottleneck_forward.3} parent=0 // pred_fallthru
    _
  // Predicated region
  $region10: #{bottleneck_forward.3} parent=0 // pred_check
    _
  $region11: #{bottleneck_forward.3} parent=0 // pred_check_branch
    %13 = sbr.rel (0) target = $region13
  $region12: #{bottleneck_forward.3} parent=0 // pred_region
    _
  $region13: #{bottleneck_forward.3} parent=0 // pred_fallthru
    _
  %v15 = vld [vmem:[%s0] sm:$0xf]
  %v16 = vld [vmem:[%s0 + $0x4] sm:$0xf]
  %v17 = vld [vmem:[%s0 + $0x8] sm:$0xf]
  %v18 = vld [vmem:[%s0 + $0xc] sm:$0xf]
  %v19 = vld [vmem:[%s0 + $0x10] sm:$0xf]
  %v20 = vld [vmem:[%s0 + $0x14] sm:$0xf]
  %v21 = vld [vmem:[%s0 + $0x18] sm:$0xf]
  %v22 = vld [vmem:[%s0 + $0x1c] sm:$0xf]
  %v23 = vld [vmem:[%s0 + $0x20] sm:$0xf]
  %v24 = vld [vmem:[%s0 + $0x24] sm:$0xf]
  %v25 = vld [vmem:[%s0 + $0x28] sm:$0xf]
  %v26 = vld [vmem:[%s0 + $0x2c] sm:$0xf]
  %v27 = vld [vmem:[%s0 + $0x30] sm:$0xf]
  %v28 = vld [vmem:[%s0 + $0x34] sm:$0xf]
  %v29 = vld [vmem:[%s0 + $0x38] sm:$0xf]
  %v30 = vld [vmem:[%s0 + $0x3c] sm:$0xf]
  %v31 = vld [vmem:[%s0 + $0x40] sm:$0xf]
  %v32 = vld [vmem:[%s0 + $0x44] sm:$0xf]
  %v33 = vld [vmem:[%s0 + $0x48] sm:$0xf]
  %v34 = vld [vmem:[%s0 + $0x4c] sm:$0xf]
  %v35 = vld [vmem:[%s0 + $0x50] sm:$0xf]
  %v36 = vld [vmem:[%s0 + $0x54] sm:$0xf]
  %v37 = vld [vmem:[%s0 + $0x58] sm:$0xf]
  %v38 = vld [vmem:[%s0 + $0x5c] sm:$0xf]
  %v39 = vld [vmem:[%s0 + $0x60] sm:$0xf]
  %v40 = vld [vmem:[%s0 + $0x64] sm:$0xf]
  %v41 = vld [vmem:[%s0 + $0x68] sm:$0xf]
  %v42 = vld [vmem:[%s0 + $0x6c] sm:$0xf]
  %v43 = vld [vmem:[%s0 + $0x70] sm:$0xf]
  %v44 = vld [vmem:[%s0 + $0x74] sm:$0xf]
  %v45 = vld [vmem:[%s0 + $0x78] sm:$0xf]
  %v46 = vld [vmem:[%s0 + $0x7c] sm:$0xf]
  %v47 = vld [vmem:[%s0 + $0x80] sm:$0xf]
  %v48 = vld [vmem:[%s0 + $0x84] sm:$0xf]
  %v49 = vld [vmem:[%s0 + $0x88] sm:$0xf]
  %v50 = vld [vmem:[%s0 + $0x8c] sm:$0xf]
  %v51 = vld [vmem:[%s0 + $0x90] sm:$0xf]
  %v52 = vld [vmem:[%s0 + $0x94] sm:$0xf]
  %v53 = vld [vmem:[%s0 + $0x98] sm:$0xf]
  %v54 = vld [vmem:[%s0 + $0x9c] sm:$0xf]
  %v55 = vld [vmem:[%s0 + $0xa0] sm:$0xf]
  %v56 = vld [vmem:[%s0 + $0xa4] sm:$0xf]
  %v57 = vld [vmem:[%s0 + $0xa8] sm:$0xf]
  %v58 = vld [vmem:[%s0 + $0xac] sm:$0xf]
  %v59 = vld [vmem:[%s0 + $0xb0] sm:$0xf]
  %v60 = vld [vmem:[%s0 + $0xb4] sm:$0xf]
  %v61 = vld [vmem:[%s0 + $0xb8] sm:$0xf]
  %v62 = vld [vmem:[%s0 + $0xbc] sm:$0xf]
  %v63 = vld [vmem:[%s0 + $0xc0] sm:$0xf]
  %v64 = vld [vmem:[%s0 + $0xc4] sm:$0xf]
  %v65 = vld [vmem:[%s0 + $0xc8] sm:$0xf]
  %v66 = vld [vmem:[%s0 + $0xcc] sm:$0xf]
  %v67 = vld [vmem:[%s0 + $0xd0] sm:$0xf]
  %v68 = vld [vmem:[%s0 + $0xd4] sm:$0xf]
  %v69 = vld [vmem:[%s0 + $0xd8] sm:$0xf]
  %v70 = vld [vmem:[%s0 + $0xdc] sm:$0xf]
  %v71 = vld [vmem:[%s0 + $0xe0] sm:$0xf]
  %v72 = vld [vmem:[%s0 + $0xe4] sm:$0xf]
  %v73 = vld [vmem:[%s0 + $0xe8] sm:$0xf]
  %v74 = vld [vmem:[%s0 + $0xec] sm:$0xf]
  %v75 = vld [vmem:[%s0 + $0xf0] sm:$0xf]
  %v76 = vld [vmem:[%s0 + $0xf4] sm:$0xf]
  %v77 = vld [vmem:[%s0 + $0xf8] sm:$0xf]
  %v78 = vld [vmem:[%s0 + $0xfc] sm:$0xf]
  %v79 = vld [vmem:[%s1] sm:$0xf]
  %v80 = vld [vmem:[%s1 + $0x4] sm:$0xf]
  %v81 = vld [vmem:[%s1 + $0x8] sm:$0xf]
  %v82 = vld [vmem:[%s1 + $0xc] sm:$0xf]
  %v83 = vld [vmem:[%s1 + $0x10] sm:$0xf]
  %v84 = vld [vmem:[%s1 + $0x14] sm:$0xf]
  %v85 = vld [vmem:[%s1 + $0x18] sm:$0xf]
  %v86 = vld [vmem:[%s1 + $0x1c] sm:$0xf]
  %v87 = vld [vmem:[%s1 + $0x20] sm:$0xf]
  %v88 = vld [vmem:[%s1 + $0x24] sm:$0xf]
  %v89 = vld [vmem:[%s1 + $0x28] sm:$0xf]
  %v90 = vld [vmem:[%s1 + $0x2c] sm:$0xf]
  %v91 = vld [vmem:[%s1 + $0x30] sm:$0xf]
  %v92 = vld [vmem:[%s1 + $0x34] sm:$0xf]
  %v93 = vld [vmem:[%s1 + $0x38] sm:$0xf]
  %v94 = vld [vmem:[%s1 + $0x3c] sm:$0xf]
  %v95 = vld [vmem:[%s2] sm:$0x1]
  %v97 = vlaneseq
  %v98 = vshrl.u32 %v97, 7
  %v99 = vsub.s32 0, %v98
  %v100 = vrot.slane %v95, %v99
  %v166 = vunpack.c.l.b16 %v15
  %v167 = vunpack.c.l.b16 %v16
  %v168 = vunpack.c.l.b16 %v17
  %v169 = vunpack.c.l.b16 %v18
  %v170 = vunpack.c.l.b16 %v19
  %v171 = vunpack.c.l.b16 %v20
  %v172 = vunpack.c.l.b16 %v21
  %v173 = vunpack.c.l.b16 %v22
  %v174 = vunpack.c.l.b16 %v23
  %v175 = vunpack.c.l.b16 %v24
  %v176 = vunpack.c.l.b16 %v25
  %v177 = vunpack.c.l.b16 %v26
  %v178 = vunpack.c.l.b16 %v27
  %v179 = vunpack.c.l.b16 %v28
  %v180 = vunpack.c.l.b16 %v29
  %v181 = vunpack.c.l.b16 %v30
  %v182 = vunpack.c.l.b16 %v31
  %v183 = vunpack.c.l.b16 %v32
  %v184 = vunpack.c.l.b16 %v33
  %v185 = vunpack.c.l.b16 %v34
  %v186 = vunpack.c.l.b16 %v35
  %v187 = vunpack.c.l.b16 %v36
  %v188 = vunpack.c.l.b16 %v37
  %v189 = vunpack.c.l.b16 %v38
  %v190 = vunpack.c.l.b16 %v39
  %v191 = vunpack.c.l.b16 %v40
  %v192 = vunpack.c.l.b16 %v41
  %v193 = vunpack.c.l.b16 %v42
  %v194 = vunpack.c.l.b16 %v43
  %v195 = vunpack.c.l.b16 %v44
  %v196 = vunpack.c.l.b16 %v45
  %v197 = vunpack.c.l.b16 %v46
  %v198 = vunpack.c.l.b16 %v47
  %v199 = vunpack.c.l.b16 %v48
  %v200 = vunpack.c.l.b16 %v49
  %v201 = vunpack.c.l.b16 %v50
  %v202 = vunpack.c.l.b16 %v51
  %v203 = vunpack.c.l.b16 %v52
  %v204 = vunpack.c.l.b16 %v53
  %v205 = vunpack.c.l.b16 %v54
  %v206 = vunpack.c.l.b16 %v55
  %v207 = vunpack.c.l.b16 %v56
  %v208 = vunpack.c.l.b16 %v57
  %v209 = vunpack.c.l.b16 %v58
  %v210 = vunpack.c.l.b16 %v59
  %v211 = vunpack.c.l.b16 %v60
  %v212 = vunpack.c.l.b16 %v61
  %v213 = vunpack.c.l.b16 %v62
  %v214 = vunpack.c.l.b16 %v63
  %v215 = vunpack.c.l.b16 %v64
  %v216 = vunpack.c.l.b16 %v65
  %v217 = vunpack.c.l.b16 %v66
  %v218 = vunpack.c.l.b16 %v67
  %v219 = vunpack.c.l.b16 %v68
  %v220 = vunpack.c.l.b16 %v69
  %v221 = vunpack.c.l.b16 %v70
  %v222 = vunpack.c.l.b16 %v71
  %v223 = vunpack.c.l.b16 %v72
  %v224 = vunpack.c.l.b16 %v73
  %v225 = vunpack.c.l.b16 %v74
  %v226 = vunpack.c.l.b16 %v75
  %v227 = vunpack.c.l.b16 %v76
  %v228 = vunpack.c.l.b16 %v77
  %v229 = vunpack.c.l.b16 %v78
  %v230 = vpack.c.b16 %v167, %v166
  %v231 = vpack.c.b16 %v169, %v168
  %v232 = vpack.c.b16 %v171, %v170
  %v233 = vpack.c.b16 %v173, %v172
  %v234 = vpack.c.b16 %v175, %v174
  %v235 = vpack.c.b16 %v177, %v176
  %v236 = vpack.c.b16 %v179, %v178
  %v237 = vpack.c.b16 %v181, %v180
  %v238 = vpack.c.b16 %v183, %v182
  %v239 = vpack.c.b16 %v185, %v184
  %v240 = vpack.c.b16 %v187, %v186
  %v241 = vpack.c.b16 %v189, %v188
  %v242 = vpack.c.b16 %v191, %v190
  %v243 = vpack.c.b16 %v193, %v192
  %v244 = vpack.c.b16 %v195, %v194
  %v245 = vpack.c.b16 %v197, %v196
  %v246 = vpack.c.b16 %v199, %v198
  %v247 = vpack.c.b16 %v201, %v200
  %v248 = vpack.c.b16 %v203, %v202
  %v249 = vpack.c.b16 %v205, %v204
  %v250 = vpack.c.b16 %v207, %v206
  %v251 = vpack.c.b16 %v209, %v208
  %v252 = vpack.c.b16 %v211, %v210
  %v253 = vpack.c.b16 %v213, %v212
  %v254 = vpack.c.b16 %v215, %v214
  %v255 = vpack.c.b16 %v217, %v216
  %v256 = vpack.c.b16 %v219, %v218
  %v257 = vpack.c.b16 %v221, %v220
  %v258 = vpack.c.b16 %v223, %v222
  %v259 = vpack.c.b16 %v225, %v224
  %v260 = vpack.c.b16 %v227, %v226
  %v261 = vpack.c.b16 %v229, %v228
  %v310 = vunpack.c.l.b16 %v79
  %v311 = vunpack.c.l.b16 %v80
  %v312 = vunpack.c.l.b16 %v81
  %v313 = vunpack.c.l.b16 %v82
  %v314 = vunpack.c.l.b16 %v83
  %v315 = vunpack.c.l.b16 %v84
  %v316 = vunpack.c.l.b16 %v85
  %v317 = vunpack.c.l.b16 %v86
  %v318 = vunpack.c.l.b16 %v87
  %v319 = vunpack.c.l.b16 %v88
  %v320 = vunpack.c.l.b16 %v89
  %v321 = vunpack.c.l.b16 %v90
  %v322 = vunpack.c.l.b16 %v91
  %v323 = vunpack.c.l.b16 %v92
  %v324 = vunpack.c.l.b16 %v93
  %v325 = vunpack.c.l.b16 %v94
  %v326 = vpack.c.b16 %v311, %v310
  %v327 = vpack.c.b16 %v313, %v312
  %v328 = vpack.c.b16 %v315, %v314
  %v329 = vpack.c.b16 %v317, %v316
  %v330 = vpack.c.b16 %v319, %v318
  %v331 = vpack.c.b16 %v321, %v320
  %v332 = vpack.c.b16 %v323, %v322
  %v333 = vpack.c.b16 %v325, %v324
  %342 = vmatprep.subr.bf16.mxu0 0
  %343 = vmatpush1.bf16.msra.mxu0 %v333
  %344 = vmatprep.subr.bf16.mxu0 0
  %345 = vmatpush1.bf16.msra.mxu0 %v332
  %346 = vmatprep.subr.bf16.mxu0 0
  %347 = vmatpush1.bf16.msra.mxu0 %v331
  %348 = vmatprep.subr.bf16.mxu0 0
  %349 = vmatpush1.bf16.msra.mxu0 %v330
  %350 = vmatprep.subr.bf16.mxu0 0
  %351 = vmatpush1.bf16.msra.mxu0 %v329
  %352 = vmatprep.subr.bf16.mxu0 0
  %353 = vmatpush1.bf16.msra.mxu0 %v328
  %354 = vmatprep.subr.bf16.mxu0 0
  %355 = vmatpush1.bf16.msra.mxu0 %v327
  %356 = vmatprep.subr.bf16.mxu0 0
  %357 = vmatpush1.bf16.msra.mxu0 %v326
  %358 = vmatprep.subr.bf16.mxu0 0
  %359 = vmatpush2.bf16.msra.mxu0 0
  %360 = vmatprep.subr.bf16.mxu0 0
  %361 = vmatpush2.bf16.msra.mxu0 0
  %362 = vmatprep.subr.bf16.mxu0 0
  %363 = vmatpush2.bf16.msra.mxu0 0
  %364 = vmatprep.subr.bf16.mxu0 0
  %365 = vmatpush2.bf16.msra.mxu0 0
  %366 = vmatprep.subr.bf16.mxu0 0
  %367 = vmatpush2.bf16.msra.mxu0 0
  %368 = vmatprep.subr.bf16.mxu0 0
  %369 = vmatpush2.bf16.msra.mxu0 0
  %370 = vmatprep.subr.bf16.mxu0 0
  %371 = vmatpush2.bf16.msra.mxu0 0
  %372 = vmatprep.subr.bf16.mxu0 0
  %373 = vmatpush2.bf16.msra.mxu0 0
  %374 = vmatprep.mubr.bf16.mxu0 0
  %375 = vmatmul.mubr.bf16.gmra.mxu0 %v230
  %v376 = vpop.f32.mrf.mxu0
  %v377 = vadd.f32 %v100, %v376
  %v378 = vpop.f32.mrf.mxu0
  %v379 = vpop.f32.mrf.mxu0
  %v380 = vadd.f32 %v100, %v379
  %v381 = vpop.f32.mrf.mxu0
  %382 = vmatprep.mubr.bf16.mxu0 0
  %383 = vmatmul.mubr.bf16.gmra.mxu0 %v231
  %v384 = vpop.f32.mrf.mxu0
  %v385 = vadd.f32 %v100, %v384
  %v386 = vpop.f32.mrf.mxu0
  %v387 = vpop.f32.mrf.mxu0
  %v388 = vadd.f32 %v100, %v387
  %v389 = vpop.f32.mrf.mxu0
  %390 = vmatprep.mubr.bf16.mxu0 0
  %391 = vmatmul.mubr.bf16.gmra.mxu0 %v232
  %v392 = vpop.f32.mrf.mxu0
  %v393 = vadd.f32 %v100, %v392
  %v394 = vpop.f32.mrf.mxu0
  %v395 = vpop.f32.mrf.mxu0
  %v396 = vadd.f32 %v100, %v395
  %v397 = vpop.f32.mrf.mxu0
  %398 = vmatprep.mubr.bf16.mxu0 0
  %399 = vmatmul.mubr.bf16.gmra.mxu0 %v233
  %v400 = vpop.f32.mrf.mxu0
  %v401 = vadd.f32 %v100, %v400
  %v402 = vpop.f32.mrf.mxu0
  %v403 = vpop.f32.mrf.mxu0
  %v404 = vadd.f32 %v100, %v403
  %v405 = vpop.f32.mrf.mxu0
  %406 = vmatprep.mubr.bf16.mxu0 0
  %407 = vmatmul.mubr.bf16.gmra.mxu0 %v234
  %v408 = vpop.f32.mrf.mxu0
  %v409 = vadd.f32 %v100, %v408
  %v410 = vpop.f32.mrf.mxu0
  %v411 = vpop.f32.mrf.mxu0
  %v412 = vadd.f32 %v100, %v411
  %v413 = vpop.f32.mrf.mxu0
  %414 = vmatprep.mubr.bf16.mxu0 0
  %415 = vmatmul.mubr.bf16.gmra.mxu0 %v235
  %v416 = vpop.f32.mrf.mxu0
  %v417 = vadd.f32 %v100, %v416
  %v418 = vpop.f32.mrf.mxu0
  %v419 = vpop.f32.mrf.mxu0
  %v420 = vadd.f32 %v100, %v419
  %v421 = vpop.f32.mrf.mxu0
  %422 = vmatprep.mubr.bf16.mxu0 0
  %423 = vmatmul.mubr.bf16.gmra.mxu0 %v236
  %v424 = vpop.f32.mrf.mxu0
  %v425 = vadd.f32 %v100, %v424
  %v426 = vpop.f32.mrf.mxu0
  %v427 = vpop.f32.mrf.mxu0
  %v428 = vadd.f32 %v100, %v427
  %v429 = vpop.f32.mrf.mxu0
  %430 = vmatprep.mubr.bf16.mxu0 0
  %431 = vmatmul.mubr.bf16.gmra.mxu0 %v237
  %v432 = vpop.f32.mrf.mxu0
  %v433 = vadd.f32 %v100, %v432
  %v434 = vpop.f32.mrf.mxu0
  %v435 = vpop.f32.mrf.mxu0
  %v436 = vadd.f32 %v100, %v435
  %v437 = vpop.f32.mrf.mxu0
  %438 = vmatprep.mubr.bf16.mxu0 0
  %439 = vmatmul.mubr.bf16.gmra.mxu0 %v238
  %v440 = vpop.f32.mrf.mxu0
  %v441 = vadd.f32 %v100, %v440
  %v442 = vpop.f32.mrf.mxu0
  %v443 = vpop.f32.mrf.mxu0
  %v444 = vadd.f32 %v100, %v443
  %v445 = vpop.f32.mrf.mxu0
  %446 = vmatprep.mubr.bf16.mxu0 0
  %447 = vmatmul.mubr.bf16.gmra.mxu0 %v239
  %v448 = vpop.f32.mrf.mxu0
  %v449 = vadd.f32 %v100, %v448
  %v450 = vpop.f32.mrf.mxu0
  %v451 = vpop.f32.mrf.mxu0
  %v452 = vadd.f32 %v100, %v451
  %v453 = vpop.f32.mrf.mxu0
  %454 = vmatprep.mubr.bf16.mxu0 0
  %455 = vmatmul.mubr.bf16.gmra.mxu0 %v240
  %v456 = vpop.f32.mrf.mxu0
  %v457 = vadd.f32 %v100, %v456
  %v458 = vpop.f32.mrf.mxu0
  %v459 = vpop.f32.mrf.mxu0
  %v460 = vadd.f32 %v100, %v459
  %v461 = vpop.f32.mrf.mxu0
  %462 = vmatprep.mubr.bf16.mxu0 0
  %463 = vmatmul.mubr.bf16.gmra.mxu0 %v241
  %v464 = vpop.f32.mrf.mxu0
  %v465 = vadd.f32 %v100, %v464
  %v466 = vpop.f32.mrf.mxu0
  %v467 = vpop.f32.mrf.mxu0
  %v468 = vadd.f32 %v100, %v467
  %v469 = vpop.f32.mrf.mxu0
  %470 = vmatprep.mubr.bf16.mxu0 0
  %471 = vmatmul.mubr.bf16.gmra.mxu0 %v242
  %v472 = vpop.f32.mrf.mxu0
  %v473 = vadd.f32 %v100, %v472
  %v474 = vpop.f32.mrf.mxu0
  %v475 = vpop.f32.mrf.mxu0
  %v476 = vadd.f32 %v100, %v475
  %v477 = vpop.f32.mrf.mxu0
  %478 = vmatprep.mubr.bf16.mxu0 0
  %479 = vmatmul.mubr.bf16.gmra.mxu0 %v243
  %v480 = vpop.f32.mrf.mxu0
  %v481 = vadd.f32 %v100, %v480
  %v482 = vpop.f32.mrf.mxu0
  %v483 = vpop.f32.mrf.mxu0
  %v484 = vadd.f32 %v100, %v483
  %v485 = vpop.f32.mrf.mxu0
  %486 = vmatprep.mubr.bf16.mxu0 0
  %487 = vmatmul.mubr.bf16.gmra.mxu0 %v244
  %v488 = vpop.f32.mrf.mxu0
  %v489 = vadd.f32 %v100, %v488
  %v490 = vpop.f32.mrf.mxu0
  %v491 = vpop.f32.mrf.mxu0
  %v492 = vadd.f32 %v100, %v491
  %v493 = vpop.f32.mrf.mxu0
  %494 = vmatprep.mubr.bf16.mxu0 0
  %495 = vmatmul.mubr.bf16.gmra.mxu0 %v245
  %v496 = vpop.f32.mrf.mxu0
  %v497 = vadd.f32 %v100, %v496
  %v498 = vpop.f32.mrf.mxu0
  %v499 = vpop.f32.mrf.mxu0
  %v500 = vadd.f32 %v100, %v499
  %v501 = vpop.f32.mrf.mxu0
  %502 = vmatprep.mubr.bf16.mxu0 0
  %503 = vmatmul.mubr.bf16.gmra.mxu0 %v246
  %v504 = vpop.f32.mrf.mxu0
  %v505 = vadd.f32 %v100, %v504
  %v506 = vpop.f32.mrf.mxu0
  %v507 = vpop.f32.mrf.mxu0
  %v508 = vadd.f32 %v100, %v507
  %v509 = vpop.f32.mrf.mxu0
  %510 = vmatprep.mubr.bf16.mxu0 0
  %511 = vmatmul.mubr.bf16.gmra.mxu0 %v247
  %v512 = vpop.f32.mrf.mxu0
  %v513 = vadd.f32 %v100, %v512
  %v514 = vpop.f32.mrf.mxu0
  %v515 = vpop.f32.mrf.mxu0
  %v516 = vadd.f32 %v100, %v515
  %v517 = vpop.f32.mrf.mxu0
  %518 = vmatprep.mubr.bf16.mxu0 0
  %519 = vmatmul.mubr.bf16.gmra.mxu0 %v248
  %v520 = vpop.f32.mrf.mxu0
  %v521 = vadd.f32 %v100, %v520
  %v522 = vpop.f32.mrf.mxu0
  %v523 = vpop.f32.mrf.mxu0
  %v524 = vadd.f32 %v100, %v523
  %v525 = vpop.f32.mrf.mxu0
  %526 = vmatprep.mubr.bf16.mxu0 0
  %527 = vmatmul.mubr.bf16.gmra.mxu0 %v249
  %v528 = vpop.f32.mrf.mxu0
  %v529 = vadd.f32 %v100, %v528
  %v530 = vpop.f32.mrf.mxu0
  %v531 = vpop.f32.mrf.mxu0
  %v532 = vadd.f32 %v100, %v531
  %v533 = vpop.f32.mrf.mxu0
  %534 = vmatprep.mubr.bf16.mxu0 0
  %535 = vmatmul.mubr.bf16.gmra.mxu0 %v250
  %v536 = vpop.f32.mrf.mxu0
  %v537 = vadd.f32 %v100, %v536
  %v538 = vpop.f32.mrf.mxu0
  %v539 = vpop.f32.mrf.mxu0
  %v540 = vadd.f32 %v100, %v539
  %v541 = vpop.f32.mrf.mxu0
  %542 = vmatprep.mubr.bf16.mxu0 0
  %543 = vmatmul.mubr.bf16.gmra.mxu0 %v251
  %v544 = vpop.f32.mrf.mxu0
  %v545 = vadd.f32 %v100, %v544
  %v546 = vpop.f32.mrf.mxu0
  %v547 = vpop.f32.mrf.mxu0
  %v548 = vadd.f32 %v100, %v547
  %v549 = vpop.f32.mrf.mxu0
  %550 = vmatprep.mubr.bf16.mxu0 0
  %551 = vmatmul.mubr.bf16.gmra.mxu0 %v252
  %v552 = vpop.f32.mrf.mxu0
  %v553 = vadd.f32 %v100, %v552
  %v554 = vpop.f32.mrf.mxu0
  %v555 = vpop.f32.mrf.mxu0
  %v556 = vadd.f32 %v100, %v555
  %v557 = vpop.f32.mrf.mxu0
  %558 = vmatprep.mubr.bf16.mxu0 0
  %559 = vmatmul.mubr.bf16.gmra.mxu0 %v253
  %v560 = vpop.f32.mrf.mxu0
  %v561 = vadd.f32 %v100, %v560
  %v562 = vpop.f32.mrf.mxu0
  %v563 = vpop.f32.mrf.mxu0
  %v564 = vadd.f32 %v100, %v563
  %v565 = vpop.f32.mrf.mxu0
  %566 = vmatprep.mubr.bf16.mxu0 0
  %567 = vmatmul.mubr.bf16.gmra.mxu0 %v254
  %v568 = vpop.f32.mrf.mxu0
  %v569 = vadd.f32 %v100, %v568
  %v570 = vpop.f32.mrf.mxu0
  %v571 = vpop.f32.mrf.mxu0
  %v572 = vadd.f32 %v100, %v571
  %v573 = vpop.f32.mrf.mxu0
  %574 = vmatprep.mubr.bf16.mxu0 0
  %575 = vmatmul.mubr.bf16.gmra.mxu0 %v255
  %v576 = vpop.f32.mrf.mxu0
  %v577 = vadd.f32 %v100, %v576
  %v578 = vpop.f32.mrf.mxu0
  %v579 = vpop.f32.mrf.mxu0
  %v580 = vadd.f32 %v100, %v579
  %v581 = vpop.f32.mrf.mxu0
  %582 = vmatprep.mubr.bf16.mxu0 0
  %583 = vmatmul.mubr.bf16.gmra.mxu0 %v256
  %v584 = vpop.f32.mrf.mxu0
  %v585 = vadd.f32 %v100, %v584
  %v586 = vpop.f32.mrf.mxu0
  %v587 = vpop.f32.mrf.mxu0
  %v588 = vadd.f32 %v100, %v587
  %v589 = vpop.f32.mrf.mxu0
  %590 = vmatprep.mubr.bf16.mxu0 0
  %591 = vmatmul.mubr.bf16.gmra.mxu0 %v257
  %v592 = vpop.f32.mrf.mxu0
  %v593 = vadd.f32 %v100, %v592
  %v594 = vpop.f32.mrf.mxu0
  %v595 = vpop.f32.mrf.mxu0
  %v596 = vadd.f32 %v100, %v595
  %v597 = vpop.f32.mrf.mxu0
  %598 = vmatprep.mubr.bf16.mxu0 0
  %599 = vmatmul.mubr.bf16.gmra.mxu0 %v258
  %v600 = vpop.f32.mrf.mxu0
  %v601 = vadd.f32 %v100, %v600
  %v602 = vpop.f32.mrf.mxu0
  %v603 = vpop.f32.mrf.mxu0
  %v604 = vadd.f32 %v100, %v603
  %v605 = vpop.f32.mrf.mxu0
  %606 = vmatprep.mubr.bf16.mxu0 0
  %607 = vmatmul.mubr.bf16.gmra.mxu0 %v259
  %v608 = vpop.f32.mrf.mxu0
  %v609 = vadd.f32 %v100, %v608
  %v610 = vpop.f32.mrf.mxu0
  %v611 = vpop.f32.mrf.mxu0
  %v612 = vadd.f32 %v100, %v611
  %v613 = vpop.f32.mrf.mxu0
  %614 = vmatprep.mubr.bf16.mxu0 0
  %615 = vmatmul.mubr.bf16.gmra.mxu0 %v260
  %v616 = vpop.f32.mrf.mxu0
  %v617 = vadd.f32 %v100, %v616
  %v618 = vpop.f32.mrf.mxu0
  %v619 = vpop.f32.mrf.mxu0
  %v620 = vadd.f32 %v100, %v619
  %v621 = vpop.f32.mrf.mxu0
  %622 = vmatprep.mubr.bf16.mxu0 0
  %623 = vmatmul.mubr.bf16.gmra.mxu0 %v261
  %v624 = vpop.f32.mrf.mxu0
  %v625 = vadd.f32 %v100, %v624
  %v626 = vpop.f32.mrf.mxu0
  %v627 = vpop.f32.mrf.mxu0
  %v628 = vadd.f32 %v100, %v627
  %v629 = vpop.f32.mrf.mxu0
  %630 = vdwg.mxu0
  %v631 = vmax.f32 %v377, 0.0
  %v632 = vmax.f32 %v380, 0.0
  %v633 = vmax.f32 %v385, 0.0
  %v634 = vmax.f32 %v388, 0.0
  %v635 = vmax.f32 %v393, 0.0
  %v636 = vmax.f32 %v396, 0.0
  %v637 = vmax.f32 %v401, 0.0
  %v638 = vmax.f32 %v404, 0.0
  %v639 = vmax.f32 %v409, 0.0
  %v640 = vmax.f32 %v412, 0.0
  %v641 = vmax.f32 %v417, 0.0
  %v642 = vmax.f32 %v420, 0.0
  %v643 = vmax.f32 %v425, 0.0
  %v644 = vmax.f32 %v428, 0.0
  %v645 = vmax.f32 %v433, 0.0
  %v646 = vmax.f32 %v436, 0.0
  %v647 = vmax.f32 %v441, 0.0
  %v648 = vmax.f32 %v444, 0.0
  %v649 = vmax.f32 %v449, 0.0
  %v650 = vmax.f32 %v452, 0.0
  %v651 = vmax.f32 %v457, 0.0
  %v652 = vmax.f32 %v460, 0.0
  %v653 = vmax.f32 %v465, 0.0
  %v654 = vmax.f32 %v468, 0.0
  %v655 = vmax.f32 %v473, 0.0
  %v656 = vmax.f32 %v476, 0.0
  %v657 = vmax.f32 %v481, 0.0
  %v658 = vmax.f32 %v484, 0.0
  %v659 = vmax.f32 %v489, 0.0
  %v660 = vmax.f32 %v492, 0.0
  %v661 = vmax.f32 %v497, 0.0
  %v662 = vmax.f32 %v500, 0.0
  %v663 = vmax.f32 %v505, 0.0
  %v664 = vmax.f32 %v508, 0.0
  %v665 = vmax.f32 %v513, 0.0
  %v666 = vmax.f32 %v516, 0.0
  %v667 = vmax.f32 %v521, 0.0
  %v668 = vmax.f32 %v524, 0.0
  %v669 = vmax.f32 %v529, 0.0
  %v670 = vmax.f32 %v532, 0.0
  %v671 = vmax.f32 %v537, 0.0
  %v672 = vmax.f32 %v540, 0.0
  %v673 = vmax.f32 %v545, 0.0
  %v674 = vmax.f32 %v548, 0.0
  %v675 = vmax.f32 %v553, 0.0
  %v676 = vmax.f32 %v556, 0.0
  %v677 = vmax.f32 %v561, 0.0
  %v678 = vmax.f32 %v564, 0.0
  %v679 = vmax.f32 %v569, 0.0
  %v680 = vmax.f32 %v572, 0.0
  %v681 = vmax.f32 %v577, 0.0
  %v682 = vmax.f32 %v580, 0.0
  %v683 = vmax.f32 %v585, 0.0
  %v684 = vmax.f32 %v588, 0.0
  %v685 = vmax.f32 %v593, 0.0
  %v686 = vmax.f32 %v596, 0.0
  %v687 = vmax.f32 %v601, 0.0
  %v688 = vmax.f32 %v604, 0.0
  %v689 = vmax.f32 %v609, 0.0
  %v690 = vmax.f32 %v612, 0.0
  %v691 = vmax.f32 %v617, 0.0
  %v692 = vmax.f32 %v620, 0.0
  %v693 = vmax.f32 %v625, 0.0
  %v694 = vmax.f32 %v628, 0.0
  %v695 = vpack.c.bf16 %v632, %v631
  %v696 = vpack.c.bf16 %v634, %v633
  %v697 = vpack.c.bf16 %v636, %v635
  %v698 = vpack.c.bf16 %v638, %v637
  %v699 = vpack.c.bf16 %v640, %v639
  %v700 = vpack.c.bf16 %v642, %v641
  %v701 = vpack.c.bf16 %v644, %v643
  %v702 = vpack.c.bf16 %v646, %v645
  %v703 = vpack.c.bf16 %v648, %v647
  %v704 = vpack.c.bf16 %v650, %v649
  %v705 = vpack.c.bf16 %v652, %v651
  %v706 = vpack.c.bf16 %v654, %v653
  %v707 = vpack.c.bf16 %v656, %v655
  %v708 = vpack.c.bf16 %v658, %v657
  %v709 = vpack.c.bf16 %v660, %v659
  %v710 = vpack.c.bf16 %v662, %v661
  %v711 = vpack.c.bf16 %v664, %v663
  %v712 = vpack.c.bf16 %v666, %v665
  %v713 = vpack.c.bf16 %v668, %v667
  %v714 = vpack.c.bf16 %v670, %v669
  %v715 = vpack.c.bf16 %v672, %v671
  %v716 = vpack.c.bf16 %v674, %v673
  %v717 = vpack.c.bf16 %v676, %v675
  %v718 = vpack.c.bf16 %v678, %v677
  %v719 = vpack.c.bf16 %v680, %v679
  %v720 = vpack.c.bf16 %v682, %v681
  %v721 = vpack.c.bf16 %v684, %v683
  %v722 = vpack.c.bf16 %v686, %v685
  %v723 = vpack.c.bf16 %v688, %v687
  %v724 = vpack.c.bf16 %v690, %v689
  %v725 = vpack.c.bf16 %v692, %v691
  %v726 = vpack.c.bf16 %v694, %v693
  %v759 = vunpack.c.l.b16 %v695
  %v760 = vunpack.c.h.b16 %v695
  %v761 = vunpack.c.l.b16 %v696
  %v762 = vunpack.c.h.b16 %v696
  %v763 = vunpack.c.l.b16 %v697
  %v764 = vunpack.c.h.b16 %v697
  %v765 = vunpack.c.l.b16 %v698
  %v766 = vunpack.c.h.b16 %v698
  %v767 = vunpack.c.l.b16 %v699
  %v768 = vunpack.c.h.b16 %v699
  %v769 = vunpack.c.l.b16 %v700
  %v770 = vunpack.c.h.b16 %v700
  %v771 = vunpack.c.l.b16 %v701
  %v772 = vunpack.c.h.b16 %v701
  %v773 = vunpack.c.l.b16 %v702
  %v774 = vunpack.c.h.b16 %v702
  %v775 = vunpack.c.l.b16 %v703
  %v776 = vunpack.c.h.b16 %v703
  %v777 = vunpack.c.l.b16 %v704
  %v778 = vunpack.c.h.b16 %v704
  %v779 = vunpack.c.l.b16 %v705
  %v780 = vunpack.c.h.b16 %v705
  %v781 = vunpack.c.l.b16 %v706
  %v782 = vunpack.c.h.b16 %v706
  %v783 = vunpack.c.l.b16 %v707
  %v784 = vunpack.c.h.b16 %v707
  %v785 = vunpack.c.l.b16 %v708
  %v786 = vunpack.c.h.b16 %v708
  %v787 = vunpack.c.l.b16 %v709
  %v788 = vunpack.c.h.b16 %v709
  %v789 = vunpack.c.l.b16 %v710
  %v790 = vunpack.c.h.b16 %v710
  %v791 = vunpack.c.l.b16 %v711
  %v792 = vunpack.c.h.b16 %v711
  %v793 = vunpack.c.l.b16 %v712
  %v794 = vunpack.c.h.b16 %v712
  %v795 = vunpack.c.l.b16 %v713
  %v796 = vunpack.c.h.b16 %v713
  %v797 = vunpack.c.l.b16 %v714
  %v798 = vunpack.c.h.b16 %v714
  %v799 = vunpack.c.l.b16 %v715
  %v800 = vunpack.c.h.b16 %v715
  %v801 = vunpack.c.l.b16 %v716
  %v802 = vunpack.c.h.b16 %v716
  %v803 = vunpack.c.l.b16 %v717
  %v804 = vunpack.c.h.b16 %v717
  %v805 = vunpack.c.l.b16 %v718
  %v806 = vunpack.c.h.b16 %v718
  %v807 = vunpack.c.l.b16 %v719
  %v808 = vunpack.c.h.b16 %v719
  %v809 = vunpack.c.l.b16 %v720
  %v810 = vunpack.c.h.b16 %v720
  %v811 = vunpack.c.l.b16 %v721
  %v812 = vunpack.c.h.b16 %v721
  %v813 = vunpack.c.l.b16 %v722
  %v814 = vunpack.c.h.b16 %v722
  %v815 = vunpack.c.l.b16 %v723
  %v816 = vunpack.c.h.b16 %v723
  %v817 = vunpack.c.l.b16 %v724
  %v818 = vunpack.c.h.b16 %v724
  %v819 = vunpack.c.l.b16 %v725
  %v820 = vunpack.c.h.b16 %v725
  %v821 = vunpack.c.l.b16 %v726
  %v822 = vunpack.c.h.b16 %v726
  %v823 = vpack.c.b16 %v759, %v759
  %v824 = vpack.c.b16 %v760, %v760
  %v825 = vpack.c.b16 %v761, %v761
  %v826 = vpack.c.b16 %v762, %v762
  %v827 = vpack.c.b16 %v763, %v763
  %v828 = vpack.c.b16 %v764, %v764
  %v829 = vpack.c.b16 %v765, %v765
  %v830 = vpack.c.b16 %v766, %v766
  %v831 = vpack.c.b16 %v767, %v767
  %v832 = vpack.c.b16 %v768, %v768
  %v833 = vpack.c.b16 %v769, %v769
  %v834 = vpack.c.b16 %v770, %v770
  %v835 = vpack.c.b16 %v771, %v771
  %v836 = vpack.c.b16 %v772, %v772
  %v837 = vpack.c.b16 %v773, %v773
  %v838 = vpack.c.b16 %v774, %v774
  %v839 = vpack.c.b16 %v775, %v775
  %v840 = vpack.c.b16 %v776, %v776
  %v841 = vpack.c.b16 %v777, %v777
  %v842 = vpack.c.b16 %v778, %v778
  %v843 = vpack.c.b16 %v779, %v779
  %v844 = vpack.c.b16 %v780, %v780
  %v845 = vpack.c.b16 %v781, %v781
  %v846 = vpack.c.b16 %v782, %v782
  %v847 = vpack.c.b16 %v783, %v783
  %v848 = vpack.c.b16 %v784, %v784
  %v849 = vpack.c.b16 %v785, %v785
  %v850 = vpack.c.b16 %v786, %v786
  %v851 = vpack.c.b16 %v787, %v787
  %v852 = vpack.c.b16 %v788, %v788
  %v853 = vpack.c.b16 %v789, %v789
  %v854 = vpack.c.b16 %v790, %v790
  %v855 = vpack.c.b16 %v791, %v791
  %v856 = vpack.c.b16 %v792, %v792
  %v857 = vpack.c.b16 %v793, %v793
  %v858 = vpack.c.b16 %v794, %v794
  %v859 = vpack.c.b16 %v795, %v795
  %v860 = vpack.c.b16 %v796, %v796
  %v861 = vpack.c.b16 %v797, %v797
  %v862 = vpack.c.b16 %v798, %v798
  %v863 = vpack.c.b16 %v799, %v799
  %v864 = vpack.c.b16 %v800, %v800
  %v865 = vpack.c.b16 %v801, %v801
  %v866 = vpack.c.b16 %v802, %v802
  %v867 = vpack.c.b16 %v803, %v803
  %v868 = vpack.c.b16 %v804, %v804
  %v869 = vpack.c.b16 %v805, %v805
  %v870 = vpack.c.b16 %v806, %v806
  %v871 = vpack.c.b16 %v807, %v807
  %v872 = vpack.c.b16 %v808, %v808
  %v873 = vpack.c.b16 %v809, %v809
  %v874 = vpack.c.b16 %v810, %v810
  %v875 = vpack.c.b16 %v811, %v811
  %v876 = vpack.c.b16 %v812, %v812
  %v877 = vpack.c.b16 %v813, %v813
  %v878 = vpack.c.b16 %v814, %v814
  %v879 = vpack.c.b16 %v815, %v815
  %v880 = vpack.c.b16 %v816, %v816
  %v881 = vpack.c.b16 %v817, %v817
  %v882 = vpack.c.b16 %v818, %v818
  %v883 = vpack.c.b16 %v819, %v819
  %v884 = vpack.c.b16 %v820, %v820
  %v885 = vpack.c.b16 %v821, %v821
  %v886 = vpack.c.b16 %v822, %v822
  %951 = vst [vmem:[%s3] sm:$0xf] %v823
  %952 = vst [vmem:[%s3 + $0x4] sm:$0xf] %v824
  %953 = vst [vmem:[%s3 + $0x8] sm:$0xf] %v825
  %954 = vst [vmem:[%s3 + $0xc] sm:$0xf] %v826
  %955 = vst [vmem:[%s3 + $0x10] sm:$0xf] %v827
  %956 = vst [vmem:[%s3 + $0x14] sm:$0xf] %v828
  %957 = vst [vmem:[%s3 + $0x18] sm:$0xf] %v829
  %958 = vst [vmem:[%s3 + $0x1c] sm:$0xf] %v830
  %959 = vst [vmem:[%s3 + $0x20] sm:$0xf] %v831
  %960 = vst [vmem:[%s3 + $0x24] sm:$0xf] %v832
  %961 = vst [vmem:[%s3 + $0x28] sm:$0xf] %v833
  %962 = vst [vmem:[%s3 + $0x2c] sm:$0xf] %v834
  %963 = vst [vmem:[%s3 + $0x30] sm:$0xf] %v835
  %964 = vst [vmem:[%s3 + $0x34] sm:$0xf] %v836
  %965 = vst [vmem:[%s3 + $0x38] sm:$0xf] %v837
  %966 = vst [vmem:[%s3 + $0x3c] sm:$0xf] %v838
  %967 = vst [vmem:[%s3 + $0x40] sm:$0xf] %v839
  %968 = vst [vmem:[%s3 + $0x44] sm:$0xf] %v840
  %969 = vst [vmem:[%s3 + $0x48] sm:$0xf] %v841
  %970 = vst [vmem:[%s3 + $0x4c] sm:$0xf] %v842
  %971 = vst [vmem:[%s3 + $0x50] sm:$0xf] %v843
  %972 = vst [vmem:[%s3 + $0x54] sm:$0xf] %v844
  %973 = vst [vmem:[%s3 + $0x58] sm:$0xf] %v845
  %974 = vst [vmem:[%s3 + $0x5c] sm:$0xf] %v846
  %975 = vst [vmem:[%s3 + $0x60] sm:$0xf] %v847
  %976 = vst [vmem:[%s3 + $0x64] sm:$0xf] %v848
  %977 = vst [vmem:[%s3 + $0x68] sm:$0xf] %v849
  %978 = vst [vmem:[%s3 + $0x6c] sm:$0xf] %v850
  %979 = vst [vmem:[%s3 + $0x70] sm:$0xf] %v851
  %980 = vst [vmem:[%s3 + $0x74] sm:$0xf] %v852
  %981 = vst [vmem:[%s3 + $0x78] sm:$0xf] %v853
  %982 = vst [vmem:[%s3 + $0x7c] sm:$0xf] %v854
  %983 = vst [vmem:[%s3 + $0x80] sm:$0xf] %v855
  %984 = vst [vmem:[%s3 + $0x84] sm:$0xf] %v856
  %985 = vst [vmem:[%s3 + $0x88] sm:$0xf] %v857
  %986 = vst [vmem:[%s3 + $0x8c] sm:$0xf] %v858
  %987 = vst [vmem:[%s3 + $0x90] sm:$0xf] %v859
  %988 = vst [vmem:[%s3 + $0x94] sm:$0xf] %v860
  %989 = vst [vmem:[%s3 + $0x98] sm:$0xf] %v861
  %990 = vst [vmem:[%s3 + $0x9c] sm:$0xf] %v862
  %991 = vst [vmem:[%s3 + $0xa0] sm:$0xf] %v863
  %992 = vst [vmem:[%s3 + $0xa4] sm:$0xf] %v864
  %993 = vst [vmem:[%s3 + $0xa8] sm:$0xf] %v865
  %994 = vst [vmem:[%s3 + $0xac] sm:$0xf] %v866
  %995 = vst [vmem:[%s3 + $0xb0] sm:$0xf] %v867
  %996 = vst [vmem:[%s3 + $0xb4] sm:$0xf] %v868
  %997 = vst [vmem:[%s3 + $0xb8] sm:$0xf] %v869
  %998 = vst [vmem:[%s3 + $0xbc] sm:$0xf] %v870
  %999 = vst [vmem:[%s3 + $0xc0] sm:$0xf] %v871
  %1000 = vst [vmem:[%s3 + $0xc4] sm:$0xf] %v872
  %1001 = vst [vmem:[%s3 + $0xc8] sm:$0xf] %v873
  %1002 = vst [vmem:[%s3 + $0xcc] sm:$0xf] %v874
  %1003 = vst [vmem:[%s3 + $0xd0] sm:$0xf] %v875
  %1004 = vst [vmem:[%s3 + $0xd4] sm:$0xf] %v876
  %1005 = vst [vmem:[%s3 + $0xd8] sm:$0xf] %v877
  %1006 = vst [vmem:[%s3 + $0xdc] sm:$0xf] %v878
  %1007 = vst [vmem:[%s3 + $0xe0] sm:$0xf] %v879
  %1008 = vst [vmem:[%s3 + $0xe4] sm:$0xf] %v880
  %1009 = vst [vmem:[%s3 + $0xe8] sm:$0xf] %v881
  %1010 = vst [vmem:[%s3 + $0xec] sm:$0xf] %v882
  %1011 = vst [vmem:[%s3 + $0xf0] sm:$0xf] %v883
  %1012 = vst [vmem:[%s3 + $0xf4] sm:$0xf] %v884
  %1013 = vst [vmem:[%s3 + $0xf8] sm:$0xf] %v885
  %1014 = vst [vmem:[%s3 + $0xfc] sm:$0xf] %v886
  // Predicated region
  $region14: #{bottleneck_forward.3} parent=0 // pred_check
    _
  $region15: #{bottleneck_forward.3} parent=0 // pred_check_branch
    %1016 = sbr.rel (0) target = $region17
  $region16: #{bottleneck_forward.3} parent=0 // pred_region
    _
  $region17: #{bottleneck_forward.3} parent=0 // pred_fallthru
    _
  // Predicated region
  $region18: #{bottleneck_forward.3} parent=0 // pred_check
    _
  $region19: #{bottleneck_forward.3} parent=0 // pred_check_branch
    %1018 = sbr.rel (0) target = $region21
  $region20: #{bottleneck_forward.3} parent=0 // pred_region
    _
  $region21: #{bottleneck_forward.3} parent=0 // pred_fallthru
    _

// kernel: bottleneck_forward.5
$region0: #{bottleneck_forward.5}
  #allocation0 [shape = 'u32[]', space=smem, size = 0x4, offset = 0x4, fixed_abs, tag = 'smem constant byte address 0x4 - core index']
  #allocation1 [shape = 'u32[144,128]{1,0:T(1,128)}', space=vmem, size = 0x12000, scoped, tag = 'internal scratch']
  %s0 = inlined_call_operand.vmem [shape: bf16[512,128], index: 0, kind: input, shape index: {}]
  %s1 = inlined_call_operand.vmem [shape: bf16[128,128], index: 1, kind: input, shape index: {}]
  %s2 = inlined_call_operand.vmem [shape: f32[1,128], index: 2, kind: input, shape index: {}]
  %s3 = inlined_call_operand.vmem [shape: bf16[512,128], index: 3, kind: input, shape index: {}]
  %s4 = inlined_call_operand.hbm [shape: f32[512,128], index: 4, kind: output, shape index: {}]
  %s5 = sld [smem:[#allocation0]]
  $region26: #{bottleneck_forward.5} parent=0
    _
  %s7 = ssub.s32 1, %s5
  %s8 = scalar_select 0, %s7, %s5
  $region1: #{bottleneck_forward.5} parent=0
    #allocation2 [shape = 'u8[262144]{0}', space=vmem, size = 0x40000, scoped, tag = 'output window, operand 0, single buffered']
    #allocation3 [shape = 's32[1]{0}', space=sflag, size = 0x4, scoped, tag = 'scoped memory for bottleneck_forward.5']
    %9 = vsyncpa [#allocation3], 0
    // Predicated region
    $region2: #{bottleneck_forward.5} parent=1 // pred_check
      _
    $region3: #{bottleneck_forward.5} parent=1 // pred_check_branch
      %11 = sbr.rel (0) target = $region5
    $region4: #{bottleneck_forward.5} parent=1 // pred_region
      _
    $region5: #{bottleneck_forward.5} parent=1 // pred_fallthru
      _
    // Predicated region
    $region6: #{bottleneck_forward.5} parent=1 // pred_check
      _
    $region7: #{bottleneck_forward.5} parent=1 // pred_check_branch
      %13 = sbr.rel (0) target = $region9
    $region8: #{bottleneck_forward.5} parent=1 // pred_region
      _
    $region9: #{bottleneck_forward.5} parent=1 // pred_fallthru
      _
    // Predicated region
    $region10: #{bottleneck_forward.5} parent=1 // pred_check
      _
    $region11: #{bottleneck_forward.5} parent=1 // pred_check_branch
      %15 = sbr.rel (0) target = $region13
    $region12: #{bottleneck_forward.5} parent=1 // pred_region
      _
    $region13: #{bottleneck_forward.5} parent=1 // pred_fallthru
      _
    // Predicated region
    $region14: #{bottleneck_forward.5} parent=1 // pred_check
      _
    $region15: #{bottleneck_forward.5} parent=1 // pred_check_branch
      %17 = sbr.rel (0) target = $region17
    $region16: #{bottleneck_forward.5} parent=1 // pred_region
      _
    $region17: #{bottleneck_forward.5} parent=1 // pred_fallthru
      _
    %v19 = vld [vmem:[%s0] sm:$0xf]
    %v20 = vld [vmem:[%s0 + $0x4] sm:$0xf]
    %v21 = vld [vmem:[%s0 + $0x8] sm:$0xf]
    %v22 = vld [vmem:[%s0 + $0xc] sm:$0xf]
    %v23 = vld [vmem:[%s0 + $0x10] sm:$0xf]
    %v24 = vld [vmem:[%s0 + $0x14] sm:$0xf]
    %v25 = vld [vmem:[%s0 + $0x18] sm:$0xf]
    %v26 = vld [vmem:[%s0 + $0x1c] sm:$0xf]
    %v27 = vld [vmem:[%s0 + $0x20] sm:$0xf]
    %v28 = vld [vmem:[%s0 + $0x24] sm:$0xf]
    %v29 = vld [vmem:[%s0 + $0x28] sm:$0xf]
    %v30 = vld [vmem:[%s0 + $0x2c] sm:$0xf]
    %v31 = vld [vmem:[%s0 + $0x30] sm:$0xf]
    %v32 = vld [vmem:[%s0 + $0x34] sm:$0xf]
    %v33 = vld [vmem:[%s0 + $0x38] sm:$0xf]
    %v34 = vld [vmem:[%s0 + $0x3c] sm:$0xf]
    %v35 = vld [vmem:[%s0 + $0x40] sm:$0xf]
    %v36 = vld [vmem:[%s0 + $0x44] sm:$0xf]
    %v37 = vld [vmem:[%s0 + $0x48] sm:$0xf]
    %v38 = vld [vmem:[%s0 + $0x4c] sm:$0xf]
    %v39 = vld [vmem:[%s0 + $0x50] sm:$0xf]
    %v40 = vld [vmem:[%s0 + $0x54] sm:$0xf]
    %v41 = vld [vmem:[%s0 + $0x58] sm:$0xf]
    %v42 = vld [vmem:[%s0 + $0x5c] sm:$0xf]
    %v43 = vld [vmem:[%s0 + $0x60] sm:$0xf]
    %v44 = vld [vmem:[%s0 + $0x64] sm:$0xf]
    %v45 = vld [vmem:[%s0 + $0x68] sm:$0xf]
    %v46 = vld [vmem:[%s0 + $0x6c] sm:$0xf]
    %v47 = vld [vmem:[%s0 + $0x70] sm:$0xf]
    %v48 = vld [vmem:[%s0 + $0x74] sm:$0xf]
    %v49 = vld [vmem:[%s0 + $0x78] sm:$0xf]
    %v50 = vld [vmem:[%s0 + $0x7c] sm:$0xf]
    %v51 = vld [vmem:[%s0 + $0x80] sm:$0xf]
    %v52 = vld [vmem:[%s0 + $0x84] sm:$0xf]
    %v53 = vld [vmem:[%s0 + $0x88] sm:$0xf]
    %v54 = vld [vmem:[%s0 + $0x8c] sm:$0xf]
    %v55 = vld [vmem:[%s0 + $0x90] sm:$0xf]
    %v56 = vld [vmem:[%s0 + $0x94] sm:$0xf]
    %v57 = vld [vmem:[%s0 + $0x98] sm:$0xf]
    %v58 = vld [vmem:[%s0 + $0x9c] sm:$0xf]
    %v59 = vld [vmem:[%s0 + $0xa0] sm:$0xf]
    %v60 = vld [vmem:[%s0 + $0xa4] sm:$0xf]
    %v61 = vld [vmem:[%s0 + $0xa8] sm:$0xf]
    %v62 = vld [vmem:[%s0 + $0xac] sm:$0xf]
    %v63 = vld [vmem:[%s0 + $0xb0] sm:$0xf]
    %v64 = vld [vmem:[%s0 + $0xb4] sm:$0xf]
    %v65 = vld [vmem:[%s0 + $0xb8] sm:$0xf]
    %v66 = vld [vmem:[%s0 + $0xbc] sm:$0xf]
    %v67 = vld [vmem:[%s0 + $0xc0] sm:$0xf]
    %v68 = vld [vmem:[%s0 + $0xc4] sm:$0xf]
    %v69 = vld [vmem:[%s0 + $0xc8] sm:$0xf]
    %v70 = vld [vmem:[%s0 + $0xcc] sm:$0xf]
    %v71 = vld [vmem:[%s0 + $0xd0] sm:$0xf]
    %v72 = vld [vmem:[%s0 + $0xd4] sm:$0xf]
    %v73 = vld [vmem:[%s0 + $0xd8] sm:$0xf]
    %v74 = vld [vmem:[%s0 + $0xdc] sm:$0xf]
    %v75 = vld [vmem:[%s0 + $0xe0] sm:$0xf]
    %v76 = vld [vmem:[%s0 + $0xe4] sm:$0xf]
    %v77 = vld [vmem:[%s0 + $0xe8] sm:$0xf]
    %v78 = vld [vmem:[%s0 + $0xec] sm:$0xf]
    %v79 = vld [vmem:[%s0 + $0xf0] sm:$0xf]
    %v80 = vld [vmem:[%s0 + $0xf4] sm:$0xf]
    %v81 = vld [vmem:[%s0 + $0xf8] sm:$0xf]
    %v82 = vld [vmem:[%s0 + $0xfc] sm:$0xf]
    %v83 = vld [vmem:[%s1] sm:$0xf]
    %v84 = vld [vmem:[%s1 + $0x4] sm:$0xf]
    %v85 = vld [vmem:[%s1 + $0x8] sm:$0xf]
    %v86 = vld [vmem:[%s1 + $0xc] sm:$0xf]
    %v87 = vld [vmem:[%s1 + $0x10] sm:$0xf]
    %v88 = vld [vmem:[%s1 + $0x14] sm:$0xf]
    %v89 = vld [vmem:[%s1 + $0x18] sm:$0xf]
    %v90 = vld [vmem:[%s1 + $0x1c] sm:$0xf]
    %v91 = vld [vmem:[%s1 + $0x20] sm:$0xf]
    %v92 = vld [vmem:[%s1 + $0x24] sm:$0xf]
    %v93 = vld [vmem:[%s1 + $0x28] sm:$0xf]
    %v94 = vld [vmem:[%s1 + $0x2c] sm:$0xf]
    %v95 = vld [vmem:[%s1 + $0x30] sm:$0xf]
    %v96 = vld [vmem:[%s1 + $0x34] sm:$0xf]
    %v97 = vld [vmem:[%s1 + $0x38] sm:$0xf]
    %v98 = vld [vmem:[%s1 + $0x3c] sm:$0xf]
    %v99 = vld [vmem:[%s2] sm:$0x1]
    %v101 = vlaneseq
    %v102 = vshrl.u32 %v101, 7
    %v103 = vsub.s32 0, %v102
    %v104 = vrot.slane %v99, %v103
    %v170 = vunpack.c.l.b16 %v19
    %v171 = vunpack.c.l.b16 %v20
    %v172 = vunpack.c.l.b16 %v21
    %v173 = vunpack.c.l.b16 %v22
    %v174 = vunpack.c.l.b16 %v23
    %v175 = vunpack.c.l.b16 %v24
    %v176 = vunpack.c.l.b16 %v25
    %v177 = vunpack.c.l.b16 %v26
    %v178 = vunpack.c.l.b16 %v27
    %v179 = vunpack.c.l.b16 %v28
    %v180 = vunpack.c.l.b16 %v29
    %v181 = vunpack.c.l.b16 %v30
    %v182 = vunpack.c.l.b16 %v31
    %v183 = vunpack.c.l.b16 %v32
    %v184 = vunpack.c.l.b16 %v33
    %v185 = vunpack.c.l.b16 %v34
    %v186 = vunpack.c.l.b16 %v35
    %v187 = vunpack.c.l.b16 %v36
    %v188 = vunpack.c.l.b16 %v37
    %v189 = vunpack.c.l.b16 %v38
    %v190 = vunpack.c.l.b16 %v39
    %v191 = vunpack.c.l.b16 %v40
    %v192 = vunpack.c.l.b16 %v41
    %v193 = vunpack.c.l.b16 %v42
    %v194 = vunpack.c.l.b16 %v43
    %v195 = vunpack.c.l.b16 %v44
    %v196 = vunpack.c.l.b16 %v45
    %v197 = vunpack.c.l.b16 %v46
    %v198 = vunpack.c.l.b16 %v47
    %v199 = vunpack.c.l.b16 %v48
    %v200 = vunpack.c.l.b16 %v49
    %v201 = vunpack.c.l.b16 %v50
    %v202 = vunpack.c.l.b16 %v51
    %v203 = vunpack.c.l.b16 %v52
    %v204 = vunpack.c.l.b16 %v53
    %v205 = vunpack.c.l.b16 %v54
    %v206 = vunpack.c.l.b16 %v55
    %v207 = vunpack.c.l.b16 %v56
    %v208 = vunpack.c.l.b16 %v57
    %v209 = vunpack.c.l.b16 %v58
    %v210 = vunpack.c.l.b16 %v59
    %v211 = vunpack.c.l.b16 %v60
    %v212 = vunpack.c.l.b16 %v61
    %v213 = vunpack.c.l.b16 %v62
    %v214 = vunpack.c.l.b16 %v63
    %v215 = vunpack.c.l.b16 %v64
    %v216 = vunpack.c.l.b16 %v65
    %v217 = vunpack.c.l.b16 %v66
    %v218 = vunpack.c.l.b16 %v67
    %v219 = vunpack.c.l.b16 %v68
    %v220 = vunpack.c.l.b16 %v69
    %v221 = vunpack.c.l.b16 %v70
    %v222 = vunpack.c.l.b16 %v71
    %v223 = vunpack.c.l.b16 %v72
    %v224 = vunpack.c.l.b16 %v73
    %v225 = vunpack.c.l.b16 %v74
    %v226 = vunpack.c.l.b16 %v75
    %v227 = vunpack.c.l.b16 %v76
    %v228 = vunpack.c.l.b16 %v77
    %v229 = vunpack.c.l.b16 %v78
    %v230 = vunpack.c.l.b16 %v79
    %v231 = vunpack.c.l.b16 %v80
    %v232 = vunpack.c.l.b16 %v81
    %v233 = vunpack.c.l.b16 %v82
    %v234 = vpack.c.b16 %v171, %v170
    %v235 = vpack.c.b16 %v173, %v172
    %v236 = vpack.c.b16 %v175, %v174
    %v237 = vpack.c.b16 %v177, %v176
    %v238 = vpack.c.b16 %v179, %v178
    %v239 = vpack.c.b16 %v181, %v180
    %v240 = vpack.c.b16 %v183, %v182
    %v241 = vpack.c.b16 %v185, %v184
    %v242 = vpack.c.b16 %v187, %v186
    %v243 = vpack.c.b16 %v189, %v188
    %v244 = vpack.c.b16 %v191, %v190
    %v245 = vpack.c.b16 %v193, %v192
    %v246 = vpack.c.b16 %v195, %v194
    %v247 = vpack.c.b16 %v197, %v196
    %v248 = vpack.c.b16 %v199, %v198
    %v249 = vpack.c.b16 %v201, %v200
    %v250 = vpack.c.b16 %v203, %v202
    %v251 = vpack.c.b16 %v205, %v204
    %v252 = vpack.c.b16 %v207, %v206
    %v253 = vpack.c.b16 %v209, %v208
    %v254 = vpack.c.b16 %v211, %v210
    %v255 = vpack.c.b16 %v213, %v212
    %v256 = vpack.c.b16 %v215, %v214
    %v257 = vpack.c.b16 %v217, %v216
    %v258 = vpack.c.b16 %v219, %v218
    %v259 = vpack.c.b16 %v221, %v220
    %v260 = vpack.c.b16 %v223, %v222
    %v261 = vpack.c.b16 %v225, %v224
    %v262 = vpack.c.b16 %v227, %v226
    %v263 = vpack.c.b16 %v229, %v228
    %v264 = vpack.c.b16 %v231, %v230
    %v265 = vpack.c.b16 %v233, %v232
    %v314 = vunpack.c.l.b16 %v83
    %v315 = vunpack.c.l.b16 %v84
    %v316 = vunpack.c.l.b16 %v85
    %v317 = vunpack.c.l.b16 %v86
    %v318 = vunpack.c.l.b16 %v87
    %v319 = vunpack.c.l.b16 %v88
    %v320 = vunpack.c.l.b16 %v89
    %v321 = vunpack.c.l.b16 %v90
    %v322 = vunpack.c.l.b16 %v91
    %v323 = vunpack.c.l.b16 %v92
    %v324 = vunpack.c.l.b16 %v93
    %v325 = vunpack.c.l.b16 %v94
    %v326 = vunpack.c.l.b16 %v95
    %v327 = vunpack.c.l.b16 %v96
    %v328 = vunpack.c.l.b16 %v97
    %v329 = vunpack.c.l.b16 %v98
    %v330 = vpack.c.b16 %v315, %v314
    %v331 = vpack.c.b16 %v317, %v316
    %v332 = vpack.c.b16 %v319, %v318
    %v333 = vpack.c.b16 %v321, %v320
    %v334 = vpack.c.b16 %v323, %v322
    %v335 = vpack.c.b16 %v325, %v324
    %v336 = vpack.c.b16 %v327, %v326
    %v337 = vpack.c.b16 %v329, %v328
    %346 = vmatprep.subr.bf16.mxu0 0
    %347 = vmatpush1.bf16.msra.mxu0 %v337
    %348 = vmatprep.subr.bf16.mxu0 0
    %349 = vmatpush1.bf16.msra.mxu0 %v336
    %350 = vmatprep.subr.bf16.mxu0 0
    %351 = vmatpush1.bf16.msra.mxu0 %v335
    %352 = vmatprep.subr.bf16.mxu0 0
    %353 = vmatpush1.bf16.msra.mxu0 %v334
    %354 = vmatprep.subr.bf16.mxu0 0
    %355 = vmatpush1.bf16.msra.mxu0 %v333
    %356 = vmatprep.subr.bf16.mxu0 0
    %357 = vmatpush1.bf16.msra.mxu0 %v332
    %358 = vmatprep.subr.bf16.mxu0 0
    %359 = vmatpush1.bf16.msra.mxu0 %v331
    %360 = vmatprep.subr.bf16.mxu0 0
    %361 = vmatpush1.bf16.msra.mxu0 %v330
    %362 = vmatprep.subr.bf16.mxu0 0
    %363 = vmatpush2.bf16.msra.mxu0 0
    %364 = vmatprep.subr.bf16.mxu0 0
    %365 = vmatpush2.bf16.msra.mxu0 0
    %366 = vmatprep.subr.bf16.mxu0 0
    %367 = vmatpush2.bf16.msra.mxu0 0
    %368 = vmatprep.subr.bf16.mxu0 0
    %369 = vmatpush2.bf16.msra.mxu0 0
    %370 = vmatprep.subr.bf16.mxu0 0
    %371 = vmatpush2.bf16.msra.mxu0 0
    %372 = vmatprep.subr.bf16.mxu0 0
    %373 = vmatpush2.bf16.msra.mxu0 0
    %374 = vmatprep.subr.bf16.mxu0 0
    %375 = vmatpush2.bf16.msra.mxu0 0
    %376 = vmatprep.subr.bf16.mxu0 0
    %377 = vmatpush2.bf16.msra.mxu0 0
    %378 = vmatprep.mubr.bf16.mxu0 0
    %379 = vmatmul.mubr.bf16.gmra.mxu0 %v234
    %v380 = vpop.f32.mrf.mxu0
    %v381 = vadd.f32 %v104, %v380
    %v382 = vpop.f32.mrf.mxu0
    %v383 = vpop.f32.mrf.mxu0
    %v384 = vadd.f32 %v104, %v383
    %v385 = vpop.f32.mrf.mxu0
    %386 = vmatprep.mubr.bf16.mxu0 0
    %387 = vmatmul.mubr.bf16.gmra.mxu0 %v235
    %v388 = vpop.f32.mrf.mxu0
    %v389 = vadd.f32 %v104, %v388
    %v390 = vpop.f32.mrf.mxu0
    %v391 = vpop.f32.mrf.mxu0
    %v392 = vadd.f32 %v104, %v391
    %v393 = vpop.f32.mrf.mxu0
    %394 = vmatprep.mubr.bf16.mxu0 0
    %395 = vmatmul.mubr.bf16.gmra.mxu0 %v236
    %v396 = vpop.f32.mrf.mxu0
    %v397 = vadd.f32 %v104, %v396
    %v398 = vpop.f32.mrf.mxu0
    %v399 = vpop.f32.mrf.mxu0
    %v400 = vadd.f32 %v104, %v399
    %v401 = vpop.f32.mrf.mxu0
    %402 = vmatprep.mubr.bf16.mxu0 0
    %403 = vmatmul.mubr.bf16.gmra.mxu0 %v237
    %v404 = vpop.f32.mrf.mxu0
    %v405 = vadd.f32 %v104, %v404
    %v406 = vpop.f32.mrf.mxu0
    %v407 = vpop.f32.mrf.mxu0
    %v408 = vadd.f32 %v104, %v407
    %v409 = vpop.f32.mrf.mxu0
    %410 = vmatprep.mubr.bf16.mxu0 0
    %411 = vmatmul.mubr.bf16.gmra.mxu0 %v238
    %v412 = vpop.f32.mrf.mxu0
    %v413 = vadd.f32 %v104, %v412
    %v414 = vpop.f32.mrf.mxu0
    %v415 = vpop.f32.mrf.mxu0
    %v416 = vadd.f32 %v104, %v415
    %v417 = vpop.f32.mrf.mxu0
    %418 = vmatprep.mubr.bf16.mxu0 0
    %419 = vmatmul.mubr.bf16.gmra.mxu0 %v239
    %v420 = vpop.f32.mrf.mxu0
    %v421 = vadd.f32 %v104, %v420
    %v422 = vpop.f32.mrf.mxu0
    %v423 = vpop.f32.mrf.mxu0
    %v424 = vadd.f32 %v104, %v423
    %v425 = vpop.f32.mrf.mxu0
    %426 = vmatprep.mubr.bf16.mxu0 0
    %427 = vmatmul.mubr.bf16.gmra.mxu0 %v240
    %v428 = vpop.f32.mrf.mxu0
    %v429 = vadd.f32 %v104, %v428
    %v430 = vpop.f32.mrf.mxu0
    %v431 = vpop.f32.mrf.mxu0
    %v432 = vadd.f32 %v104, %v431
    %v433 = vpop.f32.mrf.mxu0
    %434 = vmatprep.mubr.bf16.mxu0 0
    %435 = vmatmul.mubr.bf16.gmra.mxu0 %v241
    %v436 = vpop.f32.mrf.mxu0
    %v437 = vadd.f32 %v104, %v436
    %v438 = vpop.f32.mrf.mxu0
    %v439 = vpop.f32.mrf.mxu0
    %v440 = vadd.f32 %v104, %v439
    %v441 = vpop.f32.mrf.mxu0
    %442 = vmatprep.mubr.bf16.mxu0 0
    %443 = vmatmul.mubr.bf16.gmra.mxu0 %v242
    %v444 = vpop.f32.mrf.mxu0
    %v445 = vadd.f32 %v104, %v444
    %v446 = vpop.f32.mrf.mxu0
    %v447 = vpop.f32.mrf.mxu0
    %v448 = vadd.f32 %v104, %v447
    %v449 = vpop.f32.mrf.mxu0
    %450 = vmatprep.mubr.bf16.mxu0 0
    %451 = vmatmul.mubr.bf16.gmra.mxu0 %v243
    %v452 = vpop.f32.mrf.mxu0
    %v453 = vadd.f32 %v104, %v452
    %v454 = vpop.f32.mrf.mxu0
    %v455 = vpop.f32.mrf.mxu0
    %v456 = vadd.f32 %v104, %v455
    %v457 = vpop.f32.mrf.mxu0
    %458 = vmatprep.mubr.bf16.mxu0 0
    %459 = vmatmul.mubr.bf16.gmra.mxu0 %v244
    %v460 = vpop.f32.mrf.mxu0
    %v461 = vadd.f32 %v104, %v460
    %v462 = vpop.f32.mrf.mxu0
    %v463 = vpop.f32.mrf.mxu0
    %v464 = vadd.f32 %v104, %v463
    %v465 = vpop.f32.mrf.mxu0
    %466 = vmatprep.mubr.bf16.mxu0 0
    %467 = vmatmul.mubr.bf16.gmra.mxu0 %v245
    %v468 = vpop.f32.mrf.mxu0
    %v469 = vadd.f32 %v104, %v468
    %v470 = vpop.f32.mrf.mxu0
    %v471 = vpop.f32.mrf.mxu0
    %v472 = vadd.f32 %v104, %v471
    %v473 = vpop.f32.mrf.mxu0
    %474 = vmatprep.mubr.bf16.mxu0 0
    %475 = vmatmul.mubr.bf16.gmra.mxu0 %v246
    %v476 = vpop.f32.mrf.mxu0
    %v477 = vadd.f32 %v104, %v476
    %v478 = vpop.f32.mrf.mxu0
    %v479 = vpop.f32.mrf.mxu0
    %v480 = vadd.f32 %v104, %v479
    %v481 = vpop.f32.mrf.mxu0
    %482 = vmatprep.mubr.bf16.mxu0 0
    %483 = vmatmul.mubr.bf16.gmra.mxu0 %v247
    %v484 = vpop.f32.mrf.mxu0
    %v485 = vadd.f32 %v104, %v484
    %v486 = vpop.f32.mrf.mxu0
    %v487 = vpop.f32.mrf.mxu0
    %v488 = vadd.f32 %v104, %v487
    %v489 = vpop.f32.mrf.mxu0
    %490 = vmatprep.mubr.bf16.mxu0 0
    %491 = vmatmul.mubr.bf16.gmra.mxu0 %v248
    %v492 = vpop.f32.mrf.mxu0
    %v493 = vadd.f32 %v104, %v492
    %v494 = vpop.f32.mrf.mxu0
    %v495 = vpop.f32.mrf.mxu0
    %v496 = vadd.f32 %v104, %v495
    %v497 = vpop.f32.mrf.mxu0
    %498 = vmatprep.mubr.bf16.mxu0 0
    %499 = vmatmul.mubr.bf16.gmra.mxu0 %v249
    %v500 = vpop.f32.mrf.mxu0
    %v501 = vadd.f32 %v104, %v500
    %v502 = vpop.f32.mrf.mxu0
    %v503 = vpop.f32.mrf.mxu0
    %v504 = vadd.f32 %v104, %v503
    %v505 = vpop.f32.mrf.mxu0
    %506 = vmatprep.mubr.bf16.mxu0 0
    %507 = vmatmul.mubr.bf16.gmra.mxu0 %v250
    %v508 = vpop.f32.mrf.mxu0
    %v509 = vadd.f32 %v104, %v508
    %v510 = vpop.f32.mrf.mxu0
    %v511 = vpop.f32.mrf.mxu0
    %v512 = vadd.f32 %v104, %v511
    %v513 = vpop.f32.mrf.mxu0
    %514 = vmatprep.mubr.bf16.mxu0 0
    %515 = vmatmul.mubr.bf16.gmra.mxu0 %v251
    %v516 = vpop.f32.mrf.mxu0
    %v517 = vadd.f32 %v104, %v516
    %v518 = vpop.f32.mrf.mxu0
    %v519 = vpop.f32.mrf.mxu0
    %v520 = vadd.f32 %v104, %v519
    %v521 = vpop.f32.mrf.mxu0
    %522 = vmatprep.mubr.bf16.mxu0 0
    %523 = vmatmul.mubr.bf16.gmra.mxu0 %v252
    %v524 = vpop.f32.mrf.mxu0
    %v525 = vadd.f32 %v104, %v524
    %v526 = vpop.f32.mrf.mxu0
    %v527 = vpop.f32.mrf.mxu0
    %v528 = vadd.f32 %v104, %v527
    %v529 = vpop.f32.mrf.mxu0
    %530 = vmatprep.mubr.bf16.mxu0 0
    %531 = vmatmul.mubr.bf16.gmra.mxu0 %v253
    %v532 = vpop.f32.mrf.mxu0
    %v533 = vadd.f32 %v104, %v532
    %v534 = vpop.f32.mrf.mxu0
    %v535 = vpop.f32.mrf.mxu0
    %v536 = vadd.f32 %v104, %v535
    %v537 = vpop.f32.mrf.mxu0
    %538 = vmatprep.mubr.bf16.mxu0 0
    %539 = vmatmul.mubr.bf16.gmra.mxu0 %v254
    %v540 = vpop.f32.mrf.mxu0
    %v541 = vadd.f32 %v104, %v540
    %v542 = vpop.f32.mrf.mxu0
    %v543 = vpop.f32.mrf.mxu0
    %v544 = vadd.f32 %v104, %v543
    %v545 = vpop.f32.mrf.mxu0
    %546 = vmatprep.mubr.bf16.mxu0 0
    %547 = vmatmul.mubr.bf16.gmra.mxu0 %v255
    %v548 = vpop.f32.mrf.mxu0
    %v549 = vadd.f32 %v104, %v548
    %v550 = vpop.f32.mrf.mxu0
    %v551 = vpop.f32.mrf.mxu0
    %v552 = vadd.f32 %v104, %v551
    %v553 = vpop.f32.mrf.mxu0
    %554 = vmatprep.mubr.bf16.mxu0 0
    %555 = vmatmul.mubr.bf16.gmra.mxu0 %v256
    %v556 = vpop.f32.mrf.mxu0
    %v557 = vadd.f32 %v104, %v556
    %v558 = vpop.f32.mrf.mxu0
    %v559 = vpop.f32.mrf.mxu0
    %v560 = vadd.f32 %v104, %v559
    %v561 = vpop.f32.mrf.mxu0
    %562 = vmatprep.mubr.bf16.mxu0 0
    %563 = vmatmul.mubr.bf16.gmra.mxu0 %v257
    %v564 = vpop.f32.mrf.mxu0
    %v565 = vadd.f32 %v104, %v564
    %v566 = vpop.f32.mrf.mxu0
    %v567 = vpop.f32.mrf.mxu0
    %v568 = vadd.f32 %v104, %v567
    %v569 = vpop.f32.mrf.mxu0
    %570 = vmatprep.mubr.bf16.mxu0 0
    %571 = vmatmul.mubr.bf16.gmra.mxu0 %v258
    %v572 = vpop.f32.mrf.mxu0
    %v573 = vadd.f32 %v104, %v572
    %v574 = vpop.f32.mrf.mxu0
    %v575 = vpop.f32.mrf.mxu0
    %v576 = vadd.f32 %v104, %v575
    %v577 = vpop.f32.mrf.mxu0
    %578 = vmatprep.mubr.bf16.mxu0 0
    %579 = vmatmul.mubr.bf16.gmra.mxu0 %v259
    %v580 = vpop.f32.mrf.mxu0
    %v581 = vadd.f32 %v104, %v580
    %v582 = vpop.f32.mrf.mxu0
    %v583 = vpop.f32.mrf.mxu0
    %v584 = vadd.f32 %v104, %v583
    %v585 = vpop.f32.mrf.mxu0
    %586 = vmatprep.mubr.bf16.mxu0 0
    %587 = vmatmul.mubr.bf16.gmra.mxu0 %v260
    %v588 = vpop.f32.mrf.mxu0
    %v589 = vadd.f32 %v104, %v588
    %v590 = vpop.f32.mrf.mxu0
    %v591 = vpop.f32.mrf.mxu0
    %v592 = vadd.f32 %v104, %v591
    %v593 = vpop.f32.mrf.mxu0
    %594 = vmatprep.mubr.bf16.mxu0 0
    %595 = vmatmul.mubr.bf16.gmra.mxu0 %v261
    %v596 = vpop.f32.mrf.mxu0
    %v597 = vadd.f32 %v104, %v596
    %v598 = vpop.f32.mrf.mxu0
    %v599 = vpop.f32.mrf.mxu0
    %v600 = vadd.f32 %v104, %v599
    %v601 = vpop.f32.mrf.mxu0
    %602 = vmatprep.mubr.bf16.mxu0 0
    %603 = vmatmul.mubr.bf16.gmra.mxu0 %v262
    %v604 = vpop.f32.mrf.mxu0
    %v605 = vadd.f32 %v104, %v604
    %v606 = vpop.f32.mrf.mxu0
    %v607 = vpop.f32.mrf.mxu0
    %v608 = vadd.f32 %v104, %v607
    %v609 = vpop.f32.mrf.mxu0
    %610 = vmatprep.mubr.bf16.mxu0 0
    %611 = vmatmul.mubr.bf16.gmra.mxu0 %v263
    %v612 = vpop.f32.mrf.mxu0
    %v613 = vadd.f32 %v104, %v612
    %v614 = vpop.f32.mrf.mxu0
    %v615 = vpop.f32.mrf.mxu0
    %v616 = vadd.f32 %v104, %v615
    %v617 = vpop.f32.mrf.mxu0
    %618 = vmatprep.mubr.bf16.mxu0 0
    %619 = vmatmul.mubr.bf16.gmra.mxu0 %v264
    %v620 = vpop.f32.mrf.mxu0
    %v621 = vadd.f32 %v104, %v620
    %v622 = vpop.f32.mrf.mxu0
    %v623 = vpop.f32.mrf.mxu0
    %v624 = vadd.f32 %v104, %v623
    %v625 = vpop.f32.mrf.mxu0
    %626 = vmatprep.mubr.bf16.mxu0 0
    %627 = vmatmul.mubr.bf16.gmra.mxu0 %v265
    %v628 = vpop.f32.mrf.mxu0
    %v629 = vadd.f32 %v104, %v628
    %v630 = vpop.f32.mrf.mxu0
    %v631 = vpop.f32.mrf.mxu0
    %v632 = vadd.f32 %v104, %v631
    %v633 = vpop.f32.mrf.mxu0
    %634 = vdwg.mxu0
    %v635 = vld [vmem:[%s3] sm:$0xf]
    %v636 = vld [vmem:[%s3 + $0x4] sm:$0xf]
    %v637 = vld [vmem:[%s3 + $0x8] sm:$0xf]
    %v638 = vld [vmem:[%s3 + $0xc] sm:$0xf]
    %v639 = vld [vmem:[%s3 + $0x10] sm:$0xf]
    %v640 = vld [vmem:[%s3 + $0x14] sm:$0xf]
    %v641 = vld [vmem:[%s3 + $0x18] sm:$0xf]
    %v642 = vld [vmem:[%s3 + $0x1c] sm:$0xf]
    %v643 = vld [vmem:[%s3 + $0x20] sm:$0xf]
    %v644 = vld [vmem:[%s3 + $0x24] sm:$0xf]
    %v645 = vld [vmem:[%s3 + $0x28] sm:$0xf]
    %v646 = vld [vmem:[%s3 + $0x2c] sm:$0xf]
    %v647 = vld [vmem:[%s3 + $0x30] sm:$0xf]
    %v648 = vld [vmem:[%s3 + $0x34] sm:$0xf]
    %v649 = vld [vmem:[%s3 + $0x38] sm:$0xf]
    %v650 = vld [vmem:[%s3 + $0x3c] sm:$0xf]
    %v651 = vld [vmem:[%s3 + $0x40] sm:$0xf]
    %v652 = vld [vmem:[%s3 + $0x44] sm:$0xf]
    %v653 = vld [vmem:[%s3 + $0x48] sm:$0xf]
    %v654 = vld [vmem:[%s3 + $0x4c] sm:$0xf]
    %v655 = vld [vmem:[%s3 + $0x50] sm:$0xf]
    %v656 = vld [vmem:[%s3 + $0x54] sm:$0xf]
    %v657 = vld [vmem:[%s3 + $0x58] sm:$0xf]
    %v658 = vld [vmem:[%s3 + $0x5c] sm:$0xf]
    %v659 = vld [vmem:[%s3 + $0x60] sm:$0xf]
    %v660 = vld [vmem:[%s3 + $0x64] sm:$0xf]
    %v661 = vld [vmem:[%s3 + $0x68] sm:$0xf]
    %v662 = vld [vmem:[%s3 + $0x6c] sm:$0xf]
    %v663 = vld [vmem:[%s3 + $0x70] sm:$0xf]
    %v664 = vld [vmem:[%s3 + $0x74] sm:$0xf]
    %v665 = vld [vmem:[%s3 + $0x78] sm:$0xf]
    %v666 = vld [vmem:[%s3 + $0x7c] sm:$0xf]
    %v667 = vld [vmem:[%s3 + $0x80] sm:$0xf]
    %v668 = vld [vmem:[%s3 + $0x84] sm:$0xf]
    %v669 = vld [vmem:[%s3 + $0x88] sm:$0xf]
    %v670 = vld [vmem:[%s3 + $0x8c] sm:$0xf]
    %v671 = vld [vmem:[%s3 + $0x90] sm:$0xf]
    %v672 = vld [vmem:[%s3 + $0x94] sm:$0xf]
    %v673 = vld [vmem:[%s3 + $0x98] sm:$0xf]
    %v674 = vld [vmem:[%s3 + $0x9c] sm:$0xf]
    %v675 = vld [vmem:[%s3 + $0xa0] sm:$0xf]
    %v676 = vld [vmem:[%s3 + $0xa4] sm:$0xf]
    %v677 = vld [vmem:[%s3 + $0xa8] sm:$0xf]
    %v678 = vld [vmem:[%s3 + $0xac] sm:$0xf]
    %v679 = vld [vmem:[%s3 + $0xb0] sm:$0xf]
    %v680 = vld [vmem:[%s3 + $0xb4] sm:$0xf]
    %v681 = vld [vmem:[%s3 + $0xb8] sm:$0xf]
    %v682 = vld [vmem:[%s3 + $0xbc] sm:$0xf]
    %v683 = vld [vmem:[%s3 + $0xc0] sm:$0xf]
    %v684 = vld [vmem:[%s3 + $0xc4] sm:$0xf]
    %v685 = vld [vmem:[%s3 + $0xc8] sm:$0xf]
    %v686 = vld [vmem:[%s3 + $0xcc] sm:$0xf]
    %v687 = vld [vmem:[%s3 + $0xd0] sm:$0xf]
    %v688 = vld [vmem:[%s3 + $0xd4] sm:$0xf]
    %v689 = vld [vmem:[%s3 + $0xd8] sm:$0xf]
    %v690 = vld [vmem:[%s3 + $0xdc] sm:$0xf]
    %v691 = vld [vmem:[%s3 + $0xe0] sm:$0xf]
    %v692 = vld [vmem:[%s3 + $0xe4] sm:$0xf]
    %v693 = vld [vmem:[%s3 + $0xe8] sm:$0xf]
    %v694 = vld [vmem:[%s3 + $0xec] sm:$0xf]
    %v695 = vld [vmem:[%s3 + $0xf0] sm:$0xf]
    %v696 = vld [vmem:[%s3 + $0xf4] sm:$0xf]
    %v697 = vld [vmem:[%s3 + $0xf8] sm:$0xf]
    %v698 = vld [vmem:[%s3 + $0xfc] sm:$0xf]
    %v699 = vunpack.c.l.bf16 %v635
    %v700 = vunpack.c.l.bf16 %v636
    %v701 = vunpack.c.l.bf16 %v637
    %v702 = vunpack.c.l.bf16 %v638
    %v703 = vunpack.c.l.bf16 %v639
    %v704 = vunpack.c.l.bf16 %v640
    %v705 = vunpack.c.l.bf16 %v641
    %v706 = vunpack.c.l.bf16 %v642
    %v707 = vunpack.c.l.bf16 %v643
    %v708 = vunpack.c.l.bf16 %v644
    %v709 = vunpack.c.l.bf16 %v645
    %v710 = vunpack.c.l.bf16 %v646
    %v711 = vunpack.c.l.bf16 %v647
    %v712 = vunpack.c.l.bf16 %v648
    %v713 = vunpack.c.l.bf16 %v649
    %v714 = vunpack.c.l.bf16 %v650
    %v715 = vunpack.c.l.bf16 %v651
    %v716 = vunpack.c.l.bf16 %v652
    %v717 = vunpack.c.l.bf16 %v653
    %v718 = vunpack.c.l.bf16 %v654
    %v719 = vunpack.c.l.bf16 %v655
    %v720 = vunpack.c.l.bf16 %v656
    %v721 = vunpack.c.l.bf16 %v657
    %v722 = vunpack.c.l.bf16 %v658
    %v723 = vunpack.c.l.bf16 %v659
    %v724 = vunpack.c.l.bf16 %v660
    %v725 = vunpack.c.l.bf16 %v661
    %v726 = vunpack.c.l.bf16 %v662
    %v727 = vunpack.c.l.bf16 %v663
    %v728 = vunpack.c.l.bf16 %v664
    %v729 = vunpack.c.l.bf16 %v665
    %v730 = vunpack.c.l.bf16 %v666
    %v731 = vunpack.c.l.bf16 %v667
    %v732 = vunpack.c.l.bf16 %v668
    %v733 = vunpack.c.l.bf16 %v669
    %v734 = vunpack.c.l.bf16 %v670
    %v735 = vunpack.c.l.bf16 %v671
    %v736 = vunpack.c.l.bf16 %v672
    %v737 = vunpack.c.l.bf16 %v673
    %v738 = vunpack.c.l.bf16 %v674
    %v739 = vunpack.c.l.bf16 %v675
    %v740 = vunpack.c.l.bf16 %v676
    %v741 = vunpack.c.l.bf16 %v677
    %v742 = vunpack.c.l.bf16 %v678
    %v743 = vunpack.c.l.bf16 %v679
    %v744 = vunpack.c.l.bf16 %v680
    %v745 = vunpack.c.l.bf16 %v681
    %v746 = vunpack.c.l.bf16 %v682
    %v747 = vunpack.c.l.bf16 %v683
    %v748 = vunpack.c.l.bf16 %v684
    %v749 = vunpack.c.l.bf16 %v685
    %v750 = vunpack.c.l.bf16 %v686
    %v751 = vunpack.c.l.bf16 %v687
    %v752 = vunpack.c.l.bf16 %v688
    %v753 = vunpack.c.l.bf16 %v689
    %v754 = vunpack.c.l.bf16 %v690
    %v755 = vunpack.c.l.bf16 %v691
    %v756 = vunpack.c.l.bf16 %v692
    %v757 = vunpack.c.l.bf16 %v693
    %v758 = vunpack.c.l.bf16 %v694
    %v759 = vunpack.c.l.bf16 %v695
    %v760 = vunpack.c.l.bf16 %v696
    %v761 = vunpack.c.l.bf16 %v697
    %v762 = vunpack.c.l.bf16 %v698
    %v763 = vadd.f32 %v381, %v699
    %v764 = vadd.f32 %v384, %v700
    %v765 = vadd.f32 %v389, %v701
    %v766 = vadd.f32 %v392, %v702
    %v767 = vadd.f32 %v397, %v703
    %v768 = vadd.f32 %v400, %v704
    %v769 = vadd.f32 %v405, %v705
    %v770 = vadd.f32 %v408, %v706
    %v771 = vadd.f32 %v413, %v707
    %v772 = vadd.f32 %v416, %v708
    %v773 = vadd.f32 %v421, %v709
    %v774 = vadd.f32 %v424, %v710
    %v775 = vadd.f32 %v429, %v711
    %v776 = vadd.f32 %v432, %v712
    %v777 = vadd.f32 %v437, %v713
    %v778 = vadd.f32 %v440, %v714
    %v779 = vadd.f32 %v445, %v715
    %v780 = vadd.f32 %v448, %v716
    %v781 = vadd.f32 %v453, %v717
    %v782 = vadd.f32 %v456, %v718
    %v783 = vadd.f32 %v461, %v719
    %v784 = vadd.f32 %v464, %v720
    %v785 = vadd.f32 %v469, %v721
    %v786 = vadd.f32 %v472, %v722
    %v787 = vadd.f32 %v477, %v723
    %v788 = vadd.f32 %v480, %v724
    %v789 = vadd.f32 %v485, %v725
    %v790 = vadd.f32 %v488, %v726
    %v791 = vadd.f32 %v493, %v727
    %v792 = vadd.f32 %v496, %v728
    %v793 = vadd.f32 %v501, %v729
    %v794 = vadd.f32 %v504, %v730
    %v795 = vadd.f32 %v509, %v731
    %v796 = vadd.f32 %v512, %v732
    %v797 = vadd.f32 %v517, %v733
    %v798 = vadd.f32 %v520, %v734
    %v799 = vadd.f32 %v525, %v735
    %v800 = vadd.f32 %v528, %v736
    %v801 = vadd.f32 %v533, %v737
    %v802 = vadd.f32 %v536, %v738
    %v803 = vadd.f32 %v541, %v739
    %v804 = vadd.f32 %v544, %v740
    %v805 = vadd.f32 %v549, %v741
    %v806 = vadd.f32 %v552, %v742
    %v807 = vadd.f32 %v557, %v743
    %v808 = vadd.f32 %v560, %v744
    %v809 = vadd.f32 %v565, %v745
    %v810 = vadd.f32 %v568, %v746
    %v811 = vadd.f32 %v573, %v747
    %v812 = vadd.f32 %v576, %v748
    %v813 = vadd.f32 %v581, %v749
    %v814 = vadd.f32 %v584, %v750
    %v815 = vadd.f32 %v589, %v751
    %v816 = vadd.f32 %v592, %v752
    %v817 = vadd.f32 %v597, %v753
    %v818 = vadd.f32 %v600, %v754
    %v819 = vadd.f32 %v605, %v755
    %v820 = vadd.f32 %v608, %v756
    %v821 = vadd.f32 %v613, %v757
    %v822 = vadd.f32 %v616, %v758
    %v823 = vadd.f32 %v621, %v759
    %v824 = vadd.f32 %v624, %v760
    %v825 = vadd.f32 %v629, %v761
    %v826 = vadd.f32 %v632, %v762
    %v827 = vmax.f32 %v763, 0.0
    %v828 = vmax.f32 %v764, 0.0
    %v829 = vmax.f32 %v765, 0.0
    %v830 = vmax.f32 %v766, 0.0
    %v831 = vmax.f32 %v767, 0.0
    %v832 = vmax.f32 %v768, 0.0
    %v833 = vmax.f32 %v769, 0.0
    %v834 = vmax.f32 %v770, 0.0
    %v835 = vmax.f32 %v771, 0.0
    %v836 = vmax.f32 %v772, 0.0
    %v837 = vmax.f32 %v773, 0.0
    %v838 = vmax.f32 %v774, 0.0
    %v839 = vmax.f32 %v775, 0.0
    %v840 = vmax.f32 %v776, 0.0
    %v841 = vmax.f32 %v777, 0.0
    %v842 = vmax.f32 %v778, 0.0
    %v843 = vmax.f32 %v779, 0.0
    %v844 = vmax.f32 %v780, 0.0
    %v845 = vmax.f32 %v781, 0.0
    %v846 = vmax.f32 %v782, 0.0
    %v847 = vmax.f32 %v783, 0.0
    %v848 = vmax.f32 %v784, 0.0
    %v849 = vmax.f32 %v785, 0.0
    %v850 = vmax.f32 %v786, 0.0
    %v851 = vmax.f32 %v787, 0.0
    %v852 = vmax.f32 %v788, 0.0
    %v853 = vmax.f32 %v789, 0.0
    %v854 = vmax.f32 %v790, 0.0
    %v855 = vmax.f32 %v791, 0.0
    %v856 = vmax.f32 %v792, 0.0
    %v857 = vmax.f32 %v793, 0.0
    %v858 = vmax.f32 %v794, 0.0
    %v859 = vmax.f32 %v795, 0.0
    %v860 = vmax.f32 %v796, 0.0
    %v861 = vmax.f32 %v797, 0.0
    %v862 = vmax.f32 %v798, 0.0
    %v863 = vmax.f32 %v799, 0.0
    %v864 = vmax.f32 %v800, 0.0
    %v865 = vmax.f32 %v801, 0.0
    %v866 = vmax.f32 %v802, 0.0
    %v867 = vmax.f32 %v803, 0.0
    %v868 = vmax.f32 %v804, 0.0
    %v869 = vmax.f32 %v805, 0.0
    %v870 = vmax.f32 %v806, 0.0
    %v871 = vmax.f32 %v807, 0.0
    %v872 = vmax.f32 %v808, 0.0
    %v873 = vmax.f32 %v809, 0.0
    %v874 = vmax.f32 %v810, 0.0
    %v875 = vmax.f32 %v811, 0.0
    %v876 = vmax.f32 %v812, 0.0
    %v877 = vmax.f32 %v813, 0.0
    %v878 = vmax.f32 %v814, 0.0
    %v879 = vmax.f32 %v815, 0.0
    %v880 = vmax.f32 %v816, 0.0
    %v881 = vmax.f32 %v817, 0.0
    %v882 = vmax.f32 %v818, 0.0
    %v883 = vmax.f32 %v819, 0.0
    %v884 = vmax.f32 %v820, 0.0
    %v885 = vmax.f32 %v821, 0.0
    %v886 = vmax.f32 %v822, 0.0
    %v887 = vmax.f32 %v823, 0.0
    %v888 = vmax.f32 %v824, 0.0
    %v889 = vmax.f32 %v825, 0.0
    %v890 = vmax.f32 %v826, 0.0
    %891 = vst [vmem:[#allocation2] sm:$0xff] %v827
    %892 = vst [vmem:[#allocation2 + $0x8] sm:$0xff] %v828
    %893 = vst [vmem:[#allocation2 + $0x10] sm:$0xff] %v829
    %894 = vst [vmem:[#allocation2 + $0x18] sm:$0xff] %v830
    %895 = vst [vmem:[#allocation2 + $0x20] sm:$0xff] %v831
    %896 = vst [vmem:[#allocation2 + $0x28] sm:$0xff] %v832
    %897 = vst [vmem:[#allocation2 + $0x30] sm:$0xff] %v833
    %898 = vst [vmem:[#allocation2 + $0x38] sm:$0xff] %v834
    %899 = vst [vmem:[#allocation2 + $0x40] sm:$0xff] %v835
    %900 = vst [vmem:[#allocation2 + $0x48] sm:$0xff] %v836
    %901 = vst [vmem:[#allocation2 + $0x50] sm:$0xff] %v837
    %902 = vst [vmem:[#allocation2 + $0x58] sm:$0xff] %v838
    %903 = vst [vmem:[#allocation2 + $0x60] sm:$0xff] %v839
    %904 = vst [vmem:[#allocation2 + $0x68] sm:$0xff] %v840
    %905 = vst [vmem:[#allocation2 + $0x70] sm:$0xff] %v841
    %906 = vst [vmem:[#allocation2 + $0x78] sm:$0xff] %v842
    %907 = vst [vmem:[#allocation2 + $0x80] sm:$0xff] %v843
    %908 = vst [vmem:[#allocation2 + $0x88] sm:$0xff] %v844
    %909 = vst [vmem:[#allocation2 + $0x90] sm:$0xff] %v845
    %910 = vst [vmem:[#allocation2 + $0x98] sm:$0xff] %v846
    %911 = vst [vmem:[#allocation2 + $0xa0] sm:$0xff] %v847
    %912 = vst [vmem:[#allocation2 + $0xa8] sm:$0xff] %v848
    %913 = vst [vmem:[#allocation2 + $0xb0] sm:$0xff] %v849
    %914 = vst [vmem:[#allocation2 + $0xb8] sm:$0xff] %v850
    %915 = vst [vmem:[#allocation2 + $0xc0] sm:$0xff] %v851
    %916 = vst [vmem:[#allocation2 + $0xc8] sm:$0xff] %v852
    %917 = vst [vmem:[#allocation2 + $0xd0] sm:$0xff] %v853
    %918 = vst [vmem:[#allocation2 + $0xd8] sm:$0xff] %v854
    %919 = vst [vmem:[#allocation2 + $0xe0] sm:$0xff] %v855
    %920 = vst [vmem:[#allocation2 + $0xe8] sm:$0xff] %v856
    %921 = vst [vmem:[#allocation2 + $0xf0] sm:$0xff] %v857
    %922 = vst [vmem:[#allocation2 + $0xf8] sm:$0xff] %v858
    %923 = vst [vmem:[#allocation2 + $0x100] sm:$0xff] %v859
    %924 = vst [vmem:[#allocation2 + $0x108] sm:$0xff] %v860
    %925 = vst [vmem:[#allocation2 + $0x110] sm:$0xff] %v861
    %926 = vst [vmem:[#allocation2 + $0x118] sm:$0xff] %v862
    %927 = vst [vmem:[#allocation2 + $0x120] sm:$0xff] %v863
    %928 = vst [vmem:[#allocation2 + $0x128] sm:$0xff] %v864
    %929 = vst [vmem:[#allocation2 + $0x130] sm:$0xff] %v865
    %930 = vst [vmem:[#allocation2 + $0x138] sm:$0xff] %v866
    %931 = vst [vmem:[#allocation2 + $0x140] sm:$0xff] %v867
    %932 = vst [vmem:[#allocation2 + $0x148] sm:$0xff] %v868
    %933 = vst [vmem:[#allocation2 + $0x150] sm:$0xff] %v869
    %934 = vst [vmem:[#allocation2 + $0x158] sm:$0xff] %v870
    %935 = vst [vmem:[#allocation2 + $0x160] sm:$0xff] %v871
    %936 = vst [vmem:[#allocation2 + $0x168] sm:$0xff] %v872
    %937 = vst [vmem:[#allocation2 + $0x170] sm:$0xff] %v873
    %938 = vst [vmem:[#allocation2 + $0x178] sm:$0xff] %v874
    %939 = vst [vmem:[#allocation2 + $0x180] sm:$0xff] %v875
    %940 = vst [vmem:[#allocation2 + $0x188] sm:$0xff] %v876
    %941 = vst [vmem:[#allocation2 + $0x190] sm:$0xff] %v877
    %942 = vst [vmem:[#allocation2 + $0x198] sm:$0xff] %v878
    %943 = vst [vmem:[#allocation2 + $0x1a0] sm:$0xff] %v879
    %944 = vst [vmem:[#allocation2 + $0x1a8] sm:$0xff] %v880
    %945 = vst [vmem:[#allocation2 + $0x1b0] sm:$0xff] %v881
    %946 = vst [vmem:[#allocation2 + $0x1b8] sm:$0xff] %v882
    %947 = vst [vmem:[#allocation2 + $0x1c0] sm:$0xff] %v883
    %948 = vst [vmem:[#allocation2 + $0x1c8] sm:$0xff] %v884
    %949 = vst [vmem:[#allocation2 + $0x1d0] sm:$0xff] %v885
    %950 = vst [vmem:[#allocation2 + $0x1d8] sm:$0xff] %v886
    %951 = vst [vmem:[#allocation2 + $0x1e0] sm:$0xff] %v887
    %952 = vst [vmem:[#allocation2 + $0x1e8] sm:$0xff] %v888
    %953 = vst [vmem:[#allocation2 + $0x1f0] sm:$0xff] %v889
    %954 = vst [vmem:[#allocation2 + $0x1f8] sm:$0xff] %v890
    // Predicated region
    $region18: #{bottleneck_forward.5} parent=1 // pred_check
      _
    $region19: #{bottleneck_forward.5} parent=1 // pred_check_branch
      %956 = sbr.rel (0) target = $region21
    $region20: #{bottleneck_forward.5} parent=1 // pred_region
      %s958 = ssub.s32 8192, 8192
      %959 = vsyncadd [#allocation3], %s958
      %s960 = sshll.u32 [#allocation2], 4
      %s961 = int_to_ptr.vmem [resolvable:$true] %s960
      %966 = dma.vmem_to_hbm [thread:$0]  %s961, 8192, %s4, [#allocation3], 128, 128, 8
    $region21: #{bottleneck_forward.5} parent=1 // pred_fallthru
      _
    // Predicated region
    $region22: #{bottleneck_forward.5} parent=1 // pred_check
      _
    $region23: #{bottleneck_forward.5} parent=1 // pred_check_branch
      %968 = sbr.rel (0) target = $region25
    $region24: #{bottleneck_forward.5} parent=1 // pred_region
      %969 = dma.done [#allocation3], 8192
    $region25: #{bottleneck_forward.5} parent=1 // pred_fallthru
      _
    %970 = vsyncpa [#allocation3], 1

// kernel: bottleneck_forward.4
$region0: #{bottleneck_forward.4}
  #allocation0 [shape = 'u32[]', space=smem, size = 0x4, offset = 0x4, fixed_abs, tag = 'smem constant byte address 0x4 - core index']
  #allocation1 [shape = 'u32[144,128]{1,0:T(1,128)}', space=vmem, size = 0x12000, scoped, tag = 'internal scratch']
  %s0 = inlined_call_operand.vmem [shape: bf16[2,18,18,128], index: 0, kind: input, shape index: {}]
  %s1 = inlined_call_operand.vmem [shape: bf16[1152,128], index: 1, kind: input, shape index: {}]
  %s2 = inlined_call_operand.vmem [shape: f32[1,128], index: 2, kind: input, shape index: {}]
  %s3 = inlined_call_operand.vmem [shape: bf16[2,256,128], index: 3, kind: output, shape index: {}]
  %s4 = sld [smem:[#allocation0]]
  $region45: #{bottleneck_forward.4} parent=0
    _
  %s6 = ssub.s32 1, %s4
  %s7 = scalar_select 0, %s6, %s4
  loop: start=0, step=1, limit=4
  $region2: #{bottleneck_forward.4} parent=0 // loop_pre_header
    _
  $region3: #{bottleneck_forward.4} parent=0 // loop_header
    %s9 = sphi 0, %s13
    %p10 = scmp.ge.s32.totalorder %s9, 4
    %s19 = sphi 0, %s21
    %s22 = sphi 0, %s19
    %s23 = sphi 0, %s22
    %s39 = sphi 0, %s23
    %s43 = sphi 0, %s43
    %s45 = sphi 0, %s43
    %s46 = sphi 0, %s45
    %s60 = sphi 0, %s46
    %s64 = sphi 0, %s64
    %s66 = sphi 0, %s64
    %s67 = sphi 0, %s66
    %s81 = sphi 0, %s67
    %s87 = sphi 0, %s89
    %s90 = sphi 0, %s87
    %s91 = sphi 0, %s90
    %s107 = sphi 0, %s91
  $region4: #{bottleneck_forward.4} parent=0 // loop_header_branch
    %12 = sbr.rel (%p10) target = $region8
  $region5: #{bottleneck_forward.4} parent=0 // loop_body
    %s14 = ssub.s32 %s9, 1
    %s15 = ssub.s32 %s9, 2
    %s16 = sadd.s32 %s9, 1
    %s17 = ssub.s32 %s9, %s16
    %p18 = scmp.eq.s32.totalorder %s17, 0
    %s20 = sadd.s32 %s19, 1
    %s21 = scalar_select %p18, %s19, %s20
    %p24 = pneg %p18
    %p25 = scmp.eq.s32.totalorder %s9, 1
    %p26 = por %p24, %p25
    %p27 = scmp.ne.s32.totalorder %s19, %s22
    %p28 = scmp.eq.s32.totalorder %s9, 0
    %p29 = por %p27, %p28
    %p30 = scmp.ne.s32.totalorder %s19, %s22
    %p31 = scmp.eq.s32.totalorder %s14, 1
    %p32 = por %p30, %p31
    %p33 = scmp.ne.s32.totalorder %s22, %s23
    %p34 = scmp.eq.s32.totalorder %s14, 0
    %p35 = por %p33, %p34
    %p36 = scmp.ne.s32.totalorder %s22, %s23
    %p37 = scmp.eq.s32.totalorder %s15, 1
    %p38 = por %p36, %p37
    %p40 = scmp.ne.s32.totalorder %s23, %s39
    %p41 = scmp.eq.s32.totalorder %s15, 0
    %p42 = por %p40, %p41
    %s44 = sadd.s32 %s43, 1
    %p47 = scmp.eq.s32.totalorder %s9, 1
    %p48 = scmp.ne.s32.totalorder %s43, %s45
    %p49 = scmp.eq.s32.totalorder %s9, 0
    %p50 = por %p48, %p49
    %p51 = scmp.ne.s32.totalorder %s43, %s45
    %p52 = scmp.eq.s32.totalorder %s14, 1
    %p53 = por %p51, %p52
    %p54 = scmp.ne.s32.totalorder %s45, %s46
    %p55 = scmp.eq.s32.totalorder %s14, 0
    %p56 = por %p54, %p55
    %p57 = scmp.ne.s32.totalorder %s45, %s46
    %p58 = scmp.eq.s32.totalorder %s15, 1
    %p59 = por %p57, %p58
    %p61 = scmp.ne.s32.totalorder %s46, %s60
    %p62 = scmp.eq.s32.totalorder %s15, 0
    %p63 = por %p61, %p62
    %s65 = sadd.s32 %s64, 1
    %p68 = scmp.eq.s32.totalorder %s9, 1
    %p69 = scmp.ne.s32.totalorder %s64, %s66
    %p70 = scmp.eq.s32.totalorder %s9, 0
    %p71 = por %p69, %p70
    %p72 = scmp.ne.s32.totalorder %s64, %s66
    %p73 = scmp.eq.s32.totalorder %s14, 1
    %p74 = por %p72, %p73
    %p75 = scmp.ne.s32.totalorder %s66, %s67
    %p76 = scmp.eq.s32.totalorder %s14, 0
    %p77 = por %p75, %p76
    %p78 = scmp.ne.s32.totalorder %s66, %s67
    %p79 = scmp.eq.s32.totalorder %s15, 1
    %p80 = por %p78, %p79
    %p82 = scmp.ne.s32.totalorder %s67, %s81
    %p83 = scmp.eq.s32.totalorder %s15, 0
    %p84 = por %p82, %p83
    %s85 = ssub.s32 %s9, %s16
    %p86 = scmp.eq.s32.totalorder %s85, 0
    %s88 = sadd.s32 %s87, 1
    %s89 = scalar_select %p86, %s87, %s88
    %p92 = pneg %p86
    %p93 = scmp.eq.s32.totalorder %s9, 1
    %p94 = por %p92, %p93
    %p95 = scmp.ne.s32.totalorder %s87, %s90
    %p96 = scmp.eq.s32.totalorder %s9, 0
    %p97 = por %p95, %p96
    %p98 = scmp.ne.s32.totalorder %s87, %s90
    %p99 = scmp.eq.s32.totalorder %s14, 1
    %p100 = por %p98, %p99
    %p101 = scmp.ne.s32.totalorder %s90, %s91
    %p102 = scmp.eq.s32.totalorder %s14, 0
    %p103 = por %p101, %p102
    %p104 = scmp.ne.s32.totalorder %s90, %s91
    %p105 = scmp.eq.s32.totalorder %s15, 1
    %p106 = por %p104, %p105
    %p108 = scmp.ne.s32.totalorder %s91, %s107
    %p109 = scmp.eq.s32.totalorder %s15, 0
    %p110 = por %p108, %p109
    %p111 = scmp.le.s32.totalorder 1, %s9
    %p112 = scmp.lt.s32.totalorder %s9, 3
    %p113 = pnand %p111, %p112
    %p114 = pneg %p113
    // Predicated region
    $region9: #{bottleneck_forward.4} parent=5 // pred_check
      _
    $region10: #{bottleneck_forward.4} parent=5 // pred_check_branch
      %116 = sbr.rel (%p113) target = $region12
    $region11: #{bottleneck_forward.4} parent=5 // pred_region
      %s117 = ssub.s32 %s9, 1
      // Predicated region
      $region13: #{bottleneck_forward.4} parent=11 // pred_check
        %p118 = pneg %p56
      $region14: #{bottleneck_forward.4} parent=11 // pred_check_branch
        %120 = sbr.rel (%p118) target = $region16
      $region15: #{bottleneck_forward.4} parent=11 // pred_region
        _
      $region16: #{bottleneck_forward.4} parent=11 // pred_fallthru
        _
      // Predicated region
      $region17: #{bottleneck_forward.4} parent=11 // pred_check
        %p121 = pneg %p77
      $region18: #{bottleneck_forward.4} parent=11 // pred_check_branch
        %123 = sbr.rel (%p121) target = $region20
      $region19: #{bottleneck_forward.4} parent=11 // pred_region
        _
      $region20: #{bottleneck_forward.4} parent=11 // pred_fallthru
        _
    $region12: #{bottleneck_forward.4} parent=5 // pred_fallthru
      _
    %p124 = scmp.lt.s32.totalorder %s9, 2
    // Predicated region
    $region21: #{bottleneck_forward.4} parent=5 // pred_check
      %p125 = pneg %p124
    $region22: #{bottleneck_forward.4} parent=5 // pred_check_branch
      %127 = sbr.rel (%p125) target = $region24
    $region23: #{bottleneck_forward.4} parent=5 // pred_region
      // Predicated region
      $region25: #{bottleneck_forward.4} parent=23 // pred_check
        %p128 = pneg %p29
      $region26: #{bottleneck_forward.4} parent=23 // pred_check_branch
        %130 = sbr.rel (%p128) target = $region28
      $region27: #{bottleneck_forward.4} parent=23 // pred_region
        %p131 = scmp.lt.s32.totalorder %s9, 1
        %s132 = scalar_select %p131, %s9, 1
        %s133 = smul.addr %s132, 54
        %s134 = smul.addr %s133, 4
        %s135 = scalar_lea.vmem %s0, %s134
      $region28: #{bottleneck_forward.4} parent=23 // pred_fallthru
        _
    $region24: #{bottleneck_forward.4} parent=5 // pred_fallthru
      _
    %p136 = scmp.le.s32.totalorder 1, %s9
    %p137 = scmp.lt.s32.totalorder %s9, 3
    %p138 = pnand %p136, %p137
    %p139 = pneg %p138
    // Predicated region
    $region29: #{bottleneck_forward.4} parent=5 // pred_check
      _
    $region30: #{bottleneck_forward.4} parent=5 // pred_check_branch
      %141 = sbr.rel (%p138) target = $region32
    $region31: #{bottleneck_forward.4} parent=5 // pred_region
      %s142 = ssub.s32 %s9, 1
      %p143 = scmp.lt.s32.totalorder %s14, 1
      %s144 = scalar_select %p143, %s14, 1
      %s145 = smul.addr %s144, 54
      %s146 = smul.addr %s145, 4
      %s147 = scalar_lea.vmem %s0, %s146
      %p148 = pneg %p35
      %p149 = pneg %p32
      %p150 = pneg %p56
      %p151 = pneg %p53
      %p152 = pneg %p77
      %p153 = pneg %p74
      %p154 = pneg %p103
      %p155 = pneg %p100
      %p156 = scmp.lt.s32.totalorder %s14, 1
      %s157 = scalar_select %p156, %s14, 1
      %s158 = smul.addr %s157, 32
      %s159 = smul.addr %s158, 4
      %s160 = scalar_lea.vmem %s3, %s159
      %p161 = scmp.lt.s32.totalorder %s14, 1
      %s162 = scalar_select %p161, %s14, 1
      %s163 = smul.addr %s162, 54
      %s164 = smul.addr %s163, 4
      %s165 = scalar_lea.vmem %s0, %s164
      %p166 = scmp.lt.s32.totalorder %s14, 1
      %s167 = scalar_select %p166, %s14, 1
      %s168 = smul.addr %s167, 32
      %s169 = smul.addr %s168, 4
      %s170 = scalar_lea.vmem %s3, %s169
      %v172 = vld [vmem:[%s165] sm:$0xf]
      %v173 = vld [vmem:[%s165 + $0x4] sm:$0xf]
      %v174 = vld [vmem:[%s165 + $0xc] sm:$0xf]
      %v175 = vld [vmem:[%s165 + $0x10] sm:$0xf]
      %v176 = vld [vmem:[%s165 + $0x18] sm:$0xf]
      %v177 = vld [vmem:[%s165 + $0x1c] sm:$0xf]
      %v178 = vld [vmem:[%s165 + $0x24] sm:$0xf]
      %v179 = vld [vmem:[%s165 + $0x28] sm:$0xf]
      %v180 = vld [vmem:[%s165 + $0x30] sm:$0xf]
      %v181 = vld [vmem:[%s165 + $0x34] sm:$0xf]
      %v182 = vld [vmem:[%s165 + $0x3c] sm:$0xf]
      %v183 = vld [vmem:[%s165 + $0x40] sm:$0xf]
      %v184 = vld [vmem:[%s165 + $0x48] sm:$0xf]
      %v185 = vld [vmem:[%s165 + $0x4c] sm:$0xf]
      %v186 = vld [vmem:[%s165 + $0x54] sm:$0xf]
      %v187 = vld [vmem:[%s165 + $0x58] sm:$0xf]
      %v188 = vld [vmem:[%s165 + $0x60] sm:$0xf]
      %v189 = vld [vmem:[%s165 + $0x64] sm:$0xf]
      %v190 = vld [vmem:[%s165 + $0x6c] sm:$0xf]
      %v191 = vld [vmem:[%s165 + $0x70] sm:$0xf]
      %v192 = vld [vmem:[%s165 + $0x78] sm:$0xf]
      %v193 = vld [vmem:[%s165 + $0x7c] sm:$0xf]
      %v194 = vld [vmem:[%s165 + $0x84] sm:$0xf]
      %v195 = vld [vmem:[%s165 + $0x88] sm:$0xf]
      %v196 = vld [vmem:[%s165 + $0x90] sm:$0xf]
      %v197 = vld [vmem:[%s165 + $0x94] sm:$0xf]
      %v198 = vld [vmem:[%s165 + $0x9c] sm:$0xf]
      %v199 = vld [vmem:[%s165 + $0xa0] sm:$0xf]
      %v200 = vld [vmem:[%s165 + $0xa8] sm:$0xf]
      %v201 = vld [vmem:[%s165 + $0xac] sm:$0xf]
      %v202 = vld [vmem:[%s165 + $0xb4] sm:$0xf]
      %v203 = vld [vmem:[%s165 + $0xb8] sm:$0xf]
      %v204 = vld [vmem:[%s1] sm:$0xf]
      %v205 = vld [vmem:[%s1 + $0x4] sm:$0xf]
      %v206 = vld [vmem:[%s1 + $0x8] sm:$0xf]
      %v207 = vld [vmem:[%s1 + $0xc] sm:$0xf]
      %v208 = vld [vmem:[%s1 + $0x10] sm:$0xf]
      %v209 = vld [vmem:[%s1 + $0x14] sm:$0xf]
      %v210 = vld [vmem:[%s1 + $0x18] sm:$0xf]
      %v211 = vld [vmem:[%s1 + $0x1c] sm:$0xf]
      %v212 = vld [vmem:[%s1 + $0x20] sm:$0xf]
      %v213 = vld [vmem:[%s1 + $0x24] sm:$0xf]
      %v214 = vld [vmem:[%s1 + $0x28] sm:$0xf]
      %v215 = vld [vmem:[%s1 + $0x2c] sm:$0xf]
      %v216 = vld [vmem:[%s1 + $0x30] sm:$0xf]
      %v217 = vld [vmem:[%s1 + $0x34] sm:$0xf]
      %v218 = vld [vmem:[%s1 + $0x38] sm:$0xf]
      %v219 = vld [vmem:[%s1 + $0x3c] sm:$0xf]
      %v220 = vld [vmem:[%s165 + $0x8] sm:$0x1]
      %v221 = vld [vmem:[%s165 + $0x14] sm:$0x1]
      %v222 = vld [vmem:[%s165 + $0x20] sm:$0x1]
      %v223 = vld [vmem:[%s165 + $0x2c] sm:$0x1]
      %v224 = vld [vmem:[%s165 + $0x38] sm:$0x1]
      %v225 = vld [vmem:[%s165 + $0x44] sm:$0x1]
      %v226 = vld [vmem:[%s165 + $0x50] sm:$0x1]
      %v227 = vld [vmem:[%s165 + $0x5c] sm:$0x1]
      %v228 = vld [vmem:[%s165 + $0x68] sm:$0x1]
      %v229 = vld [vmem:[%s165 + $0x74] sm:$0x1]
      %v230 = vld [vmem:[%s165 + $0x80] sm:$0x1]
      %v231 = vld [vmem:[%s165 + $0x8c] sm:$0x1]
      %v232 = vld [vmem:[%s165 + $0x98] sm:$0x1]
      %v233 = vld [vmem:[%s165 + $0xa4] sm:$0x1]
      %v234 = vld [vmem:[%s165 + $0xb0] sm:$0x1]
      %v235 = vld [vmem:[%s165 + $0xbc] sm:$0x1]
      %vm236 = vsmask.f32 3328
      %vm237 = vsmask.f32 7440
      %vm238 = vmor %vm236, %vm237
      %v240 = vshrl.u32 %v172, 16
      %v242 = vrot.slane %v240, 4
      %v243 = vshll.u32 %v172, 16
      %v245 = vrot.slane %v243, 5
      %v246 = vor.u32 %v242, %v245
      %v247 = vrot.slane %v246, 4
      %v249 = vshll.u32 %v173, 16
      %v251 = vrot.slane %v249, 5
      %v252 = vsel %vm238, %v247, %v251
      %v253 = vshrl.u32 %v173, 16
      %v255 = vrot.slane %v253, 4
      %v256 = vor.u32 %v255, %v251
      %v257 = vrot.slane %v256, 4
      %v259 = vshll.u32 %v220, 16
      %v261 = vrot.slane %v259, 5
      %v262 = vsel %vm238, %v257, %v261
      %v264 = vshrl.u32 %v174, 16
      %v266 = vrot.slane %v264, 4
      %v267 = vshll.u32 %v174, 16
      %v269 = vrot.slane %v267, 5
      %v270 = vor.u32 %v266, %v269
      %v271 = vrot.slane %v270, 4
      %v273 = vshll.u32 %v175, 16
      %v275 = vrot.slane %v273, 5
      %v276 = vsel %vm238, %v271, %v275
      %v277 = vshrl.u32 %v175, 16
      %v279 = vrot.slane %v277, 4
      %v280 = vor.u32 %v279, %v275
      %v281 = vrot.slane %v280, 4
      %v283 = vshll.u32 %v221, 16
      %v285 = vrot.slane %v283, 5
      %v286 = vsel %vm238, %v281, %v285
      %v288 = vshrl.u32 %v176, 16
      %v290 = vrot.slane %v288, 4
      %v291 = vshll.u32 %v176, 16
      %v293 = vrot.slane %v291, 5
      %v294 = vor.u32 %v290, %v293
      %v295 = vrot.slane %v294, 4
      %v297 = vshll.u32 %v177, 16
      %v299 = vrot.slane %v297, 5
      %v300 = vsel %vm238, %v295, %v299
      %v301 = vshrl.u32 %v177, 16
      %v303 = vrot.slane %v301, 4
      %v304 = vor.u32 %v303, %v299
      %v305 = vrot.slane %v304, 4
      %v307 = vshll.u32 %v222, 16
      %v309 = vrot.slane %v307, 5
      %v310 = vsel %vm238, %v305, %v309
      %v312 = vshrl.u32 %v178, 16
      %v314 = vrot.slane %v312, 4
      %v315 = vshll.u32 %v178, 16
      %v317 = vrot.slane %v315, 5
      %v318 = vor.u32 %v314, %v317
      %v319 = vrot.slane %v318, 4
      %v321 = vshll.u32 %v179, 16
      %v323 = vrot.slane %v321, 5
      %v324 = vsel %vm238, %v319, %v323
      %v325 = vshrl.u32 %v179, 16
      %v327 = vrot.slane %v325, 4
      %v328 = vor.u32 %v327, %v323
      %v329 = vrot.slane %v328, 4
      %v331 = vshll.u32 %v223, 16
      %v333 = vrot.slane %v331, 5
      %v334 = vsel %vm238, %v329, %v333
      %v336 = vshrl.u32 %v180, 16
      %v338 = vrot.slane %v336, 4
      %v339 = vshll.u32 %v180, 16
      %v341 = vrot.slane %v339, 5
      %v342 = vor.u32 %v338, %v341
      %v343 = vrot.slane %v342, 4
      %v345 = vshll.u32 %v181, 16
      %v347 = vrot.slane %v345, 5
      %v348 = vsel %vm238, %v343, %v347
      %v349 = vshrl.u32 %v181, 16
      %v351 = vrot.slane %v349, 4
      %v352 = vor.u32 %v351, %v347
      %v353 = vrot.slane %v352, 4
      %v355 = vshll.u32 %v224, 16
      %v357 = vrot.slane %v355, 5
      %v358 = vsel %vm238, %v353, %v357
      %v360 = vshrl.u32 %v182, 16
      %v362 = vrot.slane %v360, 4
      %v363 = vshll.u32 %v182, 16
      %v365 = vrot.slane %v363, 5
      %v366 = vor.u32 %v362, %v365
      %v367 = vrot.slane %v366, 4
      %v369 = vshll.u32 %v183, 16
      %v371 = vrot.slane %v369, 5
      %v372 = vsel %vm238, %v367, %v371
      %v373 = vshrl.u32 %v183, 16
      %v375 = vrot.slane %v373, 4
      %v376 = vor.u32 %v375, %v371
      %v377 = vrot.slane %v376, 4
      %v379 = vshll.u32 %v225, 16
      %v381 = vrot.slane %v379, 5
      %v382 = vsel %vm238, %v377, %v381
      %v384 = vshrl.u32 %v184, 16
      %v386 = vrot.slane %v384, 4
      %v387 = vshll.u32 %v184, 16
      %v389 = vrot.slane %v387, 5
      %v390 = vor.u32 %v386, %v389
      %v391 = vrot.slane %v390, 4
      %v393 = vshll.u32 %v185, 16
      %v395 = vrot.slane %v393, 5
      %v396 = vsel %vm238, %v391, %v395
      %v397 = vshrl.u32 %v185, 16
      %v399 = vrot.slane %v397, 4
      %v400 = vor.u32 %v399, %v395
      %v401 = vrot.slane %v400, 4
      %v403 = vshll.u32 %v226, 16
      %v405 = vrot.slane %v403, 5
      %v406 = vsel %vm238, %v401, %v405
      %v408 = vshrl.u32 %v186, 16
      %v410 = vrot.slane %v408, 4
      %v411 = vshll.u32 %v186, 16
      %v413 = vrot.slane %v411, 5
      %v414 = vor.u32 %v410, %v413
      %v415 = vrot.slane %v414, 4
      %v417 = vshll.u32 %v187, 16
      %v419 = vrot.slane %v417, 5
      %v420 = vsel %vm238, %v415, %v419
      %v421 = vshrl.u32 %v187, 16
      %v423 = vrot.slane %v421, 4
      %v424 = vor.u32 %v423, %v419
      %v425 = vrot.slane %v424, 4
      %v427 = vshll.u32 %v227, 16
      %v429 = vrot.slane %v427, 5
      %v430 = vsel %vm238, %v425, %v429
      %v432 = vshrl.u32 %v188, 16
      %v434 = vrot.slane %v432, 4
      %v435 = vshll.u32 %v188, 16
      %v437 = vrot.slane %v435, 5
      %v438 = vor.u32 %v434, %v437
      %v439 = vrot.slane %v438, 4
      %v441 = vshll.u32 %v189, 16
      %v443 = vrot.slane %v441, 5
      %v444 = vsel %vm238, %v439, %v443
      %v445 = vshrl.u32 %v189, 16
      %v447 = vrot.slane %v445, 4
      %v448 = vor.u32 %v447, %v443
      %v449 = vrot.slane %v448, 4
      %v451 = vshll.u32 %v228, 16
      %v453 = vrot.slane %v451, 5
      %v454 = vsel %vm238, %v449, %v453
      %v456 = vshrl.u32 %v190, 16
      %v458 = vrot.slane %v456, 4
      %v459 = vshll.u32 %v190, 16
      %v461 = vrot.slane %v459, 5
      %v462 = vor.u32 %v458, %v461
      %v463 = vrot.slane %v462, 4
      %v465 = vshll.u32 %v191, 16
      %v467 = vrot.slane %v465, 5
      %v468 = vsel %vm238, %v463, %v467
      %v469 = vshrl.u32 %v191, 16
      %v471 = vrot.slane %v469, 4
      %v472 = vor.u32 %v471, %v467
      %v473 = vrot.slane %v472, 4
      %v475 = vshll.u32 %v229, 16
      %v477 = vrot.slane %v475, 5
      %v478 = vsel %vm238, %v473, %v477
      %v480 = vshrl.u32 %v192, 16
      %v482 = vrot.slane %v480, 4
      %v483 = vshll.u32 %v192, 16
      %v485 = vrot.slane %v483, 5
      %v486 = vor.u32 %v482, %v485
      %v487 = vrot.slane %v486, 4
      %v489 = vshll.u32 %v193, 16
      %v491 = vrot.slane %v489, 5
      %v492 = vsel %vm238, %v487, %v491
      %v493 = vshrl.u32 %v193, 16
      %v495 = vrot.slane %v493, 4
      %v496 = vor.u32 %v495, %v491
      %v497 = vrot.slane %v496, 4
      %v499 = vshll.u32 %v230, 16
      %v501 = vrot.slane %v499, 5
      %v502 = vsel %vm238, %v497, %v501
      %v504 = vshrl.u32 %v194, 16
      %v506 = vrot.slane %v504, 4
      %v507 = vshll.u32 %v194, 16
      %v509 = vrot.slane %v507, 5
      %v510 = vor.u32 %v506, %v509
      %v511 = vrot.slane %v510, 4
      %v513 = vshll.u32 %v195, 16
      %v515 = vrot.slane %v513, 5
      %v516 = vsel %vm238, %v511, %v515
      %v517 = vshrl.u32 %v195, 16
      %v519 = vrot.slane %v517, 4
      %v520 = vor.u32 %v519, %v515
      %v521 = vrot.slane %v520, 4
      %v523 = vshll.u32 %v231, 16
      %v525 = vrot.slane %v523, 5
      %v526 = vsel %vm238, %v521, %v525
      %v528 = vshrl.u32 %v196, 16
      %v530 = vrot.slane %v528, 4
      %v531 = vshll.u32 %v196, 16
      %v533 = vrot.slane %v531, 5
      %v534 = vor.u32 %v530, %v533
      %v535 = vrot.slane %v534, 4
      %v537 = vshll.u32 %v197, 16
      %v539 = vrot.slane %v537, 5
      %v540 = vsel %vm238, %v535, %v539
      %v541 = vshrl.u32 %v197, 16
      %v543 = vrot.slane %v541, 4
      %v544 = vor.u32 %v543, %v539
      %v545 = vrot.slane %v544, 4
      %v547 = vshll.u32 %v232, 16
      %v549 = vrot.slane %v547, 5
      %v550 = vsel %vm238, %v545, %v549
      %v552 = vshrl.u32 %v198, 16
      %v554 = vrot.slane %v552, 4
      %v555 = vshll.u32 %v198, 16
      %v557 = vrot.slane %v555, 5
      %v558 = vor.u32 %v554, %v557
      %v559 = vrot.slane %v558, 4
      %v561 = vshll.u32 %v199, 16
      %v563 = vrot.slane %v561, 5
      %v564 = vsel %vm238, %v559, %v563
      %v565 = vshrl.u32 %v199, 16
      %v567 = vrot.slane %v565, 4
      %v568 = vor.u32 %v567, %v563
      %v569 = vrot.slane %v568, 4
      %v571 = vshll.u32 %v233, 16
      %v573 = vrot.slane %v571, 5
      %v574 = vsel %vm238, %v569, %v573
      %v576 = vshrl.u32 %v200, 16
      %v578 = vrot.slane %v576, 4
      %v579 = vshll.u32 %v200, 16
      %v581 = vrot.slane %v579, 5
      %v582 = vor.u32 %v578, %v581
      %v583 = vrot.slane %v582, 4
      %v585 = vshll.u32 %v201, 16
      %v587 = vrot.slane %v585, 5
      %v588 = vsel %vm238, %v583, %v587
      %v589 = vshrl.u32 %v201, 16
      %v591 = vrot.slane %v589, 4
      %v592 = vor.u32 %v591, %v587
      %v593 = vrot.slane %v592, 4
      %v595 = vshll.u32 %v234, 16
      %v597 = vrot.slane %v595, 5
      %v598 = vsel %vm238, %v593, %v597
      %v600 = vshrl.u32 %v202, 16
      %v602 = vrot.slane %v600, 4
      %v603 = vshll.u32 %v202, 16
      %v605 = vrot.slane %v603, 5
      %v606 = vor.u32 %v602, %v605
      %v607 = vrot.slane %v606, 4
      %v609 = vshll.u32 %v203, 16
      %v611 = vrot.slane %v609, 5
      %v612 = vsel %vm238, %v607, %v611
      %v613 = vshrl.u32 %v203, 16
      %v615 = vrot.slane %v613, 4
      %v616 = vor.u32 %v615, %v611
      %v617 = vrot.slane %v616, 4
      %v619 = vshll.u32 %v235, 16
      %v621 = vrot.slane %v619, 5
      %v622 = vsel %vm238, %v617, %v621
      %v623 = vld [vmem:[%s1 + $0x40] sm:$0xf]
      %v624 = vld [vmem:[%s1 + $0x44] sm:$0xf]
      %v625 = vld [vmem:[%s1 + $0x48] sm:$0xf]
      %v626 = vld [vmem:[%s1 + $0x4c] sm:$0xf]
      %v627 = vld [vmem:[%s1 + $0x50] sm:$0xf]
      %v628 = vld [vmem:[%s1 + $0x54] sm:$0xf]
      %v629 = vld [vmem:[%s1 + $0x58] sm:$0xf]
      %v630 = vld [vmem:[%s1 + $0x5c] sm:$0xf]
      %v631 = vld [vmem:[%s1 + $0x60] sm:$0xf]
      %v632 = vld [vmem:[%s1 + $0x64] sm:$0xf]
      %v633 = vld [vmem:[%s1 + $0x68] sm:$0xf]
      %v634 = vld [vmem:[%s1 + $0x6c] sm:$0xf]
      %v635 = vld [vmem:[%s1 + $0x70] sm:$0xf]
      %v636 = vld [vmem:[%s1 + $0x74] sm:$0xf]
      %v637 = vld [vmem:[%s1 + $0x78] sm:$0xf]
      %v638 = vld [vmem:[%s1 + $0x7c] sm:$0xf]
      %v639 = vunpack.c.l.b16 %v252
      %v640 = vunpack.c.l.b16 %v262
      %v641 = vunpack.c.l.b16 %v276
      %v642 = vunpack.c.l.b16 %v286
      %v643 = vunpack.c.l.b16 %v300
      %v644 = vunpack.c.l.b16 %v310
      %v645 = vunpack.c.l.b16 %v324
      %v646 = vunpack.c.l.b16 %v334
      %v647 = vunpack.c.l.b16 %v348
      %v648 = vunpack.c.l.b16 %v358
      %v649 = vunpack.c.l.b16 %v372
      %v650 = vunpack.c.l.b16 %v382
      %v651 = vunpack.c.l.b16 %v396
      %v652 = vunpack.c.l.b16 %v406
      %v653 = vunpack.c.l.b16 %v420
      %v654 = vunpack.c.l.b16 %v430
      %v655 = vunpack.c.l.b16 %v444
      %v656 = vunpack.c.l.b16 %v454
      %v657 = vunpack.c.l.b16 %v468
      %v658 = vunpack.c.l.b16 %v478
      %v659 = vunpack.c.l.b16 %v492
      %v660 = vunpack.c.l.b16 %v502
      %v661 = vunpack.c.l.b16 %v516
      %v662 = vunpack.c.l.b16 %v526
      %v663 = vunpack.c.l.b16 %v540
      %v664 = vunpack.c.l.b16 %v550
      %v665 = vunpack.c.l.b16 %v564
      %v666 = vunpack.c.l.b16 %v574
      %v667 = vunpack.c.l.b16 %v588
      %v668 = vunpack.c.l.b16 %v598
      %v669 = vunpack.c.l.b16 %v612
      %v670 = vunpack.c.l.b16 %v622
      %v671 = vpack.c.b16 %v640, %v639
      %v672 = vpack.c.b16 %v642, %v641
      %v673 = vpack.c.b16 %v644, %v643
      %v674 = vpack.c.b16 %v646, %v645
      %v675 = vpack.c.b16 %v648, %v647
      %v676 = vpack.c.b16 %v650, %v649
      %v677 = vpack.c.b16 %v652, %v651
      %v678 = vpack.c.b16 %v654, %v653
      %v679 = vpack.c.b16 %v656, %v655
      %v680 = vpack.c.b16 %v658, %v657
      %v681 = vpack.c.b16 %v660, %v659
      %v682 = vpack.c.b16 %v662, %v661
      %v683 = vpack.c.b16 %v664, %v663
      %v684 = vpack.c.b16 %v666, %v665
      %v685 = vpack.c.b16 %v668, %v667
      %v686 = vpack.c.b16 %v670, %v669
      %v719 = vunpack.c.l.b16 %v623
      %v720 = vunpack.c.l.b16 %v624
      %v721 = vunpack.c.l.b16 %v625
      %v722 = vunpack.c.l.b16 %v626
      %v723 = vunpack.c.l.b16 %v627
      %v724 = vunpack.c.l.b16 %v628
      %v725 = vunpack.c.l.b16 %v629
      %v726 = vunpack.c.l.b16 %v630
      %v727 = vunpack.c.l.b16 %v631
      %v728 = vunpack.c.l.b16 %v632
      %v729 = vunpack.c.l.b16 %v633
      %v730 = vunpack.c.l.b16 %v634
      %v731 = vunpack.c.l.b16 %v635
      %v732 = vunpack.c.l.b16 %v636
      %v733 = vunpack.c.l.b16 %v637
      %v734 = vunpack.c.l.b16 %v638
      %v735 = vpack.c.b16 %v720, %v719
      %v736 = vpack.c.b16 %v722, %v721
      %v737 = vpack.c.b16 %v724, %v723
      %v738 = vpack.c.b16 %v726, %v725
      %v739 = vpack.c.b16 %v728, %v727
      %v740 = vpack.c.b16 %v730, %v729
      %v741 = vpack.c.b16 %v732, %v731
      %v742 = vpack.c.b16 %v734, %v733
      %751 = vmatprep.subr.bf16.mxu0 0
      %752 = vmatpush1.bf16.msra.mxu0 %v742
      %753 = vmatprep.subr.bf16.mxu0 0
      %754 = vmatpush1.bf16.msra.mxu0 %v741
      %755 = vmatprep.subr.bf16.mxu0 0
      %756 = vmatpush1.bf16.msra.mxu0 %v740
      %757 = vmatprep.subr.bf16.mxu0 0
      %758 = vmatpush1.bf16.msra.mxu0 %v739
      %759 = vmatprep.subr.bf16.mxu0 0
      %760 = vmatpush1.bf16.msra.mxu0 %v738
      %761 = vmatprep.subr.bf16.mxu0 0
      %762 = vmatpush1.bf16.msra.mxu0 %v737
      %763 = vmatprep.subr.bf16.mxu0 0
      %764 = vmatpush1.bf16.msra.mxu0 %v736
      %765 = vmatprep.subr.bf16.mxu0 0
      %766 = vmatpush1.bf16.msra.mxu0 %v735
      %767 = vmatprep.subr.bf16.mxu0 0
      %768 = vmatpush2.bf16.msra.mxu0 0
      %769 = vmatprep.subr.bf16.mxu0 0
      %770 = vmatpush2.bf16.msra.mxu0 0
      %771 = vmatprep.subr.bf16.mxu0 0
      %772 = vmatpush2.bf16.msra.mxu0 0
      %773 = vmatprep.subr.bf16.mxu0 0
      %774 = vmatpush2.bf16.msra.mxu0 0
      %775 = vmatprep.subr.bf16.mxu0 0
      %776 = vmatpush2.bf16.msra.mxu0 0
      %777 = vmatprep.subr.bf16.mxu0 0
      %778 = vmatpush2.bf16.msra.mxu0 0
      %779 = vmatprep.subr.bf16.mxu0 0
      %780 = vmatpush2.bf16.msra.mxu0 0
      %781 = vmatprep.subr.bf16.mxu0 0
      %782 = vmatpush2.bf16.msra.mxu0 0
      %783 = vmatprep.mubr.bf16.mxu0 0
      %784 = vmatmul.mubr.bf16.gmra.mxu0 %v671
      %v785 = vpop.f32.mrf.mxu0
      %v786 = vadd.f32 0.0, %v785
      %v787 = vpop.f32.mrf.mxu0
      %v788 = vpop.f32.mrf.mxu0
      %v789 = vadd.f32 0.0, %v788
      %v790 = vpop.f32.mrf.mxu0
      %791 = vmatprep.mubr.bf16.mxu0 0
      %792 = vmatmul.mubr.bf16.gmra.mxu0 %v672
      %v793 = vpop.f32.mrf.mxu0
      %v794 = vadd.f32 0.0, %v793
      %v795 = vpop.f32.mrf.mxu0
      %v796 = vpop.f32.mrf.mxu0
      %v797 = vadd.f32 0.0, %v796
      %v798 = vpop.f32.mrf.mxu0
      %799 = vmatprep.mubr.bf16.mxu0 0
      %800 = vmatmul.mubr.bf16.gmra.mxu0 %v673
      %v801 = vpop.f32.mrf.mxu0
      %v802 = vadd.f32 0.0, %v801
      %v803 = vpop.f32.mrf.mxu0
      %v804 = vpop.f32.mrf.mxu0
      %v805 = vadd.f32 0.0, %v804
      %v806 = vpop.f32.mrf.mxu0
      %807 = vmatprep.mubr.bf16.mxu0 0
      %808 = vmatmul.mubr.bf16.gmra.mxu0 %v674
      %v809 = vpop.f32.mrf.mxu0
      %v810 = vadd.f32 0.0, %v809
      %v811 = vpop.f32.mrf.mxu0
      %v812 = vpop.f32.mrf.mxu0
      %v813 = vadd.f32 0.0, %v812
      %v814 = vpop.f32.mrf.mxu0
      %815 = vmatprep.mubr.bf16.mxu0 0
      %816 = vmatmul.mubr.bf16.gmra.mxu0 %v675
      %v817 = vpop.f32.mrf.mxu0
      %v818 = vadd.f32 0.0, %v817
      %v819 = vpop.f32.mrf.mxu0
      %v820 = vpop.f32.mrf.mxu0
      %v821 = vadd.f32 0.0, %v820
      %v822 = vpop.f32.mrf.mxu0
      %823 = vmatprep.mubr.bf16.mxu0 0
      %824 = vmatmul.mubr.bf16.gmra.mxu0 %v676
      %v825 = vpop.f32.mrf.mxu0
      %v826 = vadd.f32 0.0, %v825
      %v827 = vpop.f32.mrf.mxu0
      %v828 = vpop.f32.mrf.mxu0
      %v829 = vadd.f32 0.0, %v828
      %v830 = vpop.f32.mrf.mxu0
      %831 = vmatprep.mubr.bf16.mxu0 0
      %832 = vmatmul.mubr.bf16.gmra.mxu0 %v677
      %v833 = vpop.f32.mrf.mxu0
      %v834 = vadd.f32 0.0, %v833
      %v835 = vpop.f32.mrf.mxu0
      %v836 = vpop.f32.mrf.mxu0
      %v837 = vadd.f32 0.0, %v836
      %v838 = vpop.f32.mrf.mxu0
      %839 = vmatprep.mubr.bf16.mxu0 0
      %840 = vmatmul.mubr.bf16.gmra.mxu0 %v678
      %v841 = vpop.f32.mrf.mxu0
      %v842 = vadd.f32 0.0, %v841
      %v843 = vpop.f32.mrf.mxu0
      %v844 = vpop.f32.mrf.mxu0
      %v845 = vadd.f32 0.0, %v844
      %v846 = vpop.f32.mrf.mxu0
      %847 = vmatprep.mubr.bf16.mxu0 0
      %848 = vmatmul.mubr.bf16.gmra.mxu0 %v679
      %v849 = vpop.f32.mrf.mxu0
      %v850 = vadd.f32 0.0, %v849
      %v851 = vpop.f32.mrf.mxu0
      %v852 = vpop.f32.mrf.mxu0
      %v853 = vadd.f32 0.0, %v852
      %v854 = vpop.f32.mrf.mxu0
      %855 = vmatprep.mubr.bf16.mxu0 0
      %856 = vmatmul.mubr.bf16.gmra.mxu0 %v680
      %v857 = vpop.f32.mrf.mxu0
      %v858 = vadd.f32 0.0, %v857
      %v859 = vpop.f32.mrf.mxu0
      %v860 = vpop.f32.mrf.mxu0
      %v861 = vadd.f32 0.0, %v860
      %v862 = vpop.f32.mrf.mxu0
      %863 = vmatprep.mubr.bf16.mxu0 0
      %864 = vmatmul.mubr.bf16.gmra.mxu0 %v681
      %v865 = vpop.f32.mrf.mxu0
      %v866 = vadd.f32 0.0, %v865
      %v867 = vpop.f32.mrf.mxu0
      %v868 = vpop.f32.mrf.mxu0
      %v869 = vadd.f32 0.0, %v868
      %v870 = vpop.f32.mrf.mxu0
      %871 = vmatprep.mubr.bf16.mxu0 0
      %872 = vmatmul.mubr.bf16.gmra.mxu0 %v682
      %v873 = vpop.f32.mrf.mxu0
      %v874 = vadd.f32 0.0, %v873
      %v875 = vpop.f32.mrf.mxu0
      %v876 = vpop.f32.mrf.mxu0
      %v877 = vadd.f32 0.0, %v876
      %v878 = vpop.f32.mrf.mxu0
      %879 = vmatprep.mubr.bf16.mxu0 0
      %880 = vmatmul.mubr.bf16.gmra.mxu0 %v683
      %v881 = vpop.f32.mrf.mxu0
      %v882 = vadd.f32 0.0, %v881
      %v883 = vpop.f32.mrf.mxu0
      %v884 = vpop.f32.mrf.mxu0
      %v885 = vadd.f32 0.0, %v884
      %v886 = vpop.f32.mrf.mxu0
      %887 = vmatprep.mubr.bf16.mxu0 0
      %888 = vmatmul.mubr.bf16.gmra.mxu0 %v684
      %v889 = vpop.f32.mrf.mxu0
      %v890 = vadd.f32 0.0, %v889
      %v891 = vpop.f32.mrf.mxu0
      %v892 = vpop.f32.mrf.mxu0
      %v893 = vadd.f32 0.0, %v892
      %v894 = vpop.f32.mrf.mxu0
      %895 = vmatprep.mubr.bf16.mxu0 0
      %896 = vmatmul.mubr.bf16.gmra.mxu0 %v685
      %v897 = vpop.f32.mrf.mxu0
      %v898 = vadd.f32 0.0, %v897
      %v899 = vpop.f32.mrf.mxu0
      %v900 = vpop.f32.mrf.mxu0
      %v901 = vadd.f32 0.0, %v900
      %v902 = vpop.f32.mrf.mxu0
      %903 = vmatprep.mubr.bf16.mxu0 0
      %904 = vmatmul.mubr.bf16.gmra.mxu0 %v686
      %v905 = vpop.f32.mrf.mxu0
      %v906 = vadd.f32 0.0, %v905
      %v907 = vpop.f32.mrf.mxu0
      %v908 = vpop.f32.mrf.mxu0
      %v909 = vadd.f32 0.0, %v908
      %v910 = vpop.f32.mrf.mxu0
      %911 = vdwg.mxu0
      %v944 = vunpack.c.l.b16 %v172
      %v945 = vunpack.c.l.b16 %v173
      %v946 = vunpack.c.l.b16 %v174
      %v947 = vunpack.c.l.b16 %v175
      %v948 = vunpack.c.l.b16 %v176
      %v949 = vunpack.c.l.b16 %v177
      %v950 = vunpack.c.l.b16 %v178
      %v951 = vunpack.c.l.b16 %v179
      %v952 = vunpack.c.l.b16 %v180
      %v953 = vunpack.c.l.b16 %v181
      %v954 = vunpack.c.l.b16 %v182
      %v955 = vunpack.c.l.b16 %v183
      %v956 = vunpack.c.l.b16 %v184
      %v957 = vunpack.c.l.b16 %v185
      %v958 = vunpack.c.l.b16 %v186
      %v959 = vunpack.c.l.b16 %v187
      %v960 = vunpack.c.l.b16 %v188
      %v961 = vunpack.c.l.b16 %v189
      %v962 = vunpack.c.l.b16 %v190
      %v963 = vunpack.c.l.b16 %v191
      %v964 = vunpack.c.l.b16 %v192
      %v965 = vunpack.c.l.b16 %v193
      %v966 = vunpack.c.l.b16 %v194
      %v967 = vunpack.c.l.b16 %v195
      %v968 = vunpack.c.l.b16 %v196
      %v969 = vunpack.c.l.b16 %v197
      %v970 = vunpack.c.l.b16 %v198
      %v971 = vunpack.c.l.b16 %v199
      %v972 = vunpack.c.l.b16 %v200
      %v973 = vunpack.c.l.b16 %v201
      %v974 = vunpack.c.l.b16 %v202
      %v975 = vunpack.c.l.b16 %v203
      %v976 = vpack.c.b16 %v945, %v944
      %v977 = vpack.c.b16 %v947, %v946
      %v978 = vpack.c.b16 %v949, %v948
      %v979 = vpack.c.b16 %v951, %v950
      %v980 = vpack.c.b16 %v953, %v952
      %v981 = vpack.c.b16 %v955, %v954
      %v982 = vpack.c.b16 %v957, %v956
      %v983 = vpack.c.b16 %v959, %v958
      %v984 = vpack.c.b16 %v961, %v960
      %v985 = vpack.c.b16 %v963, %v962
      %v986 = vpack.c.b16 %v965, %v964
      %v987 = vpack.c.b16 %v967, %v966
      %v988 = vpack.c.b16 %v969, %v968
      %v989 = vpack.c.b16 %v971, %v970
      %v990 = vpack.c.b16 %v973, %v972
      %v991 = vpack.c.b16 %v975, %v974
      %v1024 = vunpack.c.l.b16 %v204
      %v1025 = vunpack.c.l.b16 %v205
      %v1026 = vunpack.c.l.b16 %v206
      %v1027 = vunpack.c.l.b16 %v207
      %v1028 = vunpack.c.l.b16 %v208
      %v1029 = vunpack.c.l.b16 %v209
      %v1030 = vunpack.c.l.b16 %v210
      %v1031 = vunpack.c.l.b16 %v211
      %v1032 = vunpack.c.l.b16 %v212
      %v1033 = vunpack.c.l.b16 %v213
      %v1034 = vunpack.c.l.b16 %v214
      %v1035 = vunpack.c.l.b16 %v215
      %v1036 = vunpack.c.l.b16 %v216
      %v1037 = vunpack.c.l.b16 %v217
      %v1038 = vunpack.c.l.b16 %v218
      %v1039 = vunpack.c.l.b16 %v219
      %v1040 = vpack.c.b16 %v1025, %v1024
      %v1041 = vpack.c.b16 %v1027, %v1026
      %v1042 = vpack.c.b16 %v1029, %v1028
      %v1043 = vpack.c.b16 %v1031, %v1030
      %v1044 = vpack.c.b16 %v1033, %v1032
      %v1045 = vpack.c.b16 %v1035, %v1034
      %v1046 = vpack.c.b16 %v1037, %v1036
      %v1047 = vpack.c.b16 %v1039, %v1038
      %1056 = vmatprep.subr.bf16.mxu0 0
      %1057 = vmatpush1.bf16.msra.mxu0 %v1047
      %1058 = vmatprep.subr.bf16.mxu0 0
      %1059 = vmatpush1.bf16.msra.mxu0 %v1046
      %1060 = vmatprep.subr.bf16.mxu0 0
      %1061 = vmatpush1.bf16.msra.mxu0 %v1045
      %1062 = vmatprep.subr.bf16.mxu0 0
      %1063 = vmatpush1.bf16.msra.mxu0 %v1044
      %1064 = vmatprep.subr.bf16.mxu0 0
      %1065 = vmatpush1.bf16.msra.mxu0 %v1043
      %1066 = vmatprep.subr.bf16.mxu0 0
      %1067 = vmatpush1.bf16.msra.mxu0 %v1042
      %1068 = vmatprep.subr.bf16.mxu0 0
      %1069 = vmatpush1.bf16.msra.mxu0 %v1041
      %1070 = vmatprep.subr.bf16.mxu0 0
      %1071 = vmatpush1.bf16.msra.mxu0 %v1040
      %1072 = vmatprep.subr.bf16.mxu0 0
      %1073 = vmatpush2.bf16.msra.mxu0 0
      %1074 = vmatprep.subr.bf16.mxu0 0
      %1075 = vmatpush2.bf16.msra.mxu0 0
      %1076 = vmatprep.subr.bf16.mxu0 0
      %1077 = vmatpush2.bf16.msra.mxu0 0
      %1078 = vmatprep.subr.bf16.mxu0 0
      %1079 = vmatpush2.bf16.msra.mxu0 0
      %1080 = vmatprep.subr.bf16.mxu0 0
      %1081 = vmatpush2.bf16.msra.mxu0 0
      %1082 = vmatprep.subr.bf16.mxu0 0
      %1083 = vmatpush2.bf16.msra.mxu0 0
      %1084 = vmatprep.subr.bf16.mxu0 0
      %1085 = vmatpush2.bf16.msra.mxu0 0
      %1086 = vmatprep.subr.bf16.mxu0 0
      %1087 = vmatpush2.bf16.msra.mxu0 0
      %1088 = vmatprep.mubr.bf16.mxu0 0
      %1089 = vmatmul.mubr.bf16.gmra.mxu0 %v976
      %v1090 = vpop.f32.mrf.mxu0
      %v1091 = vadd.f32 %v786, %v1090
      %v1092 = vpop.f32.mrf.mxu0
      %v1093 = vpop.f32.mrf.mxu0
      %v1094 = vadd.f32 %v789, %v1093
      %v1095 = vpop.f32.mrf.mxu0
      %1096 = vmatprep.mubr.bf16.mxu0 0
      %1097 = vmatmul.mubr.bf16.gmra.mxu0 %v977
      %v1098 = vpop.f32.mrf.mxu0
      %v1099 = vadd.f32 %v794, %v1098
      %v1100 = vpop.f32.mrf.mxu0
      %v1101 = vpop.f32.mrf.mxu0
      %v1102 = vadd.f32 %v797, %v1101
      %v1103 = vpop.f32.mrf.mxu0
      %1104 = vmatprep.mubr.bf16.mxu0 0
      %1105 = vmatmul.mubr.bf16.gmra.mxu0 %v978
      %v1106 = vpop.f32.mrf.mxu0
      %v1107 = vadd.f32 %v802, %v1106
      %v1108 = vpop.f32.mrf.mxu0
      %v1109 = vpop.f32.mrf.mxu0
      %v1110 = vadd.f32 %v805, %v1109
      %v1111 = vpop.f32.mrf.mxu0
      %1112 = vmatprep.mubr.bf16.mxu0 0
      %1113 = vmatmul.mubr.bf16.gmra.mxu0 %v979
      %v1114 = vpop.f32.mrf.mxu0
      %v1115 = vadd.f32 %v810, %v1114
      %v1116 = vpop.f32.mrf.mxu0
      %v1117 = vpop.f32.mrf.mxu0
      %v1118 = vadd.f32 %v813, %v1117
      %v1119 = vpop.f32.mrf.mxu0
      %1120 = vmatprep.mubr.bf16.mxu0 0
      %1121 = vmatmul.mubr.bf16.gmra.mxu0 %v980
      %v1122 = vpop.f32.mrf.mxu0
      %v1123 = vadd.f32 %v818, %v1122
      %v1124 = vpop.f32.mrf.mxu0
      %v1125 = vpop.f32.mrf.mxu0
      %v1126 = vadd.f32 %v821, %v1125
      %v1127 = vpop.f32.mrf.mxu0
      %1128 = vmatprep.mubr.bf16.mxu0 0
      %1129 = vmatmul.mubr.bf16.gmra.mxu0 %v981
      %v1130 = vpop.f32.mrf.mxu0
      %v1131 = vadd.f32 %v826, %v1130
      %v1132 = vpop.f32.mrf.mxu0
      %v1133 = vpop.f32.mrf.mxu0
      %v1134 = vadd.f32 %v829, %v1133
      %v1135 = vpop.f32.mrf.mxu0
      %1136 = vmatprep.mubr.bf16.mxu0 0
      %1137 = vmatmul.mubr.bf16.gmra.mxu0 %v982
      %v1138 = vpop.f32.mrf.mxu0
      %v1139 = vadd.f32 %v834, %v1138
      %v1140 = vpop.f32.mrf.mxu0
      %v1141 = vpop.f32.mrf.mxu0
      %v1142 = vadd.f32 %v837, %v1141
      %v1143 = vpop.f32.mrf.mxu0
      %1144 = vmatprep.mubr.bf16.mxu0 0
      %1145 = vmatmul.mubr.bf16.gmra.mxu0 %v983
      %v1146 = vpop.f32.mrf.mxu0
      %v1147 = vadd.f32 %v842, %v1146
      %v1148 = vpop.f32.mrf.mxu0
      %v1149 = vpop.f32.mrf.mxu0
      %v1150 = vadd.f32 %v845, %v1149
      %v1151 = vpop.f32.mrf.mxu0
      %1152 = vmatprep.mubr.bf16.mxu0 0
      %1153 = vmatmul.mubr.bf16.gmra.mxu0 %v984
      %v1154 = vpop.f32.mrf.mxu0
      %v1155 = vadd.f32 %v850, %v1154
      %v1156 = vpop.f32.mrf.mxu0
      %v1157 = vpop.f32.mrf.mxu0
      %v1158 = vadd.f32 %v853, %v1157
      %v1159 = vpop.f32.mrf.mxu0
      %1160 = vmatprep.mubr.bf16.mxu0 0
      %1161 = vmatmul.mubr.bf16.gmra.mxu0 %v985
      %v1162 = vpop.f32.mrf.mxu0
      %v1163 = vadd.f32 %v858, %v1162
      %v1164 = vpop.f32.mrf.mxu0
      %v1165 = vpop.f32.mrf.mxu0
      %v1166 = vadd.f32 %v861, %v1165
      %v1167 = vpop.f32.mrf.mxu0
      %1168 = vmatprep.mubr.bf16.mxu0 0
      %1169 = vmatmul.mubr.bf16.gmra.mxu0 %v986
      %v1170 = vpop.f32.mrf.mxu0
      %v1171 = vadd.f32 %v866, %v1170
      %v1172 = vpop.f32.mrf.mxu0
      %v1173 = vpop.f32.mrf.mxu0
      %v1174 = vadd.f32 %v869, %v1173
      %v1175 = vpop.f32.mrf.mxu0
      %1176 = vmatprep.mubr.bf16.mxu0 0
      %1177 = vmatmul.mubr.bf16.gmra.mxu0 %v987
      %v1178 = vpop.f32.mrf.mxu0
      %v1179 = vadd.f32 %v874, %v1178
      %v1180 = vpop.f32.mrf.mxu0
      %v1181 = vpop.f32.mrf.mxu0
      %v1182 = vadd.f32 %v877, %v1181
      %v1183 = vpop.f32.mrf.mxu0
      %1184 = vmatprep.mubr.bf16.mxu0 0
      %1185 = vmatmul.mubr.bf16.gmra.mxu0 %v988
      %v1186 = vpop.f32.mrf.mxu0
      %v1187 = vadd.f32 %v882, %v1186
      %v1188 = vpop.f32.mrf.mxu0
      %v1189 = vpop.f32.mrf.mxu0
      %v1190 = vadd.f32 %v885, %v1189
      %v1191 = vpop.f32.mrf.mxu0
      %1192 = vmatprep.mubr.bf16.mxu0 0
      %1193 = vmatmul.mubr.bf16.gmra.mxu0 %v989
      %v1194 = vpop.f32.mrf.mxu0
      %v1195 = vadd.f32 %v890, %v1194
      %v1196 = vpop.f32.mrf.mxu0
      %v1197 = vpop.f32.mrf.mxu0
      %v1198 = vadd.f32 %v893, %v1197
      %v1199 = vpop.f32.mrf.mxu0
      %1200 = vmatprep.mubr.bf16.mxu0 0
      %1201 = vmatmul.mubr.bf16.gmra.mxu0 %v990
      %v1202 = vpop.f32.mrf.mxu0
      %v1203 = vadd.f32 %v898, %v1202
      %v1204 = vpop.f32.mrf.mxu0
      %v1205 = vpop.f32.mrf.mxu0
      %v1206 = vadd.f32 %v901, %v1205
      %v1207 = vpop.f32.mrf.mxu0
      %1208 = vmatprep.mubr.bf16.mxu0 0
      %1209 = vmatmul.mubr.bf16.gmra.mxu0 %v991
      %v1210 = vpop.f32.mrf.mxu0
      %v1211 = vadd.f32 %v906, %v1210
      %v1212 = vpop.f32.mrf.mxu0
      %v1213 = vpop.f32.mrf.mxu0
      %v1214 = vadd.f32 %v909, %v1213
      %v1215 = vpop.f32.mrf.mxu0
      %1216 = vdwg.mxu0
      %v1217 = vld [vmem:[%s165] sm:$0xe]
      %v1218 = vld [vmem:[%s165 + $0xc] sm:$0xe]
      %v1219 = vld [vmem:[%s165 + $0x18] sm:$0xe]
      %v1220 = vld [vmem:[%s165 + $0x24] sm:$0xe]
      %v1221 = vld [vmem:[%s165 + $0x30] sm:$0xe]
      %v1222 = vld [vmem:[%s165 + $0x3c] sm:$0xe]
      %v1223 = vld [vmem:[%s165 + $0x48] sm:$0xe]
      %v1224 = vld [vmem:[%s165 + $0x54] sm:$0xe]
      %v1225 = vld [vmem:[%s165 + $0x60] sm:$0xe]
      %v1226 = vld [vmem:[%s165 + $0x6c] sm:$0xe]
      %v1227 = vld [vmem:[%s165 + $0x78] sm:$0xe]
      %v1228 = vld [vmem:[%s165 + $0x84] sm:$0xe]
      %v1229 = vld [vmem:[%s165 + $0x90] sm:$0xe]
      %v1230 = vld [vmem:[%s165 + $0x9c] sm:$0xe]
      %v1231 = vld [vmem:[%s165 + $0xa8] sm:$0xe]
      %v1232 = vld [vmem:[%s165 + $0xb4] sm:$0xe]
      %vm1265 = vcmask 1042432
      %vm1266 = vcmask 1046532
      %vm1267 = vmor %vm1265, %vm1266
      %v1268 = vrot.slane %v1217, 5
      %v1269 = vrot.slane %v1268, 4
      %v1270 = vrot.slane %v173, 5
      %v1271 = vsel %vm1267, %v1269, %v1270
      %v1272 = vrot.slane %v1270, 4
      %v1273 = vrot.slane %v220, 5
      %v1274 = vsel %vm1267, %v1272, %v1273
      %v1275 = vrot.slane %v1218, 5
      %v1276 = vrot.slane %v1275, 4
      %v1277 = vrot.slane %v175, 5
      %v1278 = vsel %vm1267, %v1276, %v1277
      %v1279 = vrot.slane %v1277, 4
      %v1280 = vrot.slane %v221, 5
      %v1281 = vsel %vm1267, %v1279, %v1280
      %v1282 = vrot.slane %v1219, 5
      %v1283 = vrot.slane %v1282, 4
      %v1284 = vrot.slane %v177, 5
      %v1285 = vsel %vm1267, %v1283, %v1284
      %v1286 = vrot.slane %v1284, 4
      %v1287 = vrot.slane %v222, 5
      %v1288 = vsel %vm1267, %v1286, %v1287
      %v1289 = vrot.slane %v1220, 5
      %v1290 = vrot.slane %v1289, 4
      %v1291 = vrot.slane %v179, 5
      %v1292 = vsel %vm1267, %v1290, %v1291
      %v1293 = vrot.slane %v1291, 4
      %v1294 = vrot.slane %v223, 5
      %v1295 = vsel %vm1267, %v1293, %v1294
      %v1296 = vrot.slane %v1221, 5
      %v1297 = vrot.slane %v1296, 4
      %v1298 = vrot.slane %v181, 5
      %v1299 = vsel %vm1267, %v1297, %v1298
      %v1300 = vrot.slane %v1298, 4
      %v1301 = vrot.slane %v224, 5
      %v1302 = vsel %vm1267, %v1300, %v1301
      %v1303 = vrot.slane %v1222, 5
      %v1304 = vrot.slane %v1303, 4
      %v1305 = vrot.slane %v183, 5
      %v1306 = vsel %vm1267, %v1304, %v1305
      %v1307 = vrot.slane %v1305, 4
      %v1308 = vrot.slane %v225, 5
      %v1309 = vsel %vm1267, %v1307, %v1308
      %v1310 = vrot.slane %v1223, 5
      %v1311 = vrot.slane %v1310, 4
      %v1312 = vrot.slane %v185, 5
      %v1313 = vsel %vm1267, %v1311, %v1312
      %v1314 = vrot.slane %v1312, 4
      %v1315 = vrot.slane %v226, 5
      %v1316 = vsel %vm1267, %v1314, %v1315
      %v1317 = vrot.slane %v1224, 5
      %v1318 = vrot.slane %v1317, 4
      %v1319 = vrot.slane %v187, 5
      %v1320 = vsel %vm1267, %v1318, %v1319
      %v1321 = vrot.slane %v1319, 4
      %v1322 = vrot.slane %v227, 5
      %v1323 = vsel %vm1267, %v1321, %v1322
      %v1324 = vrot.slane %v1225, 5
      %v1325 = vrot.slane %v1324, 4
      %v1326 = vrot.slane %v189, 5
      %v1327 = vsel %vm1267, %v1325, %v1326
      %v1328 = vrot.slane %v1326, 4
      %v1329 = vrot.slane %v228, 5
      %v1330 = vsel %vm1267, %v1328, %v1329
      %v1331 = vrot.slane %v1226, 5
      %v1332 = vrot.slane %v1331, 4
      %v1333 = vrot.slane %v191, 5
      %v1334 = vsel %vm1267, %v1332, %v1333
      %v1335 = vrot.slane %v1333, 4
      %v1336 = vrot.slane %v229, 5
      %v1337 = vsel %vm1267, %v1335, %v1336
      %v1338 = vrot.slane %v1227, 5
      %v1339 = vrot.slane %v1338, 4
      %v1340 = vrot.slane %v193, 5
      %v1341 = vsel %vm1267, %v1339, %v1340
      %v1342 = vrot.slane %v1340, 4
      %v1343 = vrot.slane %v230, 5
      %v1344 = vsel %vm1267, %v1342, %v1343
      %v1345 = vrot.slane %v1228, 5
      %v1346 = vrot.slane %v1345, 4
      %v1347 = vrot.slane %v195, 5
      %v1348 = vsel %vm1267, %v1346, %v1347
      %v1349 = vrot.slane %v1347, 4
      %v1350 = vrot.slane %v231, 5
      %v1351 = vsel %vm1267, %v1349, %v1350
      %v1352 = vrot.slane %v1229, 5
      %v1353 = vrot.slane %v1352, 4
      %v1354 = vrot.slane %v197, 5
      %v1355 = vsel %vm1267, %v1353, %v1354
      %v1356 = vrot.slane %v1354, 4
      %v1357 = vrot.slane %v232, 5
      %v1358 = vsel %vm1267, %v1356, %v1357
      %v1359 = vrot.slane %v1230, 5
      %v1360 = vrot.slane %v1359, 4
      %v1361 = vrot.slane %v199, 5
      %v1362 = vsel %vm1267, %v1360, %v1361
      %v1363 = vrot.slane %v1361, 4
      %v1364 = vrot.slane %v233, 5
      %v1365 = vsel %vm1267, %v1363, %v1364
      %v1366 = vrot.slane %v1231, 5
      %v1367 = vrot.slane %v1366, 4
      %v1368 = vrot.slane %v201, 5
      %v1369 = vsel %vm1267, %v1367, %v1368
      %v1370 = vrot.slane %v1368, 4
      %v1371 = vrot.slane %v234, 5
      %v1372 = vsel %vm1267, %v1370, %v1371
      %v1373 = vrot.slane %v1232, 5
      %v1374 = vrot.slane %v1373, 4
      %v1375 = vrot.slane %v203, 5
      %v1376 = vsel %vm1267, %v1374, %v1375
      %v1377 = vrot.slane %v1375, 4
      %v1378 = vrot.slane %v235, 5
      %v1379 = vsel %vm1267, %v1377, %v1378
      %v1380 = vld [vmem:[%s1 + $0x80] sm:$0xf]
      %v1381 = vld [vmem:[%s1 + $0x84] sm:$0xf]
      %v1382 = vld [vmem:[%s1 + $0x88] sm:$0xf]
      %v1383 = vld [vmem:[%s1 + $0x8c] sm:$0xf]
      %v1384 = vld [vmem:[%s1 + $0x90] sm:$0xf]
      %v1385 = vld [vmem:[%s1 + $0x94] sm:$0xf]
      %v1386 = vld [vmem:[%s1 + $0x98] sm:$0xf]
      %v1387 = vld [vmem:[%s1 + $0x9c] sm:$0xf]
      %v1388 = vld [vmem:[%s1 + $0xa0] sm:$0xf]
      %v1389 = vld [vmem:[%s1 + $0xa4] sm:$0xf]
      %v1390 = vld [vmem:[%s1 + $0xa8] sm:$0xf]
      %v1391 = vld [vmem:[%s1 + $0xac] sm:$0xf]
      %v1392 = vld [vmem:[%s1 + $0xb0] sm:$0xf]
      %v1393 = vld [vmem:[%s1 + $0xb4] sm:$0xf]
      %v1394 = vld [vmem:[%s1 + $0xb8] sm:$0xf]
      %v1395 = vld [vmem:[%s1 + $0xbc] sm:$0xf]
      %v1396 = vunpack.c.l.b16 %v1271
      %v1397 = vunpack.c.l.b16 %v1274
      %v1398 = vunpack.c.l.b16 %v1278
      %v1399 = vunpack.c.l.b16 %v1281
      %v1400 = vunpack.c.l.b16 %v1285
      %v1401 = vunpack.c.l.b16 %v1288
      %v1402 = vunpack.c.l.b16 %v1292
      %v1403 = vunpack.c.l.b16 %v1295
      %v1404 = vunpack.c.l.b16 %v1299
      %v1405 = vunpack.c.l.b16 %v1302
      %v1406 = vunpack.c.l.b16 %v1306
      %v1407 = vunpack.c.l.b16 %v1309
      %v1408 = vunpack.c.l.b16 %v1313
      %v1409 = vunpack.c.l.b16 %v1316
      %v1410 = vunpack.c.l.b16 %v1320
      %v1411 = vunpack.c.l.b16 %v1323
      %v1412 = vunpack.c.l.b16 %v1327
      %v1413 = vunpack.c.l.b16 %v1330
      %v1414 = vunpack.c.l.b16 %v1334
      %v1415 = vunpack.c.l.b16 %v1337
      %v1416 = vunpack.c.l.b16 %v1341
      %v1417 = vunpack.c.l.b16 %v1344
      %v1418 = vunpack.c.l.b16 %v1348
      %v1419 = vunpack.c.l.b16 %v1351
      %v1420 = vunpack.c.l.b16 %v1355
      %v1421 = vunpack.c.l.b16 %v1358
      %v1422 = vunpack.c.l.b16 %v1362
      %v1423 = vunpack.c.l.b16 %v1365
      %v1424 = vunpack.c.l.b16 %v1369
      %v1425 = vunpack.c.l.b16 %v1372
      %v1426 = vunpack.c.l.b16 %v1376
      %v1427 = vunpack.c.l.b16 %v1379
      %v1428 = vpack.c.b16 %v1397, %v1396
      %v1429 = vpack.c.b16 %v1399, %v1398
      %v1430 = vpack.c.b16 %v1401, %v1400
      %v1431 = vpack.c.b16 %v1403, %v1402
      %v1432 = vpack.c.b16 %v1405, %v1404
      %v1433 = vpack.c.b16 %v1407, %v1406
      %v1434 = vpack.c.b16 %v1409, %v1408
      %v1435 = vpack.c.b16 %v1411, %v1410
      %v1436 = vpack.c.b16 %v1413, %v1412
      %v1437 = vpack.c.b16 %v1415, %v1414
      %v1438 = vpack.c.b16 %v1417, %v1416
      %v1439 = vpack.c.b16 %v1419, %v1418
      %v1440 = vpack.c.b16 %v1421, %v1420
      %v1441 = vpack.c.b16 %v1423, %v1422
      %v1442 = vpack.c.b16 %v1425, %v1424
      %v1443 = vpack.c.b16 %v1427, %v1426
      %v1476 = vunpack.c.l.b16 %v1380
      %v1477 = vunpack.c.l.b16 %v1381
      %v1478 = vunpack.c.l.b16 %v1382
      %v1479 = vunpack.c.l.b16 %v1383
      %v1480 = vunpack.c.l.b16 %v1384
      %v1481 = vunpack.c.l.b16 %v1385
      %v1482 = vunpack.c.l.b16 %v1386
      %v1483 = vunpack.c.l.b16 %v1387
      %v1484 = vunpack.c.l.b16 %v1388
      %v1485 = vunpack.c.l.b16 %v1389
      %v1486 = vunpack.c.l.b16 %v1390
      %v1487 = vunpack.c.l.b16 %v1391
      %v1488 = vunpack.c.l.b16 %v1392
      %v1489 = vunpack.c.l.b16 %v1393
      %v1490 = vunpack.c.l.b16 %v1394
      %v1491 = vunpack.c.l.b16 %v1395
      %v1492 = vpack.c.b16 %v1477, %v1476
      %v1493 = vpack.c.b16 %v1479, %v1478
      %v1494 = vpack.c.b16 %v1481, %v1480
      %v1495 = vpack.c.b16 %v1483, %v1482
      %v1496 = vpack.c.b16 %v1485, %v1484
      %v1497 = vpack.c.b16 %v1487, %v1486
      %v1498 = vpack.c.b16 %v1489, %v1488
      %v1499 = vpack.c.b16 %v1491, %v1490
      %1508 = vmatprep.subr.bf16.mxu0 0
      %1509 = vmatpush1.bf16.msra.mxu0 %v1499
      %1510 = vmatprep.subr.bf16.mxu0 0
      %1511 = vmatpush1.bf16.msra.mxu0 %v1498
      %1512 = vmatprep.subr.bf16.mxu0 0
      %1513 = vmatpush1.bf16.msra.mxu0 %v1497
      %1514 = vmatprep.subr.bf16.mxu0 0
      %1515 = vmatpush1.bf16.msra.mxu0 %v1496
      %1516 = vmatprep.subr.bf16.mxu0 0
      %1517 = vmatpush1.bf16.msra.mxu0 %v1495
      %1518 = vmatprep.subr.bf16.mxu0 0
      %1519 = vmatpush1.bf16.msra.mxu0 %v1494
      %1520 = vmatprep.subr.bf16.mxu0 0
      %1521 = vmatpush1.bf16.msra.mxu0 %v1493
      %1522 = vmatprep.subr.bf16.mxu0 0
      %1523 = vmatpush1.bf16.msra.mxu0 %v1492
      %1524 = vmatprep.subr.bf16.mxu0 0
      %1525 = vmatpush2.bf16.msra.mxu0 0
      %1526 = vmatprep.subr.bf16.mxu0 0
      %1527 = vmatpush2.bf16.msra.mxu0 0
      %1528 = vmatprep.subr.bf16.mxu0 0
      %1529 = vmatpush2.bf16.msra.mxu0 0
      %1530 = vmatprep.subr.bf16.mxu0 0
      %1531 = vmatpush2.bf16.msra.mxu0 0
      %1532 = vmatprep.subr.bf16.mxu0 0
      %1533 = vmatpush2.bf16.msra.mxu0 0
      %1534 = vmatprep.subr.bf16.mxu0 0
      %1535 = vmatpush2.bf16.msra.mxu0 0
      %1536 = vmatprep.subr.bf16.mxu0 0
      %1537 = vmatpush2.bf16.msra.mxu0 0
      %1538 = vmatprep.subr.bf16.mxu0 0
      %1539 = vmatpush2.bf16.msra.mxu0 0
      %1540 = vmatprep.mubr.bf16.mxu0 0
      %1541 = vmatmul.mubr.bf16.gmra.mxu0 %v1428
      %v1542 = vpop.f32.mrf.mxu0
      %v1543 = vadd.f32 0.0, %v1542
      %v1544 = vpop.f32.mrf.mxu0
      %v1545 = vpop.f32.mrf.mxu0
      %v1546 = vadd.f32 0.0, %v1545
      %v1547 = vpop.f32.mrf.mxu0
      %1548 = vmatprep.mubr.bf16.mxu0 0
      %1549 = vmatmul.mubr.bf16.gmra.mxu0 %v1429
      %v1550 = vpop.f32.mrf.mxu0
      %v1551 = vadd.f32 0.0, %v1550
      %v1552 = vpop.f32.mrf.mxu0
      %v1553 = vpop.f32.mrf.mxu0
      %v1554 = vadd.f32 0.0, %v1553
      %v1555 = vpop.f32.mrf.mxu0
      %1556 = vmatprep.mubr.bf16.mxu0 0
      %1557 = vmatmul.mubr.bf16.gmra.mxu0 %v1430
      %v1558 = vpop.f32.mrf.mxu0
      %v1559 = vadd.f32 0.0, %v1558
      %v1560 = vpop.f32.mrf.mxu0
      %v1561 = vpop.f32.mrf.mxu0
      %v1562 = vadd.f32 0.0, %v1561
      %v1563 = vpop.f32.mrf.mxu0
      %1564 = vmatprep.mubr.bf16.mxu0 0
      %1565 = vmatmul.mubr.bf16.gmra.mxu0 %v1431
      %v1566 = vpop.f32.mrf.mxu0
      %v1567 = vadd.f32 0.0, %v1566
      %v1568 = vpop.f32.mrf.mxu0
      %v1569 = vpop.f32.mrf.mxu0
      %v1570 = vadd.f32 0.0, %v1569
      %v1571 = vpop.f32.mrf.mxu0
      %1572 = vmatprep.mubr.bf16.mxu0 0
      %1573 = vmatmul.mubr.bf16.gmra.mxu0 %v1432
      %v1574 = vpop.f32.mrf.mxu0
      %v1575 = vadd.f32 0.0, %v1574
      %v1576 = vpop.f32.mrf.mxu0
      %v1577 = vpop.f32.mrf.mxu0
      %v1578 = vadd.f32 0.0, %v1577
      %v1579 = vpop.f32.mrf.mxu0
      %1580 = vmatprep.mubr.bf16.mxu0 0
      %1581 = vmatmul.mubr.bf16.gmra.mxu0 %v1433
      %v1582 = vpop.f32.mrf.mxu0
      %v1583 = vadd.f32 0.0, %v1582
      %v1584 = vpop.f32.mrf.mxu0
      %v1585 = vpop.f32.mrf.mxu0
      %v1586 = vadd.f32 0.0, %v1585
      %v1587 = vpop.f32.mrf.mxu0
      %1588 = vmatprep.mubr.bf16.mxu0 0
      %1589 = vmatmul.mubr.bf16.gmra.mxu0 %v1434
      %v1590 = vpop.f32.mrf.mxu0
      %v1591 = vadd.f32 0.0, %v1590
      %v1592 = vpop.f32.mrf.mxu0
      %v1593 = vpop.f32.mrf.mxu0
      %v1594 = vadd.f32 0.0, %v1593
      %v1595 = vpop.f32.mrf.mxu0
      %1596 = vmatprep.mubr.bf16.mxu0 0
      %1597 = vmatmul.mubr.bf16.gmra.mxu0 %v1435
      %v1598 = vpop.f32.mrf.mxu0
      %v1599 = vadd.f32 0.0, %v1598
      %v1600 = vpop.f32.mrf.mxu0
      %v1601 = vpop.f32.mrf.mxu0
      %v1602 = vadd.f32 0.0, %v1601
      %v1603 = vpop.f32.mrf.mxu0
      %1604 = vmatprep.mubr.bf16.mxu0 0
      %1605 = vmatmul.mubr.bf16.gmra.mxu0 %v1436
      %v1606 = vpop.f32.mrf.mxu0
      %v1607 = vadd.f32 0.0, %v1606
      %v1608 = vpop.f32.mrf.mxu0
      %v1609 = vpop.f32.mrf.mxu0
      %v1610 = vadd.f32 0.0, %v1609
      %v1611 = vpop.f32.mrf.mxu0
      %1612 = vmatprep.mubr.bf16.mxu0 0
      %1613 = vmatmul.mubr.bf16.gmra.mxu0 %v1437
      %v1614 = vpop.f32.mrf.mxu0
      %v1615 = vadd.f32 0.0, %v1614
      %v1616 = vpop.f32.mrf.mxu0
      %v1617 = vpop.f32.mrf.mxu0
      %v1618 = vadd.f32 0.0, %v1617
      %v1619 = vpop.f32.mrf.mxu0
      %1620 = vmatprep.mubr.bf16.mxu0 0
      %1621 = vmatmul.mubr.bf16.gmra.mxu0 %v1438
      %v1622 = vpop.f32.mrf.mxu0
      %v1623 = vadd.f32 0.0, %v1622
      %v1624 = vpop.f32.mrf.mxu0
      %v1625 = vpop.f32.mrf.mxu0
      %v1626 = vadd.f32 0.0, %v1625
      %v1627 = vpop.f32.mrf.mxu0
      %1628 = vmatprep.mubr.bf16.mxu0 0
      %1629 = vmatmul.mubr.bf16.gmra.mxu0 %v1439
      %v1630 = vpop.f32.mrf.mxu0
      %v1631 = vadd.f32 0.0, %v1630
      %v1632 = vpop.f32.mrf.mxu0
      %v1633 = vpop.f32.mrf.mxu0
      %v1634 = vadd.f32 0.0, %v1633
      %v1635 = vpop.f32.mrf.mxu0
      %1636 = vmatprep.mubr.bf16.mxu0 0
      %1637 = vmatmul.mubr.bf16.gmra.mxu0 %v1440
      %v1638 = vpop.f32.mrf.mxu0
      %v1639 = vadd.f32 0.0, %v1638
      %v1640 = vpop.f32.mrf.mxu0
      %v1641 = vpop.f32.mrf.mxu0
      %v1642 = vadd.f32 0.0, %v1641
      %v1643 = vpop.f32.mrf.mxu0
      %1644 = vmatprep.mubr.bf16.mxu0 0
      %1645 = vmatmul.mubr.bf16.gmra.mxu0 %v1441
      %v1646 = vpop.f32.mrf.mxu0
      %v1647 = vadd.f32 0.0, %v1646
      %v1648 = vpop.f32.mrf.mxu0
      %v1649 = vpop.f32.mrf.mxu0
      %v1650 = vadd.f32 0.0, %v1649
      %v1651 = vpop.f32.mrf.mxu0
      %1652 = vmatprep.mubr.bf16.mxu0 0
      %1653 = vmatmul.mubr.bf16.gmra.mxu0 %v1442
      %v1654 = vpop.f32.mrf.mxu0
      %v1655 = vadd.f32 0.0, %v1654
      %v1656 = vpop.f32.mrf.mxu0
      %v1657 = vpop.f32.mrf.mxu0
      %v1658 = vadd.f32 0.0, %v1657
      %v1659 = vpop.f32.mrf.mxu0
      %1660 = vmatprep.mubr.bf16.mxu0 0
      %1661 = vmatmul.mubr.bf16.gmra.mxu0 %v1443
      %v1662 = vpop.f32.mrf.mxu0
      %v1663 = vadd.f32 0.0, %v1662
      %v1664 = vpop.f32.mrf.mxu0
      %v1665 = vpop.f32.mrf.mxu0
      %v1666 = vadd.f32 0.0, %v1665
      %v1667 = vpop.f32.mrf.mxu0
      %1668 = vdwg.mxu0
      %v1669 = vadd.f32 %v1091, %v1543
      %v1670 = vadd.f32 %v1094, %v1546
      %v1671 = vadd.f32 %v1099, %v1551
      %v1672 = vadd.f32 %v1102, %v1554
      %v1673 = vadd.f32 %v1107, %v1559
      %v1674 = vadd.f32 %v1110, %v1562
      %v1675 = vadd.f32 %v1115, %v1567
      %v1676 = vadd.f32 %v1118, %v1570
      %v1677 = vadd.f32 %v1123, %v1575
      %v1678 = vadd.f32 %v1126, %v1578
      %v1679 = vadd.f32 %v1131, %v1583
      %v1680 = vadd.f32 %v1134, %v1586
      %v1681 = vadd.f32 %v1139, %v1591
      %v1682 = vadd.f32 %v1142, %v1594
      %v1683 = vadd.f32 %v1147, %v1599
      %v1684 = vadd.f32 %v1150, %v1602
      %v1685 = vadd.f32 %v1155, %v1607
      %v1686 = vadd.f32 %v1158, %v1610
      %v1687 = vadd.f32 %v1163, %v1615
      %v1688 = vadd.f32 %v1166, %v1618
      %v1689 = vadd.f32 %v1171, %v1623
      %v1690 = vadd.f32 %v1174, %v1626
      %v1691 = vadd.f32 %v1179, %v1631
      %v1692 = vadd.f32 %v1182, %v1634
      %v1693 = vadd.f32 %v1187, %v1639
      %v1694 = vadd.f32 %v1190, %v1642
      %v1695 = vadd.f32 %v1195, %v1647
      %v1696 = vadd.f32 %v1198, %v1650
      %v1697 = vadd.f32 %v1203, %v1655
      %v1698 = vadd.f32 %v1206, %v1658
      %v1699 = vadd.f32 %v1211, %v1663
      %v1700 = vadd.f32 %v1214, %v1666
      %s1701 = scalar_lea.vmem %s165, 12
      %v1702 = vld [vmem:[%s1701] sm:$0xf]
      %v1703 = vld [vmem:[%s1701 + $0x4] sm:$0xf]
      %v1704 = vld [vmem:[%s1701 + $0xc] sm:$0xf]
      %v1705 = vld [vmem:[%s1701 + $0x10] sm:$0xf]
      %v1706 = vld [vmem:[%s1701 + $0x18] sm:$0xf]
      %v1707 = vld [vmem:[%s1701 + $0x1c] sm:$0xf]
      %v1708 = vld [vmem:[%s1701 + $0x24] sm:$0xf]
      %v1709 = vld [vmem:[%s1701 + $0x28] sm:$0xf]
      %v1710 = vld [vmem:[%s1701 + $0x30] sm:$0xf]
      %v1711 = vld [vmem:[%s1701 + $0x34] sm:$0xf]
      %v1712 = vld [vmem:[%s1701 + $0x3c] sm:$0xf]
      %v1713 = vld [vmem:[%s1701 + $0x40] sm:$0xf]
      %v1714 = vld [vmem:[%s1701 + $0x48] sm:$0xf]
      %v1715 = vld [vmem:[%s1701 + $0x4c] sm:$0xf]
      %v1716 = vld [vmem:[%s1701 + $0x54] sm:$0xf]
      %v1717 = vld [vmem:[%s1701 + $0x58] sm:$0xf]
      %v1718 = vld [vmem:[%s1701 + $0x60] sm:$0xf]
      %v1719 = vld [vmem:[%s1701 + $0x64] sm:$0xf]
      %v1720 = vld [vmem:[%s1701 + $0x6c] sm:$0xf]
      %v1721 = vld [vmem:[%s1701 + $0x70] sm:$0xf]
      %v1722 = vld [vmem:[%s1701 + $0x78] sm:$0xf]
      %v1723 = vld [vmem:[%s1701 + $0x7c] sm:$0xf]
      %v1724 = vld [vmem:[%s1701 + $0x84] sm:$0xf]
      %v1725 = vld [vmem:[%s1701 + $0x88] sm:$0xf]
      %v1726 = vld [vmem:[%s1701 + $0x90] sm:$0xf]
      %v1727 = vld [vmem:[%s1701 + $0x94] sm:$0xf]
      %v1728 = vld [vmem:[%s1701 + $0x9c] sm:$0xf]
      %v1729 = vld [vmem:[%s1701 + $0xa0] sm:$0xf]
      %v1730 = vld [vmem:[%s1701 + $0xa8] sm:$0xf]
      %v1731 = vld [vmem:[%s1701 + $0xac] sm:$0xf]
      %v1732 = vld [vmem:[%s1701 + $0xb4] sm:$0xf]
      %v1733 = vld [vmem:[%s1701 + $0xb8] sm:$0xf]
      %v1734 = vld [vmem:[%s1 + $0xc0] sm:$0xf]
      %v1735 = vld [vmem:[%s1 + $0xc4] sm:$0xf]
      %v1736 = vld [vmem:[%s1 + $0xc8] sm:$0xf]
      %v1737 = vld [vmem:[%s1 + $0xcc] sm:$0xf]
      %v1738 = vld [vmem:[%s1 + $0xd0] sm:$0xf]
      %v1739 = vld [vmem:[%s1 + $0xd4] sm:$0xf]
      %v1740 = vld [vmem:[%s1 + $0xd8] sm:$0xf]
      %v1741 = vld [vmem:[%s1 + $0xdc] sm:$0xf]
      %v1742 = vld [vmem:[%s1 + $0xe0] sm:$0xf]
      %v1743 = vld [vmem:[%s1 + $0xe4] sm:$0xf]
      %v1744 = vld [vmem:[%s1 + $0xe8] sm:$0xf]
      %v1745 = vld [vmem:[%s1 + $0xec] sm:$0xf]
      %v1746 = vld [vmem:[%s1 + $0xf0] sm:$0xf]
      %v1747 = vld [vmem:[%s1 + $0xf4] sm:$0xf]
      %v1748 = vld [vmem:[%s1 + $0xf8] sm:$0xf]
      %v1749 = vld [vmem:[%s1 + $0xfc] sm:$0xf]
      %v1782 = vunpack.c.l.b16 %v1702
      %v1783 = vunpack.c.l.b16 %v1703
      %v1784 = vunpack.c.l.b16 %v1704
      %v1785 = vunpack.c.l.b16 %v1705
      %v1786 = vunpack.c.l.b16 %v1706
      %v1787 = vunpack.c.l.b16 %v1707
      %v1788 = vunpack.c.l.b16 %v1708
      %v1789 = vunpack.c.l.b16 %v1709
      %v1790 = vunpack.c.l.b16 %v1710
      %v1791 = vunpack.c.l.b16 %v1711
      %v1792 = vunpack.c.l.b16 %v1712
      %v1793 = vunpack.c.l.b16 %v1713
      %v1794 = vunpack.c.l.b16 %v1714
      %v1795 = vunpack.c.l.b16 %v1715
      %v1796 = vunpack.c.l.b16 %v1716
      %v1797 = vunpack.c.l.b16 %v1717
      %v1798 = vunpack.c.l.b16 %v1718
      %v1799 = vunpack.c.l.b16 %v1719
      %v1800 = vunpack.c.l.b16 %v1720
      %v1801 = vunpack.c.l.b16 %v1721
      %v1802 = vunpack.c.l.b16 %v1722
      %v1803 = vunpack.c.l.b16 %v1723
      %v1804 = vunpack.c.l.b16 %v1724
      %v1805 = vunpack.c.l.b16 %v1725
      %v1806 = vunpack.c.l.b16 %v1726
      %v1807 = vunpack.c.l.b16 %v1727
      %v1808 = vunpack.c.l.b16 %v1728
      %v1809 = vunpack.c.l.b16 %v1729
      %v1810 = vunpack.c.l.b16 %v1730
      %v1811 = vunpack.c.l.b16 %v1731
      %v1812 = vunpack.c.l.b16 %v1732
      %v1813 = vunpack.c.l.b16 %v1733
      %v1814 = vpack.c.b16 %v1783, %v1782
      %v1815 = vpack.c.b16 %v1785, %v1784
      %v1816 = vpack.c.b16 %v1787, %v1786
      %v1817 = vpack.c.b16 %v1789, %v1788
      %v1818 = vpack.c.b16 %v1791, %v1790
      %v1819 = vpack.c.b16 %v1793, %v1792
      %v1820 = vpack.c.b16 %v1795, %v1794
      %v1821 = vpack.c.b16 %v1797, %v1796
      %v1822 = vpack.c.b16 %v1799, %v1798
      %v1823 = vpack.c.b16 %v1801, %v1800
      %v1824 = vpack.c.b16 %v1803, %v1802
      %v1825 = vpack.c.b16 %v1805, %v1804
      %v1826 = vpack.c.b16 %v1807, %v1806
      %v1827 = vpack.c.b16 %v1809, %v1808
      %v1828 = vpack.c.b16 %v1811, %v1810
      %v1829 = vpack.c.b16 %v1813, %v1812
      %v1862 = vunpack.c.l.b16 %v1734
      %v1863 = vunpack.c.l.b16 %v1735
      %v1864 = vunpack.c.l.b16 %v1736
      %v1865 = vunpack.c.l.b16 %v1737
      %v1866 = vunpack.c.l.b16 %v1738
      %v1867 = vunpack.c.l.b16 %v1739
      %v1868 = vunpack.c.l.b16 %v1740
      %v1869 = vunpack.c.l.b16 %v1741
      %v1870 = vunpack.c.l.b16 %v1742
      %v1871 = vunpack.c.l.b16 %v1743
      %v1872 = vunpack.c.l.b16 %v1744
      %v1873 = vunpack.c.l.b16 %v1745
      %v1874 = vunpack.c.l.b16 %v1746
      %v1875 = vunpack.c.l.b16 %v1747
      %v1876 = vunpack.c.l.b16 %v1748
      %v1877 = vunpack.c.l.b16 %v1749
      %v1878 = vpack.c.b16 %v1863, %v1862
      %v1879 = vpack.c.b16 %v1865, %v1864
      %v1880 = vpack.c.b16 %v1867, %v1866
      %v1881 = vpack.c.b16 %v1869, %v1868
      %v1882 = vpack.c.b16 %v1871, %v1870
      %v1883 = vpack.c.b16 %v1873, %v1872
      %v1884 = vpack.c.b16 %v1875, %v1874
      %v1885 = vpack.c.b16 %v1877, %v1876
      %1894 = vmatprep.subr.bf16.mxu0 0
      %1895 = vmatpush1.bf16.msra.mxu0 %v1885
      %1896 = vmatprep.subr.bf16.mxu0 0
      %1897 = vmatpush1.bf16.msra.mxu0 %v1884
      %1898 = vmatprep.subr.bf16.mxu0 0
      %1899 = vmatpush1.bf16.msra.mxu0 %v1883
      %1900 = vmatprep.subr.bf16.mxu0 0
      %1901 = vmatpush1.bf16.msra.mxu0 %v1882
      %1902 = vmatprep.subr.bf16.mxu0 0
      %1903 = vmatpush1.bf16.msra.mxu0 %v1881
      %1904 = vmatprep.subr.bf16.mxu0 0
      %1905 = vmatpush1.bf16.msra.mxu0 %v1880
      %1906 = vmatprep.subr.bf16.mxu0 0
      %1907 = vmatpush1.bf16.msra.mxu0 %v1879
      %1908 = vmatprep.subr.bf16.mxu0 0
      %1909 = vmatpush1.bf16.msra.mxu0 %v1878
      %1910 = vmatprep.subr.bf16.mxu0 0
      %1911 = vmatpush2.bf16.msra.mxu0 0
      %1912 = vmatprep.subr.bf16.mxu0 0
      %1913 = vmatpush2.bf16.msra.mxu0 0
      %1914 = vmatprep.subr.bf16.mxu0 0
      %1915 = vmatpush2.bf16.msra.mxu0 0
      %1916 = vmatprep.subr.bf16.mxu0 0
      %1917 = vmatpush2.bf16.msra.mxu0 0
      %1918 = vmatprep.subr.bf16.mxu0 0
      %1919 = vmatpush2.bf16.msra.mxu0 0
      %1920 = vmatprep.subr.bf16.mxu0 0
      %1921 = vmatpush2.bf16.msra.mxu0 0
      %1922 = vmatprep.subr.bf16.mxu0 0
      %1923 = vmatpush2.bf16.msra.mxu0 0
      %1924 = vmatprep.subr.bf16.mxu0 0
      %1925 = vmatpush2.bf16.msra.mxu0 0
      %1926 = vmatprep.mubr.bf16.mxu0 0
      %1927 = vmatmul.mubr.bf16.gmra.mxu0 %v1814
      %v1928 = vpop.f32.mrf.mxu0
      %v1929 = vadd.f32 0.0, %v1928
      %v1930 = vpop.f32.mrf.mxu0
      %v1931 = vpop.f32.mrf.mxu0
      %v1932 = vadd.f32 0.0, %v1931
      %v1933 = vpop.f32.mrf.mxu0
      %1934 = vmatprep.mubr.bf16.mxu0 0
      %1935 = vmatmul.mubr.bf16.gmra.mxu0 %v1815
      %v1936 = vpop.f32.mrf.mxu0
      %v1937 = vadd.f32 0.0, %v1936
      %v1938 = vpop.f32.mrf.mxu0
      %v1939 = vpop.f32.mrf.mxu0
      %v1940 = vadd.f32 0.0, %v1939
      %v1941 = vpop.f32.mrf.mxu0
      %1942 = vmatprep.mubr.bf16.mxu0 0
      %1943 = vmatmul.mubr.bf16.gmra.mxu0 %v1816
      %v1944 = vpop.f32.mrf.mxu0
      %v1945 = vadd.f32 0.0, %v1944
      %v1946 = vpop.f32.mrf.mxu0
      %v1947 = vpop.f32.mrf.mxu0
      %v1948 = vadd.f32 0.0, %v1947
      %v1949 = vpop.f32.mrf.mxu0
      %1950 = vmatprep.mubr.bf16.mxu0 0
      %1951 = vmatmul.mubr.bf16.gmra.mxu0 %v1817
      %v1952 = vpop.f32.mrf.mxu0
      %v1953 = vadd.f32 0.0, %v1952
      %v1954 = vpop.f32.mrf.mxu0
      %v1955 = vpop.f32.mrf.mxu0
      %v1956 = vadd.f32 0.0, %v1955
      %v1957 = vpop.f32.mrf.mxu0
      %1958 = vmatprep.mubr.bf16.mxu0 0
      %1959 = vmatmul.mubr.bf16.gmra.mxu0 %v1818
      %v1960 = vpop.f32.mrf.mxu0
      %v1961 = vadd.f32 0.0, %v1960
      %v1962 = vpop.f32.mrf.mxu0
      %v1963 = vpop.f32.mrf.mxu0
      %v1964 = vadd.f32 0.0, %v1963
      %v1965 = vpop.f32.mrf.mxu0
      %1966 = vmatprep.mubr.bf16.mxu0 0
      %1967 = vmatmul.mubr.bf16.gmra.mxu0 %v1819
      %v1968 = vpop.f32.mrf.mxu0
      %v1969 = vadd.f32 0.0, %v1968
      %v1970 = vpop.f32.mrf.mxu0
      %v1971 = vpop.f32.mrf.mxu0
      %v1972 = vadd.f32 0.0, %v1971
      %v1973 = vpop.f32.mrf.mxu0
      %1974 = vmatprep.mubr.bf16.mxu0 0
      %1975 = vmatmul.mubr.bf16.gmra.mxu0 %v1820
      %v1976 = vpop.f32.mrf.mxu0
      %v1977 = vadd.f32 0.0, %v1976
      %v1978 = vpop.f32.mrf.mxu0
      %v1979 = vpop.f32.mrf.mxu0
      %v1980 = vadd.f32 0.0, %v1979
      %v1981 = vpop.f32.mrf.mxu0
      %1982 = vmatprep.mubr.bf16.mxu0 0
      %1983 = vmatmul.mubr.bf16.gmra.mxu0 %v1821
      %v1984 = vpop.f32.mrf.mxu0
      %v1985 = vadd.f32 0.0, %v1984
      %v1986 = vpop.f32.mrf.mxu0
      %v1987 = vpop.f32.mrf.mxu0
      %v1988 = vadd.f32 0.0, %v1987
      %v1989 = vpop.f32.mrf.mxu0
      %1990 = vmatprep.mubr.bf16.mxu0 0
      %1991 = vmatmul.mubr.bf16.gmra.mxu0 %v1822
      %v1992 = vpop.f32.mrf.mxu0
      %v1993 = vadd.f32 0.0, %v1992
      %v1994 = vpop.f32.mrf.mxu0
      %v1995 = vpop.f32.mrf.mxu0
      %v1996 = vadd.f32 0.0, %v1995
      %v1997 = vpop.f32.mrf.mxu0
      %1998 = vmatprep.mubr.bf16.mxu0 0
      %1999 = vmatmul.mubr.bf16.gmra.mxu0 %v1823
      %v2000 = vpop.f32.mrf.mxu0
      %v2001 = vadd.f32 0.0, %v2000
      %v2002 = vpop.f32.mrf.mxu0
      %v2003 = vpop.f32.mrf.mxu0
      %v2004 = vadd.f32 0.0, %v2003
      %v2005 = vpop.f32.mrf.mxu0
      %2006 = vmatprep.mubr.bf16.mxu0 0
      %2007 = vmatmul.mubr.bf16.gmra.mxu0 %v1824
      %v2008 = vpop.f32.mrf.mxu0
      %v2009 = vadd.f32 0.0, %v2008
      %v2010 = vpop.f32.mrf.mxu0
      %v2011 = vpop.f32.mrf.mxu0
      %v2012 = vadd.f32 0.0, %v2011
      %v2013 = vpop.f32.mrf.mxu0
      %2014 = vmatprep.mubr.bf16.mxu0 0
      %2015 = vmatmul.mubr.bf16.gmra.mxu0 %v1825
      %v2016 = vpop.f32.mrf.mxu0
      %v2017 = vadd.f32 0.0, %v2016
      %v2018 = vpop.f32.mrf.mxu0
      %v2019 = vpop.f32.mrf.mxu0
      %v2020 = vadd.f32 0.0, %v2019
      %v2021 = vpop.f32.mrf.mxu0
      %2022 = vmatprep.mubr.bf16.mxu0 0
      %2023 = vmatmul.mubr.bf16.gmra.mxu0 %v1826
      %v2024 = vpop.f32.mrf.mxu0
      %v2025 = vadd.f32 0.0, %v2024
      %v2026 = vpop.f32.mrf.mxu0
      %v2027 = vpop.f32.mrf.mxu0
      %v2028 = vadd.f32 0.0, %v2027
      %v2029 = vpop.f32.mrf.mxu0
      %2030 = vmatprep.mubr.bf16.mxu0 0
      %2031 = vmatmul.mubr.bf16.gmra.mxu0 %v1827
      %v2032 = vpop.f32.mrf.mxu0
      %v2033 = vadd.f32 0.0, %v2032
      %v2034 = vpop.f32.mrf.mxu0
      %v2035 = vpop.f32.mrf.mxu0
      %v2036 = vadd.f32 0.0, %v2035
      %v2037 = vpop.f32.mrf.mxu0
      %2038 = vmatprep.mubr.bf16.mxu0 0
      %2039 = vmatmul.mubr.bf16.gmra.mxu0 %v1828
      %v2040 = vpop.f32.mrf.mxu0
      %v2041 = vadd.f32 0.0, %v2040
      %v2042 = vpop.f32.mrf.mxu0
      %v2043 = vpop.f32.mrf.mxu0
      %v2044 = vadd.f32 0.0, %v2043
      %v2045 = vpop.f32.mrf.mxu0
      %2046 = vmatprep.mubr.bf16.mxu0 0
      %2047 = vmatmul.mubr.bf16.gmra.mxu0 %v1829
      %v2048 = vpop.f32.mrf.mxu0
      %v2049 = vadd.f32 0.0, %v2048
      %v2050 = vpop.f32.mrf.mxu0
      %v2051 = vpop.f32.mrf.mxu0
      %v2052 = vadd.f32 0.0, %v2051
      %v2053 = vpop.f32.mrf.mxu0
      %2054 = vdwg.mxu0
      %v2055 = vadd.f32 %v1669, %v1929
      %v2056 = vadd.f32 %v1670, %v1932
      %v2057 = vadd.f32 %v1671, %v1937
      %v2058 = vadd.f32 %v1672, %v1940
      %v2059 = vadd.f32 %v1673, %v1945
      %v2060 = vadd.f32 %v1674, %v1948
      %v2061 = vadd.f32 %v1675, %v1953
      %v2062 = vadd.f32 %v1676, %v1956
      %v2063 = vadd.f32 %v1677, %v1961
      %v2064 = vadd.f32 %v1678, %v1964
      %v2065 = vadd.f32 %v1679, %v1969
      %v2066 = vadd.f32 %v1680, %v1972
      %v2067 = vadd.f32 %v1681, %v1977
      %v2068 = vadd.f32 %v1682, %v1980
      %v2069 = vadd.f32 %v1683, %v1985
      %v2070 = vadd.f32 %v1684, %v1988
      %v2071 = vadd.f32 %v1685, %v1993
      %v2072 = vadd.f32 %v1686, %v1996
      %v2073 = vadd.f32 %v1687, %v2001
      %v2074 = vadd.f32 %v1688, %v2004
      %v2075 = vadd.f32 %v1689, %v2009
      %v2076 = vadd.f32 %v1690, %v2012
      %v2077 = vadd.f32 %v1691, %v2017
      %v2078 = vadd.f32 %v1692, %v2020
      %v2079 = vadd.f32 %v1693, %v2025
      %v2080 = vadd.f32 %v1694, %v2028
      %v2081 = vadd.f32 %v1695, %v2033
      %v2082 = vadd.f32 %v1696, %v2036
      %v2083 = vadd.f32 %v1697, %v2041
      %v2084 = vadd.f32 %v1698, %v2044
      %v2085 = vadd.f32 %v1699, %v2049
      %v2086 = vadd.f32 %v1700, %v2052
      %v2087 = vld [vmem:[%s1701] sm:$0xf]
      %v2088 = vld [vmem:[%s1701 + $0x4] sm:$0xf]
      %v2089 = vld [vmem:[%s1701 + $0x8] sm:$0x1]
      %v2090 = vld [vmem:[%s1701 + $0xc] sm:$0xf]
      %v2091 = vld [vmem:[%s1701 + $0x10] sm:$0xf]
      %v2092 = vld [vmem:[%s1701 + $0x14] sm:$0x1]
      %v2093 = vld [vmem:[%s1701 + $0x18] sm:$0xf]
      %v2094 = vld [vmem:[%s1701 + $0x1c] sm:$0xf]
      %v2095 = vld [vmem:[%s1701 + $0x20] sm:$0x1]
      %v2096 = vld [vmem:[%s1701 + $0x24] sm:$0xf]
      %v2097 = vld [vmem:[%s1701 + $0x28] sm:$0xf]
      %v2098 = vld [vmem:[%s1701 + $0x2c] sm:$0x1]
      %v2099 = vld [vmem:[%s1701 + $0x30] sm:$0xf]
      %v2100 = vld [vmem:[%s1701 + $0x34] sm:$0xf]
      %v2101 = vld [vmem:[%s1701 + $0x38] sm:$0x1]
      %v2102 = vld [vmem:[%s1701 + $0x3c] sm:$0xf]
      %v2103 = vld [vmem:[%s1701 + $0x40] sm:$0xf]
      %v2104 = vld [vmem:[%s1701 + $0x44] sm:$0x1]
      %v2105 = vld [vmem:[%s1701 + $0x48] sm:$0xf]
      %v2106 = vld [vmem:[%s1701 + $0x4c] sm:$0xf]
      %v2107 = vld [vmem:[%s1701 + $0x50] sm:$0x1]
      %v2108 = vld [vmem:[%s1701 + $0x54] sm:$0xf]
      %v2109 = vld [vmem:[%s1701 + $0x58] sm:$0xf]
      %v2110 = vld [vmem:[%s1701 + $0x5c] sm:$0x1]
      %v2111 = vld [vmem:[%s1701 + $0x60] sm:$0xf]
      %v2112 = vld [vmem:[%s1701 + $0x64] sm:$0xf]
      %v2113 = vld [vmem:[%s1701 + $0x68] sm:$0x1]
      %v2114 = vld [vmem:[%s1701 + $0x6c] sm:$0xf]
      %v2115 = vld [vmem:[%s1701 + $0x70] sm:$0xf]
      %v2116 = vld [vmem:[%s1701 + $0x74] sm:$0x1]
      %v2117 = vld [vmem:[%s1701 + $0x78] sm:$0xf]
      %v2118 = vld [vmem:[%s1701 + $0x7c] sm:$0xf]
      %v2119 = vld [vmem:[%s1701 + $0x80] sm:$0x1]
      %v2120 = vld [vmem:[%s1701 + $0x84] sm:$0xf]
      %v2121 = vld [vmem:[%s1701 + $0x88] sm:$0xf]
      %v2122 = vld [vmem:[%s1701 + $0x8c] sm:$0x1]
      %v2123 = vld [vmem:[%s1701 + $0x90] sm:$0xf]
      %v2124 = vld [vmem:[%s1701 + $0x94] sm:$0xf]
      %v2125 = vld [vmem:[%s1701 + $0x98] sm:$0x1]
      %v2126 = vld [vmem:[%s1701 + $0x9c] sm:$0xf]
      %v2127 = vld [vmem:[%s1701 + $0xa0] sm:$0xf]
      %v2128 = vld [vmem:[%s1701 + $0xa4] sm:$0x1]
      %v2129 = vld [vmem:[%s1701 + $0xa8] sm:$0xf]
      %v2130 = vld [vmem:[%s1701 + $0xac] sm:$0xf]
      %v2131 = vld [vmem:[%s1701 + $0xb0] sm:$0x1]
      %v2132 = vld [vmem:[%s1701 + $0xb4] sm:$0xf]
      %v2133 = vld [vmem:[%s1701 + $0xb8] sm:$0xf]
      %v2134 = vld [vmem:[%s1701 + $0xbc] sm:$0x1]
      %v2136 = vshrl.u32 %v2087, 16
      %v2138 = vrot.slane %v2136, 4
      %v2139 = vshll.u32 %v2087, 16
      %v2141 = vrot.slane %v2139, 5
      %v2142 = vor.u32 %v2138, %v2141
      %v2143 = vrot.slane %v2142, 4
      %v2145 = vshll.u32 %v2088, 16
      %v2147 = vrot.slane %v2145, 5
      %v2148 = vsel %vm238, %v2143, %v2147
      %v2149 = vshrl.u32 %v2088, 16
      %v2151 = vrot.slane %v2149, 4
      %v2152 = vor.u32 %v2151, %v2147
      %v2153 = vrot.slane %v2152, 4
      %v2155 = vshll.u32 %v2089, 16
      %v2157 = vrot.slane %v2155, 5
      %v2158 = vsel %vm238, %v2153, %v2157
      %v2160 = vshrl.u32 %v2090, 16
      %v2162 = vrot.slane %v2160, 4
      %v2163 = vshll.u32 %v2090, 16
      %v2165 = vrot.slane %v2163, 5
      %v2166 = vor.u32 %v2162, %v2165
      %v2167 = vrot.slane %v2166, 4
      %v2169 = vshll.u32 %v2091, 16
      %v2171 = vrot.slane %v2169, 5
      %v2172 = vsel %vm238, %v2167, %v2171
      %v2173 = vshrl.u32 %v2091, 16
      %v2175 = vrot.slane %v2173, 4
      %v2176 = vor.u32 %v2175, %v2171
      %v2177 = vrot.slane %v2176, 4
      %v2179 = vshll.u32 %v2092, 16
      %v2181 = vrot.slane %v2179, 5
      %v2182 = vsel %vm238, %v2177, %v2181
      %v2184 = vshrl.u32 %v2093, 16
      %v2186 = vrot.slane %v2184, 4
      %v2187 = vshll.u32 %v2093, 16
      %v2189 = vrot.slane %v2187, 5
      %v2190 = vor.u32 %v2186, %v2189
      %v2191 = vrot.slane %v2190, 4
      %v2193 = vshll.u32 %v2094, 16
      %v2195 = vrot.slane %v2193, 5
      %v2196 = vsel %vm238, %v2191, %v2195
      %v2197 = vshrl.u32 %v2094, 16
      %v2199 = vrot.slane %v2197, 4
      %v2200 = vor.u32 %v2199, %v2195
      %v2201 = vrot.slane %v2200, 4
      %v2203 = vshll.u32 %v2095, 16
      %v2205 = vrot.slane %v2203, 5
      %v2206 = vsel %vm238, %v2201, %v2205
      %v2208 = vshrl.u32 %v2096, 16
      %v2210 = vrot.slane %v2208, 4
      %v2211 = vshll.u32 %v2096, 16
      %v2213 = vrot.slane %v2211, 5
      %v2214 = vor.u32 %v2210, %v2213
      %v2215 = vrot.slane %v2214, 4
      %v2217 = vshll.u32 %v2097, 16
      %v2219 = vrot.slane %v2217, 5
      %v2220 = vsel %vm238, %v2215, %v2219
      %v2221 = vshrl.u32 %v2097, 16
      %v2223 = vrot.slane %v2221, 4
      %v2224 = vor.u32 %v2223, %v2219
      %v2225 = vrot.slane %v2224, 4
      %v2227 = vshll.u32 %v2098, 16
      %v2229 = vrot.slane %v2227, 5
      %v2230 = vsel %vm238, %v2225, %v2229
      %v2232 = vshrl.u32 %v2099, 16
      %v2234 = vrot.slane %v2232, 4
      %v2235 = vshll.u32 %v2099, 16
      %v2237 = vrot.slane %v2235, 5
      %v2238 = vor.u32 %v2234, %v2237
      %v2239 = vrot.slane %v2238, 4
      %v2241 = vshll.u32 %v2100, 16
      %v2243 = vrot.slane %v2241, 5
      %v2244 = vsel %vm238, %v2239, %v2243
      %v2245 = vshrl.u32 %v2100, 16
      %v2247 = vrot.slane %v2245, 4
      %v2248 = vor.u32 %v2247, %v2243
      %v2249 = vrot.slane %v2248, 4
      %v2251 = vshll.u32 %v2101, 16
      %v2253 = vrot.slane %v2251, 5
      %v2254 = vsel %vm238, %v2249, %v2253
      %v2256 = vshrl.u32 %v2102, 16
      %v2258 = vrot.slane %v2256, 4
      %v2259 = vshll.u32 %v2102, 16
      %v2261 = vrot.slane %v2259, 5
      %v2262 = vor.u32 %v2258, %v2261
      %v2263 = vrot.slane %v2262, 4
      %v2265 = vshll.u32 %v2103, 16
      %v2267 = vrot.slane %v2265, 5
      %v2268 = vsel %vm238, %v2263, %v2267
      %v2269 = vshrl.u32 %v2103, 16
      %v2271 = vrot.slane %v2269, 4
      %v2272 = vor.u32 %v2271, %v2267
      %v2273 = vrot.slane %v2272, 4
      %v2275 = vshll.u32 %v2104, 16
      %v2277 = vrot.slane %v2275, 5
      %v2278 = vsel %vm238, %v2273, %v2277
      %v2280 = vshrl.u32 %v2105, 16
      %v2282 = vrot.slane %v2280, 4
      %v2283 = vshll.u32 %v2105, 16
      %v2285 = vrot.slane %v2283, 5
      %v2286 = vor.u32 %v2282, %v2285
      %v2287 = vrot.slane %v2286, 4
      %v2289 = vshll.u32 %v2106, 16
      %v2291 = vrot.slane %v2289, 5
      %v2292 = vsel %vm238, %v2287, %v2291
      %v2293 = vshrl.u32 %v2106, 16
      %v2295 = vrot.slane %v2293, 4
      %v2296 = vor.u32 %v2295, %v2291
      %v2297 = vrot.slane %v2296, 4
      %v2299 = vshll.u32 %v2107, 16
      %v2301 = vrot.slane %v2299, 5
      %v2302 = vsel %vm238, %v2297, %v2301
      %v2304 = vshrl.u32 %v2108, 16
      %v2306 = vrot.slane %v2304, 4
      %v2307 = vshll.u32 %v2108, 16
      %v2309 = vrot.slane %v2307, 5
      %v2310 = vor.u32 %v2306, %v2309
      %v2311 = vrot.slane %v2310, 4
      %v2313 = vshll.u32 %v2109, 16
      %v2315 = vrot.slane %v2313, 5
      %v2316 = vsel %vm238, %v2311, %v2315
      %v2317 = vshrl.u32 %v2109, 16
      %v2319 = vrot.slane %v2317, 4
      %v2320 = vor.u32 %v2319, %v2315
      %v2321 = vrot.slane %v2320, 4
      %v2323 = vshll.u32 %v2110, 16
      %v2325 = vrot.slane %v2323, 5
      %v2326 = vsel %vm238, %v2321, %v2325
      %v2328 = vshrl.u32 %v2111, 16
      %v2330 = vrot.slane %v2328, 4
      %v2331 = vshll.u32 %v2111, 16
      %v2333 = vrot.slane %v2331, 5
      %v2334 = vor.u32 %v2330, %v2333
      %v2335 = vrot.slane %v2334, 4
      %v2337 = vshll.u32 %v2112, 16
      %v2339 = vrot.slane %v2337, 5
      %v2340 = vsel %vm238, %v2335, %v2339
      %v2341 = vshrl.u32 %v2112, 16
      %v2343 = vrot.slane %v2341, 4
      %v2344 = vor.u32 %v2343, %v2339
      %v2345 = vrot.slane %v2344, 4
      %v2347 = vshll.u32 %v2113, 16
      %v2349 = vrot.slane %v2347, 5
      %v2350 = vsel %vm238, %v2345, %v2349
      %v2352 = vshrl.u32 %v2114, 16
      %v2354 = vrot.slane %v2352, 4
      %v2355 = vshll.u32 %v2114, 16
      %v2357 = vrot.slane %v2355, 5
      %v2358 = vor.u32 %v2354, %v2357
      %v2359 = vrot.slane %v2358, 4
      %v2361 = vshll.u32 %v2115, 16
      %v2363 = vrot.slane %v2361, 5
      %v2364 = vsel %vm238, %v2359, %v2363
      %v2365 = vshrl.u32 %v2115, 16
      %v2367 = vrot.slane %v2365, 4
      %v2368 = vor.u32 %v2367, %v2363
      %v2369 = vrot.slane %v2368, 4
      %v2371 = vshll.u32 %v2116, 16
      %v2373 = vrot.slane %v2371, 5
      %v2374 = vsel %vm238, %v2369, %v2373
      %v2376 = vshrl.u32 %v2117, 16
      %v2378 = vrot.slane %v2376, 4
      %v2379 = vshll.u32 %v2117, 16
      %v2381 = vrot.slane %v2379, 5
      %v2382 = vor.u32 %v2378, %v2381
      %v2383 = vrot.slane %v2382, 4
      %v2385 = vshll.u32 %v2118, 16
      %v2387 = vrot.slane %v2385, 5
      %v2388 = vsel %vm238, %v2383, %v2387
      %v2389 = vshrl.u32 %v2118, 16
      %v2391 = vrot.slane %v2389, 4
      %v2392 = vor.u32 %v2391, %v2387
      %v2393 = vrot.slane %v2392, 4
      %v2395 = vshll.u32 %v2119, 16
      %v2397 = vrot.slane %v2395, 5
      %v2398 = vsel %vm238, %v2393, %v2397
      %v2400 = vshrl.u32 %v2120, 16
      %v2402 = vrot.slane %v2400, 4
      %v2403 = vshll.u32 %v2120, 16
      %v2405 = vrot.slane %v2403, 5
      %v2406 = vor.u32 %v2402, %v2405
      %v2407 = vrot.slane %v2406, 4
      %v2409 = vshll.u32 %v2121, 16
      %v2411 = vrot.slane %v2409, 5
      %v2412 = vsel %vm238, %v2407, %v2411
      %v2413 = vshrl.u32 %v2121, 16
      %v2415 = vrot.slane %v2413, 4
      %v2416 = vor.u32 %v2415, %v2411
      %v2417 = vrot.slane %v2416, 4
      %v2419 = vshll.u32 %v2122, 16
      %v2421 = vrot.slane %v2419, 5
      %v2422 = vsel %vm238, %v2417, %v2421
      %v2424 = vshrl.u32 %v2123, 16
      %v2426 = vrot.slane %v2424, 4
      %v2427 = vshll.u32 %v2123, 16
      %v2429 = vrot.slane %v2427, 5
      %v2430 = vor.u32 %v2426, %v2429
      %v2431 = vrot.slane %v2430, 4
      %v2433 = vshll.u32 %v2124, 16
      %v2435 = vrot.slane %v2433, 5
      %v2436 = vsel %vm238, %v2431, %v2435
      %v2437 = vshrl.u32 %v2124, 16
      %v2439 = vrot.slane %v2437, 4
      %v2440 = vor.u32 %v2439, %v2435
      %v2441 = vrot.slane %v2440, 4
      %v2443 = vshll.u32 %v2125, 16
      %v2445 = vrot.slane %v2443, 5
      %v2446 = vsel %vm238, %v2441, %v2445
      %v2448 = vshrl.u32 %v2126, 16
      %v2450 = vrot.slane %v2448, 4
      %v2451 = vshll.u32 %v2126, 16
      %v2453 = vrot.slane %v2451, 5
      %v2454 = vor.u32 %v2450, %v2453
      %v2455 = vrot.slane %v2454, 4
      %v2457 = vshll.u32 %v2127, 16
      %v2459 = vrot.slane %v2457, 5
      %v2460 = vsel %vm238, %v2455, %v2459
      %v2461 = vshrl.u32 %v2127, 16
      %v2463 = vrot.slane %v2461, 4
      %v2464 = vor.u32 %v2463, %v2459
      %v2465 = vrot.slane %v2464, 4
      %v2467 = vshll.u32 %v2128, 16
      %v2469 = vrot.slane %v2467, 5
      %v2470 = vsel %vm238, %v2465, %v2469
      %v2472 = vshrl.u32 %v2129, 16
      %v2474 = vrot.slane %v2472, 4
      %v2475 = vshll.u32 %v2129, 16
      %v2477 = vrot.slane %v2475, 5
      %v2478 = vor.u32 %v2474, %v2477
      %v2479 = vrot.slane %v2478, 4
      %v2481 = vshll.u32 %v2130, 16
      %v2483 = vrot.slane %v2481, 5
      %v2484 = vsel %vm238, %v2479, %v2483
      %v2485 = vshrl.u32 %v2130, 16
      %v2487 = vrot.slane %v2485, 4
      %v2488 = vor.u32 %v2487, %v2483
      %v2489 = vrot.slane %v2488, 4
      %v2491 = vshll.u32 %v2131, 16
      %v2493 = vrot.slane %v2491, 5
      %v2494 = vsel %vm238, %v2489, %v2493
      %v2496 = vshrl.u32 %v2132, 16
      %v2498 = vrot.slane %v2496, 4
      %v2499 = vshll.u32 %v2132, 16
      %v2501 = vrot.slane %v2499, 5
      %v2502 = vor.u32 %v2498, %v2501
      %v2503 = vrot.slane %v2502, 4
      %v2505 = vshll.u32 %v2133, 16
      %v2507 = vrot.slane %v2505, 5
      %v2508 = vsel %vm238, %v2503, %v2507
      %v2509 = vshrl.u32 %v2133, 16
      %v2511 = vrot.slane %v2509, 4
      %v2512 = vor.u32 %v2511, %v2507
      %v2513 = vrot.slane %v2512, 4
      %v2515 = vshll.u32 %v2134, 16
      %v2517 = vrot.slane %v2515, 5
      %v2518 = vsel %vm238, %v2513, %v2517
      %v2519 = vld [vmem:[%s1 + $0x100] sm:$0xf]
      %v2520 = vld [vmem:[%s1 + $0x104] sm:$0xf]
      %v2521 = vld [vmem:[%s1 + $0x108] sm:$0xf]
      %v2522 = vld [vmem:[%s1 + $0x10c] sm:$0xf]
      %v2523 = vld [vmem:[%s1 + $0x110] sm:$0xf]
      %v2524 = vld [vmem:[%s1 + $0x114] sm:$0xf]
      %v2525 = vld [vmem:[%s1 + $0x118] sm:$0xf]
      %v2526 = vld [vmem:[%s1 + $0x11c] sm:$0xf]
      %v2527 = vld [vmem:[%s1 + $0x120] sm:$0xf]
      %v2528 = vld [vmem:[%s1 + $0x124] sm:$0xf]
      %v2529 = vld [vmem:[%s1 + $0x128] sm:$0xf]
      %v2530 = vld [vmem:[%s1 + $0x12c] sm:$0xf]
      %v2531 = vld [vmem:[%s1 + $0x130] sm:$0xf]
      %v2532 = vld [vmem:[%s1 + $0x134] sm:$0xf]
      %v2533 = vld [vmem:[%s1 + $0x138] sm:$0xf]
      %v2534 = vld [vmem:[%s1 + $0x13c] sm:$0xf]
      %v2535 = vunpack.c.l.b16 %v2148
      %v2536 = vunpack.c.l.b16 %v2158
      %v2537 = vunpack.c.l.b16 %v2172
      %v2538 = vunpack.c.l.b16 %v2182
      %v2539 = vunpack.c.l.b16 %v2196
      %v2540 = vunpack.c.l.b16 %v2206
      %v2541 = vunpack.c.l.b16 %v2220
      %v2542 = vunpack.c.l.b16 %v2230
      %v2543 = vunpack.c.l.b16 %v2244
      %v2544 = vunpack.c.l.b16 %v2254
      %v2545 = vunpack.c.l.b16 %v2268
      %v2546 = vunpack.c.l.b16 %v2278
      %v2547 = vunpack.c.l.b16 %v2292
      %v2548 = vunpack.c.l.b16 %v2302
      %v2549 = vunpack.c.l.b16 %v2316
      %v2550 = vunpack.c.l.b16 %v2326
      %v2551 = vunpack.c.l.b16 %v2340
      %v2552 = vunpack.c.l.b16 %v2350
      %v2553 = vunpack.c.l.b16 %v2364
      %v2554 = vunpack.c.l.b16 %v2374
      %v2555 = vunpack.c.l.b16 %v2388
      %v2556 = vunpack.c.l.b16 %v2398
      %v2557 = vunpack.c.l.b16 %v2412
      %v2558 = vunpack.c.l.b16 %v2422
      %v2559 = vunpack.c.l.b16 %v2436
      %v2560 = vunpack.c.l.b16 %v2446
      %v2561 = vunpack.c.l.b16 %v2460
      %v2562 = vunpack.c.l.b16 %v2470
      %v2563 = vunpack.c.l.b16 %v2484
      %v2564 = vunpack.c.l.b16 %v2494
      %v2565 = vunpack.c.l.b16 %v2508
      %v2566 = vunpack.c.l.b16 %v2518
      %v2567 = vpack.c.b16 %v2536, %v2535
      %v2568 = vpack.c.b16 %v2538, %v2537
      %v2569 = vpack.c.b16 %v2540, %v2539
      %v2570 = vpack.c.b16 %v2542, %v2541
      %v2571 = vpack.c.b16 %v2544, %v2543
      %v2572 = vpack.c.b16 %v2546, %v2545
      %v2573 = vpack.c.b16 %v2548, %v2547
      %v2574 = vpack.c.b16 %v2550, %v2549
      %v2575 = vpack.c.b16 %v2552, %v2551
      %v2576 = vpack.c.b16 %v2554, %v2553
      %v2577 = vpack.c.b16 %v2556, %v2555
      %v2578 = vpack.c.b16 %v2558, %v2557
      %v2579 = vpack.c.b16 %v2560, %v2559
      %v2580 = vpack.c.b16 %v2562, %v2561
      %v2581 = vpack.c.b16 %v2564, %v2563
      %v2582 = vpack.c.b16 %v2566, %v2565
      %v2615 = vunpack.c.l.b16 %v2519
      %v2616 = vunpack.c.l.b16 %v2520
      %v2617 = vunpack.c.l.b16 %v2521
      %v2618 = vunpack.c.l.b16 %v2522
      %v2619 = vunpack.c.l.b16 %v2523
      %v2620 = vunpack.c.l.b16 %v2524
      %v2621 = vunpack.c.l.b16 %v2525
      %v2622 = vunpack.c.l.b16 %v2526
      %v2623 = vunpack.c.l.b16 %v2527
      %v2624 = vunpack.c.l.b16 %v2528
      %v2625 = vunpack.c.l.b16 %v2529
      %v2626 = vunpack.c.l.b16 %v2530
      %v2627 = vunpack.c.l.b16 %v2531
      %v2628 = vunpack.c.l.b16 %v2532
      %v2629 = vunpack.c.l.b16 %v2533
      %v2630 = vunpack.c.l.b16 %v2534
      %v2631 = vpack.c.b16 %v2616, %v2615
      %v2632 = vpack.c.b16 %v2618, %v2617
      %v2633 = vpack.c.b16 %v2620, %v2619
      %v2634 = vpack.c.b16 %v2622, %v2621
      %v2635 = vpack.c.b16 %v2624, %v2623
      %v2636 = vpack.c.b16 %v2626, %v2625
      %v2637 = vpack.c.b16 %v2628, %v2627
      %v2638 = vpack.c.b16 %v2630, %v2629
      %2647 = vmatprep.subr.bf16.mxu0 0
      %2648 = vmatpush1.bf16.msra.mxu0 %v2638
      %2649 = vmatprep.subr.bf16.mxu0 0
      %2650 = vmatpush1.bf16.msra.mxu0 %v2637
      %2651 = vmatprep.subr.bf16.mxu0 0
      %2652 = vmatpush1.bf16.msra.mxu0 %v2636
      %2653 = vmatprep.subr.bf16.mxu0 0
      %2654 = vmatpush1.bf16.msra.mxu0 %v2635
      %2655 = vmatprep.subr.bf16.mxu0 0
      %2656 = vmatpush1.bf16.msra.mxu0 %v2634
      %2657 = vmatprep.subr.bf16.mxu0 0
      %2658 = vmatpush1.bf16.msra.mxu0 %v2633
      %2659 = vmatprep.subr.bf16.mxu0 0
      %2660 = vmatpush1.bf16.msra.mxu0 %v2632
      %2661 = vmatprep.subr.bf16.mxu0 0
      %2662 = vmatpush1.bf16.msra.mxu0 %v2631
      %2663 = vmatprep.subr.bf16.mxu0 0
      %2664 = vmatpush2.bf16.msra.mxu0 0
      %2665 = vmatprep.subr.bf16.mxu0 0
      %2666 = vmatpush2.bf16.msra.mxu0 0
      %2667 = vmatprep.subr.bf16.mxu0 0
      %2668 = vmatpush2.bf16.msra.mxu0 0
      %2669 = vmatprep.subr.bf16.mxu0 0
      %2670 = vmatpush2.bf16.msra.mxu0 0
      %2671 = vmatprep.subr.bf16.mxu0 0
      %2672 = vmatpush2.bf16.msra.mxu0 0
      %2673 = vmatprep.subr.bf16.mxu0 0
      %2674 = vmatpush2.bf16.msra.mxu0 0
      %2675 = vmatprep.subr.bf16.mxu0 0
      %2676 = vmatpush2.bf16.msra.mxu0 0
      %2677 = vmatprep.subr.bf16.mxu0 0
      %2678 = vmatpush2.bf16.msra.mxu0 0
      %2679 = vmatprep.mubr.bf16.mxu0 0
      %2680 = vmatmul.mubr.bf16.gmra.mxu0 %v2567
      %v2681 = vpop.f32.mrf.mxu0
      %v2682 = vadd.f32 0.0, %v2681
      %v2683 = vpop.f32.mrf.mxu0
      %v2684 = vpop.f32.mrf.mxu0
      %v2685 = vadd.f32 0.0, %v2684
      %v2686 = vpop.f32.mrf.mxu0
      %2687 = vmatprep.mubr.bf16.mxu0 0
      %2688 = vmatmul.mubr.bf16.gmra.mxu0 %v2568
      %v2689 = vpop.f32.mrf.mxu0
      %v2690 = vadd.f32 0.0, %v2689
      %v2691 = vpop.f32.mrf.mxu0
      %v2692 = vpop.f32.mrf.mxu0
      %v2693 = vadd.f32 0.0, %v2692
      %v2694 = vpop.f32.mrf.mxu0
      %2695 = vmatprep.mubr.bf16.mxu0 0
      %2696 = vmatmul.mubr.bf16.gmra.mxu0 %v2569
      %v2697 = vpop.f32.mrf.mxu0
      %v2698 = vadd.f32 0.0, %v2697
      %v2699 = vpop.f32.mrf.mxu0
      %v2700 = vpop.f32.mrf.mxu0
      %v2701 = vadd.f32 0.0, %v2700
      %v2702 = vpop.f32.mrf.mxu0
      %2703 = vmatprep.mubr.bf16.mxu0 0
      %2704 = vmatmul.mubr.bf16.gmra.mxu0 %v2570
      %v2705 = vpop.f32.mrf.mxu0
      %v2706 = vadd.f32 0.0, %v2705
      %v2707 = vpop.f32.mrf.mxu0
      %v2708 = vpop.f32.mrf.mxu0
      %v2709 = vadd.f32 0.0, %v2708
      %v2710 = vpop.f32.mrf.mxu0
      %2711 = vmatprep.mubr.bf16.mxu0 0
      %2712 = vmatmul.mubr.bf16.gmra.mxu0 %v2571
      %v2713 = vpop.f32.mrf.mxu0
      %v2714 = vadd.f32 0.0, %v2713
      %v2715 = vpop.f32.mrf.mxu0
      %v2716 = vpop.f32.mrf.mxu0
      %v2717 = vadd.f32 0.0, %v2716
      %v2718 = vpop.f32.mrf.mxu0
      %2719 = vmatprep.mubr.bf16.mxu0 0
      %2720 = vmatmul.mubr.bf16.gmra.mxu0 %v2572
      %v2721 = vpop.f32.mrf.mxu0
      %v2722 = vadd.f32 0.0, %v2721
      %v2723 = vpop.f32.mrf.mxu0
      %v2724 = vpop.f32.mrf.mxu0
      %v2725 = vadd.f32 0.0, %v2724
      %v2726 = vpop.f32.mrf.mxu0
      %2727 = vmatprep.mubr.bf16.mxu0 0
      %2728 = vmatmul.mubr.bf16.gmra.mxu0 %v2573
      %v2729 = vpop.f32.mrf.mxu0
      %v2730 = vadd.f32 0.0, %v2729
      %v2731 = vpop.f32.mrf.mxu0
      %v2732 = vpop.f32.mrf.mxu0
      %v2733 = vadd.f32 0.0, %v2732
      %v2734 = vpop.f32.mrf.mxu0
      %2735 = vmatprep.mubr.bf16.mxu0 0
      %2736 = vmatmul.mubr.bf16.gmra.mxu0 %v2574
      %v2737 = vpop.f32.mrf.mxu0
      %v2738 = vadd.f32 0.0, %v2737
      %v2739 = vpop.f32.mrf.mxu0
      %v2740 = vpop.f32.mrf.mxu0
      %v2741 = vadd.f32 0.0, %v2740
      %v2742 = vpop.f32.mrf.mxu0
      %2743 = vmatprep.mubr.bf16.mxu0 0
      %2744 = vmatmul.mubr.bf16.gmra.mxu0 %v2575
      %v2745 = vpop.f32.mrf.mxu0
      %v2746 = vadd.f32 0.0, %v2745
      %v2747 = vpop.f32.mrf.mxu0
      %v2748 = vpop.f32.mrf.mxu0
      %v2749 = vadd.f32 0.0, %v2748
      %v2750 = vpop.f32.mrf.mxu0
      %2751 = vmatprep.mubr.bf16.mxu0 0
      %2752 = vmatmul.mubr.bf16.gmra.mxu0 %v2576
      %v2753 = vpop.f32.mrf.mxu0
      %v2754 = vadd.f32 0.0, %v2753
      %v2755 = vpop.f32.mrf.mxu0
      %v2756 = vpop.f32.mrf.mxu0
      %v2757 = vadd.f32 0.0, %v2756
      %v2758 = vpop.f32.mrf.mxu0
      %2759 = vmatprep.mubr.bf16.mxu0 0
      %2760 = vmatmul.mubr.bf16.gmra.mxu0 %v2577
      %v2761 = vpop.f32.mrf.mxu0
      %v2762 = vadd.f32 0.0, %v2761
      %v2763 = vpop.f32.mrf.mxu0
      %v2764 = vpop.f32.mrf.mxu0
      %v2765 = vadd.f32 0.0, %v2764
      %v2766 = vpop.f32.mrf.mxu0
      %2767 = vmatprep.mubr.bf16.mxu0 0
      %2768 = vmatmul.mubr.bf16.gmra.mxu0 %v2578
      %v2769 = vpop.f32.mrf.mxu0
      %v2770 = vadd.f32 0.0, %v2769
      %v2771 = vpop.f32.mrf.mxu0
      %v2772 = vpop.f32.mrf.mxu0
      %v2773 = vadd.f32 0.0, %v2772
      %v2774 = vpop.f32.mrf.mxu0
      %2775 = vmatprep.mubr.bf16.mxu0 0
      %2776 = vmatmul.mubr.bf16.gmra.mxu0 %v2579
      %v2777 = vpop.f32.mrf.mxu0
      %v2778 = vadd.f32 0.0, %v2777
      %v2779 = vpop.f32.mrf.mxu0
      %v2780 = vpop.f32.mrf.mxu0
      %v2781 = vadd.f32 0.0, %v2780
      %v2782 = vpop.f32.mrf.mxu0
      %2783 = vmatprep.mubr.bf16.mxu0 0
      %2784 = vmatmul.mubr.bf16.gmra.mxu0 %v2580
      %v2785 = vpop.f32.mrf.mxu0
      %v2786 = vadd.f32 0.0, %v2785
      %v2787 = vpop.f32.mrf.mxu0
      %v2788 = vpop.f32.mrf.mxu0
      %v2789 = vadd.f32 0.0, %v2788
      %v2790 = vpop.f32.mrf.mxu0
      %2791 = vmatprep.mubr.bf16.mxu0 0
      %2792 = vmatmul.mubr.bf16.gmra.mxu0 %v2581
      %v2793 = vpop.f32.mrf.mxu0
      %v2794 = vadd.f32 0.0, %v2793
      %v2795 = vpop.f32.mrf.mxu0
      %v2796 = vpop.f32.mrf.mxu0
      %v2797 = vadd.f32 0.0, %v2796
      %v2798 = vpop.f32.mrf.mxu0
      %2799 = vmatprep.mubr.bf16.mxu0 0
      %2800 = vmatmul.mubr.bf16.gmra.mxu0 %v2582
      %v2801 = vpop.f32.mrf.mxu0
      %v2802 = vadd.f32 0.0, %v2801
      %v2803 = vpop.f32.mrf.mxu0
      %v2804 = vpop.f32.mrf.mxu0
      %v2805 = vadd.f32 0.0, %v2804
      %v2806 = vpop.f32.mrf.mxu0
      %2807 = vdwg.mxu0
      %v2808 = vadd.f32 %v2055, %v2682
      %v2809 = vadd.f32 %v2056, %v2685
      %v2810 = vadd.f32 %v2057, %v2690
      %v2811 = vadd.f32 %v2058, %v2693
      %v2812 = vadd.f32 %v2059, %v2698
      %v2813 = vadd.f32 %v2060, %v2701
      %v2814 = vadd.f32 %v2061, %v2706
      %v2815 = vadd.f32 %v2062, %v2709
      %v2816 = vadd.f32 %v2063, %v2714
      %v2817 = vadd.f32 %v2064, %v2717
      %v2818 = vadd.f32 %v2065, %v2722
      %v2819 = vadd.f32 %v2066, %v2725
      %v2820 = vadd.f32 %v2067, %v2730
      %v2821 = vadd.f32 %v2068, %v2733
      %v2822 = vadd.f32 %v2069, %v2738
      %v2823 = vadd.f32 %v2070, %v2741
      %v2824 = vadd.f32 %v2071, %v2746
      %v2825 = vadd.f32 %v2072, %v2749
      %v2826 = vadd.f32 %v2073, %v2754
      %v2827 = vadd.f32 %v2074, %v2757
      %v2828 = vadd.f32 %v2075, %v2762
      %v2829 = vadd.f32 %v2076, %v2765
      %v2830 = vadd.f32 %v2077, %v2770
      %v2831 = vadd.f32 %v2078, %v2773
      %v2832 = vadd.f32 %v2079, %v2778
      %v2833 = vadd.f32 %v2080, %v2781
      %v2834 = vadd.f32 %v2081, %v2786
      %v2835 = vadd.f32 %v2082, %v2789
      %v2836 = vadd.f32 %v2083, %v2794
      %v2837 = vadd.f32 %v2084, %v2797
      %v2838 = vadd.f32 %v2085, %v2802
      %v2839 = vadd.f32 %v2086, %v2805
      %v2840 = vld [vmem:[%s1701] sm:$0xe]
      %v2841 = vld [vmem:[%s1701 + $0xc] sm:$0xe]
      %v2842 = vld [vmem:[%s1701 + $0x18] sm:$0xe]
      %v2843 = vld [vmem:[%s1701 + $0x24] sm:$0xe]
      %v2844 = vld [vmem:[%s1701 + $0x30] sm:$0xe]
      %v2845 = vld [vmem:[%s1701 + $0x3c] sm:$0xe]
      %v2846 = vld [vmem:[%s1701 + $0x48] sm:$0xe]
      %v2847 = vld [vmem:[%s1701 + $0x54] sm:$0xe]
      %v2848 = vld [vmem:[%s1701 + $0x60] sm:$0xe]
      %v2849 = vld [vmem:[%s1701 + $0x6c] sm:$0xe]
      %v2850 = vld [vmem:[%s1701 + $0x78] sm:$0xe]
      %v2851 = vld [vmem:[%s1701 + $0x84] sm:$0xe]
      %v2852 = vld [vmem:[%s1701 + $0x90] sm:$0xe]
      %v2853 = vld [vmem:[%s1701 + $0x9c] sm:$0xe]
      %v2854 = vld [vmem:[%s1701 + $0xa8] sm:$0xe]
      %v2855 = vld [vmem:[%s1701 + $0xb4] sm:$0xe]
      %v2904 = vrot.slane %v2840, 5
      %v2905 = vrot.slane %v2904, 4
      %v2906 = vrot.slane %v2088, 5
      %v2907 = vsel %vm1267, %v2905, %v2906
      %v2908 = vrot.slane %v2906, 4
      %v2909 = vrot.slane %v2089, 5
      %v2910 = vsel %vm1267, %v2908, %v2909
      %v2911 = vrot.slane %v2841, 5
      %v2912 = vrot.slane %v2911, 4
      %v2913 = vrot.slane %v2091, 5
      %v2914 = vsel %vm1267, %v2912, %v2913
      %v2915 = vrot.slane %v2913, 4
      %v2916 = vrot.slane %v2092, 5
      %v2917 = vsel %vm1267, %v2915, %v2916
      %v2918 = vrot.slane %v2842, 5
      %v2919 = vrot.slane %v2918, 4
      %v2920 = vrot.slane %v2094, 5
      %v2921 = vsel %vm1267, %v2919, %v2920
      %v2922 = vrot.slane %v2920, 4
      %v2923 = vrot.slane %v2095, 5
      %v2924 = vsel %vm1267, %v2922, %v2923
      %v2925 = vrot.slane %v2843, 5
      %v2926 = vrot.slane %v2925, 4
      %v2927 = vrot.slane %v2097, 5
      %v2928 = vsel %vm1267, %v2926, %v2927
      %v2929 = vrot.slane %v2927, 4
      %v2930 = vrot.slane %v2098, 5
      %v2931 = vsel %vm1267, %v2929, %v2930
      %v2932 = vrot.slane %v2844, 5
      %v2933 = vrot.slane %v2932, 4
      %v2934 = vrot.slane %v2100, 5
      %v2935 = vsel %vm1267, %v2933, %v2934
      %v2936 = vrot.slane %v2934, 4
      %v2937 = vrot.slane %v2101, 5
      %v2938 = vsel %vm1267, %v2936, %v2937
      %v2939 = vrot.slane %v2845, 5
      %v2940 = vrot.slane %v2939, 4
      %v2941 = vrot.slane %v2103, 5
      %v2942 = vsel %vm1267, %v2940, %v2941
      %v2943 = vrot.slane %v2941, 4
      %v2944 = vrot.slane %v2104, 5
      %v2945 = vsel %vm1267, %v2943, %v2944
      %v2946 = vrot.slane %v2846, 5
      %v2947 = vrot.slane %v2946, 4
      %v2948 = vrot.slane %v2106, 5
      %v2949 = vsel %vm1267, %v2947, %v2948
      %v2950 = vrot.slane %v2948, 4
      %v2951 = vrot.slane %v2107, 5
      %v2952 = vsel %vm1267, %v2950, %v2951
      %v2953 = vrot.slane %v2847, 5
      %v2954 = vrot.slane %v2953, 4
      %v2955 = vrot.slane %v2109, 5
      %v2956 = vsel %vm1267, %v2954, %v2955
      %v2957 = vrot.slane %v2955, 4
      %v2958 = vrot.slane %v2110, 5
      %v2959 = vsel %vm1267, %v2957, %v2958
      %v2960 = vrot.slane %v2848, 5
      %v2961 = vrot.slane %v2960, 4
      %v2962 = vrot.slane %v2112, 5
      %v2963 = vsel %vm1267, %v2961, %v2962
      %v2964 = vrot.slane %v2962, 4
      %v2965 = vrot.slane %v2113, 5
      %v2966 = vsel %vm1267, %v2964, %v2965
      %v2967 = vrot.slane %v2849, 5
      %v2968 = vrot.slane %v2967, 4
      %v2969 = vrot.slane %v2115, 5
      %v2970 = vsel %vm1267, %v2968, %v2969
      %v2971 = vrot.slane %v2969, 4
      %v2972 = vrot.slane %v2116, 5
      %v2973 = vsel %vm1267, %v2971, %v2972
      %v2974 = vrot.slane %v2850, 5
      %v2975 = vrot.slane %v2974, 4
      %v2976 = vrot.slane %v2118, 5
      %v2977 = vsel %vm1267, %v2975, %v2976
      %v2978 = vrot.slane %v2976, 4
      %v2979 = vrot.slane %v2119, 5
      %v2980 = vsel %vm1267, %v2978, %v2979
      %v2981 = vrot.slane %v2851, 5
      %v2982 = vrot.slane %v2981, 4
      %v2983 = vrot.slane %v2121, 5
      %v2984 = vsel %vm1267, %v2982, %v2983
      %v2985 = vrot.slane %v2983, 4
      %v2986 = vrot.slane %v2122, 5
      %v2987 = vsel %vm1267, %v2985, %v2986
      %v2988 = vrot.slane %v2852, 5
      %v2989 = vrot.slane %v2988, 4
      %v2990 = vrot.slane %v2124, 5
      %v2991 = vsel %vm1267, %v2989, %v2990
      %v2992 = vrot.slane %v2990, 4
      %v2993 = vrot.slane %v2125, 5
      %v2994 = vsel %vm1267, %v2992, %v2993
      %v2995 = vrot.slane %v2853, 5
      %v2996 = vrot.slane %v2995, 4
      %v2997 = vrot.slane %v2127, 5
      %v2998 = vsel %vm1267, %v2996, %v2997
      %v2999 = vrot.slane %v2997, 4
      %v3000 = vrot.slane %v2128, 5
      %v3001 = vsel %vm1267, %v2999, %v3000
      %v3002 = vrot.slane %v2854, 5
      %v3003 = vrot.slane %v3002, 4
      %v3004 = vrot.slane %v2130, 5
      %v3005 = vsel %vm1267, %v3003, %v3004
      %v3006 = vrot.slane %v3004, 4
      %v3007 = vrot.slane %v2131, 5
      %v3008 = vsel %vm1267, %v3006, %v3007
      %v3009 = vrot.slane %v2855, 5
      %v3010 = vrot.slane %v3009, 4
      %v3011 = vrot.slane %v2133, 5
      %v3012 = vsel %vm1267, %v3010, %v3011
      %v3013 = vrot.slane %v3011, 4
      %v3014 = vrot.slane %v2134, 5
      %v3015 = vsel %vm1267, %v3013, %v3014
      %v3016 = vld [vmem:[%s1 + $0x140] sm:$0xf]
      %v3017 = vld [vmem:[%s1 + $0x144] sm:$0xf]
      %v3018 = vld [vmem:[%s1 + $0x148] sm:$0xf]
      %v3019 = vld [vmem:[%s1 + $0x14c] sm:$0xf]
      %v3020 = vld [vmem:[%s1 + $0x150] sm:$0xf]
      %v3021 = vld [vmem:[%s1 + $0x154] sm:$0xf]
      %v3022 = vld [vmem:[%s1 + $0x158] sm:$0xf]
      %v3023 = vld [vmem:[%s1 + $0x15c] sm:$0xf]
      %v3024 = vld [vmem:[%s1 + $0x160] sm:$0xf]
      %v3025 = vld [vmem:[%s1 + $0x164] sm:$0xf]
      %v3026 = vld [vmem:[%s1 + $0x168] sm:$0xf]
      %v3027 = vld [vmem:[%s1 + $0x16c] sm:$0xf]
      %v3028 = vld [vmem:[%s1 + $0x170] sm:$0xf]
      %v3029 = vld [vmem:[%s1 + $0x174] sm:$0xf]
      %v3030 = vld [vmem:[%s1 + $0x178] sm:$0xf]
      %v3031 = vld [vmem:[%s1 + $0x17c] sm:$0xf]
      %v3032 = vunpack.c.l.b16 %v2907
      %v3033 = vunpack.c.l.b16 %v2910
      %v3034 = vunpack.c.l.b16 %v2914
      %v3035 = vunpack.c.l.b16 %v2917
      %v3036 = vunpack.c.l.b16 %v2921
      %v3037 = vunpack.c.l.b16 %v2924
      %v3038 = vunpack.c.l.b16 %v2928
      %v3039 = vunpack.c.l.b16 %v2931
      %v3040 = vunpack.c.l.b16 %v2935
      %v3041 = vunpack.c.l.b16 %v2938
      %v3042 = vunpack.c.l.b16 %v2942
      %v3043 = vunpack.c.l.b16 %v2945
      %v3044 = vunpack.c.l.b16 %v2949
      %v3045 = vunpack.c.l.b16 %v2952
      %v3046 = vunpack.c.l.b16 %v2956
      %v3047 = vunpack.c.l.b16 %v2959
      %v3048 = vunpack.c.l.b16 %v2963
      %v3049 = vunpack.c.l.b16 %v2966
      %v3050 = vunpack.c.l.b16 %v2970
      %v3051 = vunpack.c.l.b16 %v2973
      %v3052 = vunpack.c.l.b16 %v2977
      %v3053 = vunpack.c.l.b16 %v2980
      %v3054 = vunpack.c.l.b16 %v2984
      %v3055 = vunpack.c.l.b16 %v2987
      %v3056 = vunpack.c.l.b16 %v2991
      %v3057 = vunpack.c.l.b16 %v2994
      %v3058 = vunpack.c.l.b16 %v2998
      %v3059 = vunpack.c.l.b16 %v3001
      %v3060 = vunpack.c.l.b16 %v3005
      %v3061 = vunpack.c.l.b16 %v3008
      %v3062 = vunpack.c.l.b16 %v3012
      %v3063 = vunpack.c.l.b16 %v3015
      %v3064 = vpack.c.b16 %v3033, %v3032
      %v3065 = vpack.c.b16 %v3035, %v3034
      %v3066 = vpack.c.b16 %v3037, %v3036
      %v3067 = vpack.c.b16 %v3039, %v3038
      %v3068 = vpack.c.b16 %v3041, %v3040
      %v3069 = vpack.c.b16 %v3043, %v3042
      %v3070 = vpack.c.b16 %v3045, %v3044
      %v3071 = vpack.c.b16 %v3047, %v3046
      %v3072 = vpack.c.b16 %v3049, %v3048
      %v3073 = vpack.c.b16 %v3051, %v3050
      %v3074 = vpack.c.b16 %v3053, %v3052
      %v3075 = vpack.c.b16 %v3055, %v3054
      %v3076 = vpack.c.b16 %v3057, %v3056
      %v3077 = vpack.c.b16 %v3059, %v3058
      %v3078 = vpack.c.b16 %v3061, %v3060
      %v3079 = vpack.c.b16 %v3063, %v3062
      %v3112 = vunpack.c.l.b16 %v3016
      %v3113 = vunpack.c.l.b16 %v3017
      %v3114 = vunpack.c.l.b16 %v3018
      %v3115 = vunpack.c.l.b16 %v3019
      %v3116 = vunpack.c.l.b16 %v3020
      %v3117 = vunpack.c.l.b16 %v3021
      %v3118 = vunpack.c.l.b16 %v3022
      %v3119 = vunpack.c.l.b16 %v3023
      %v3120 = vunpack.c.l.b16 %v3024
      %v3121 = vunpack.c.l.b16 %v3025
      %v3122 = vunpack.c.l.b16 %v3026
      %v3123 = vunpack.c.l.b16 %v3027
      %v3124 = vunpack.c.l.b16 %v3028
      %v3125 = vunpack.c.l.b16 %v3029
      %v3126 = vunpack.c.l.b16 %v3030
      %v3127 = vunpack.c.l.b16 %v3031
      %v3128 = vpack.c.b16 %v3113, %v3112
      %v3129 = vpack.c.b16 %v3115, %v3114
      %v3130 = vpack.c.b16 %v3117, %v3116
      %v3131 = vpack.c.b16 %v3119, %v3118
      %v3132 = vpack.c.b16 %v3121, %v3120
      %v3133 = vpack.c.b16 %v3123, %v3122
      %v3134 = vpack.c.b16 %v3125, %v3124
      %v3135 = vpack.c.b16 %v3127, %v3126
      %3144 = vmatprep.subr.bf16.mxu0 0
      %3145 = vmatpush1.bf16.msra.mxu0 %v3135
      %3146 = vmatprep.subr.bf16.mxu0 0
      %3147 = vmatpush1.bf16.msra.mxu0 %v3134
      %3148 = vmatprep.subr.bf16.mxu0 0
      %3149 = vmatpush1.bf16.msra.mxu0 %v3133
      %3150 = vmatprep.subr.bf16.mxu0 0
      %3151 = vmatpush1.bf16.msra.mxu0 %v3132
      %3152 = vmatprep.subr.bf16.mxu0 0
      %3153 = vmatpush1.bf16.msra.mxu0 %v3131
      %3154 = vmatprep.subr.bf16.mxu0 0
      %3155 = vmatpush1.bf16.msra.mxu0 %v3130
      %3156 = vmatprep.subr.bf16.mxu0 0
      %3157 = vmatpush1.bf16.msra.mxu0 %v3129
      %3158 = vmatprep.subr.bf16.mxu0 0
      %3159 = vmatpush1.bf16.msra.mxu0 %v3128
      %3160 = vmatprep.subr.bf16.mxu0 0
      %3161 = vmatpush2.bf16.msra.mxu0 0
      %3162 = vmatprep.subr.bf16.mxu0 0
      %3163 = vmatpush2.bf16.msra.mxu0 0
      %3164 = vmatprep.subr.bf16.mxu0 0
      %3165 = vmatpush2.bf16.msra.mxu0 0
      %3166 = vmatprep.subr.bf16.mxu0 0
      %3167 = vmatpush2.bf16.msra.mxu0 0
      %3168 = vmatprep.subr.bf16.mxu0 0
      %3169 = vmatpush2.bf16.msra.mxu0 0
      %3170 = vmatprep.subr.bf16.mxu0 0
      %3171 = vmatpush2.bf16.msra.mxu0 0
      %3172 = vmatprep.subr.bf16.mxu0 0
      %3173 = vmatpush2.bf16.msra.mxu0 0
      %3174 = vmatprep.subr.bf16.mxu0 0
      %3175 = vmatpush2.bf16.msra.mxu0 0
      %3176 = vmatprep.mubr.bf16.mxu0 0
      %3177 = vmatmul.mubr.bf16.gmra.mxu0 %v3064
      %v3178 = vpop.f32.mrf.mxu0
      %v3179 = vadd.f32 0.0, %v3178
      %v3180 = vpop.f32.mrf.mxu0
      %v3181 = vpop.f32.mrf.mxu0
      %v3182 = vadd.f32 0.0, %v3181
      %v3183 = vpop.f32.mrf.mxu0
      %3184 = vmatprep.mubr.bf16.mxu0 0
      %3185 = vmatmul.mubr.bf16.gmra.mxu0 %v3065
      %v3186 = vpop.f32.mrf.mxu0
      %v3187 = vadd.f32 0.0, %v3186
      %v3188 = vpop.f32.mrf.mxu0
      %v3189 = vpop.f32.mrf.mxu0
      %v3190 = vadd.f32 0.0, %v3189
      %v3191 = vpop.f32.mrf.mxu0
      %3192 = vmatprep.mubr.bf16.mxu0 0
      %3193 = vmatmul.mubr.bf16.gmra.mxu0 %v3066
      %v3194 = vpop.f32.mrf.mxu0
      %v3195 = vadd.f32 0.0, %v3194
      %v3196 = vpop.f32.mrf.mxu0
      %v3197 = vpop.f32.mrf.mxu0
      %v3198 = vadd.f32 0.0, %v3197
      %v3199 = vpop.f32.mrf.mxu0
      %3200 = vmatprep.mubr.bf16.mxu0 0
      %3201 = vmatmul.mubr.bf16.gmra.mxu0 %v3067
      %v3202 = vpop.f32.mrf.mxu0
      %v3203 = vadd.f32 0.0, %v3202
      %v3204 = vpop.f32.mrf.mxu0
      %v3205 = vpop.f32.mrf.mxu0
      %v3206 = vadd.f32 0.0, %v3205
      %v3207 = vpop.f32.mrf.mxu0
      %3208 = vmatprep.mubr.bf16.mxu0 0
      %3209 = vmatmul.mubr.bf16.gmra.mxu0 %v3068
      %v3210 = vpop.f32.mrf.mxu0
      %v3211 = vadd.f32 0.0, %v3210
      %v3212 = vpop.f32.mrf.mxu0
      %v3213 = vpop.f32.mrf.mxu0
      %v3214 = vadd.f32 0.0, %v3213
      %v3215 = vpop.f32.mrf.mxu0
      %3216 = vmatprep.mubr.bf16.mxu0 0
      %3217 = vmatmul.mubr.bf16.gmra.mxu0 %v3069
      %v3218 = vpop.f32.mrf.mxu0
      %v3219 = vadd.f32 0.0, %v3218
      %v3220 = vpop.f32.mrf.mxu0
      %v3221 = vpop.f32.mrf.mxu0
      %v3222 = vadd.f32 0.0, %v3221
      %v3223 = vpop.f32.mrf.mxu0
      %3224 = vmatprep.mubr.bf16.mxu0 0
      %3225 = vmatmul.mubr.bf16.gmra.mxu0 %v3070
      %v3226 = vpop.f32.mrf.mxu0
      %v3227 = vadd.f32 0.0, %v3226
      %v3228 = vpop.f32.mrf.mxu0
      %v3229 = vpop.f32.mrf.mxu0
      %v3230 = vadd.f32 0.0, %v3229
      %v3231 = vpop.f32.mrf.mxu0
      %3232 = vmatprep.mubr.bf16.mxu0 0
      %3233 = vmatmul.mubr.bf16.gmra.mxu0 %v3071
      %v3234 = vpop.f32.mrf.mxu0
      %v3235 = vadd.f32 0.0, %v3234
      %v3236 = vpop.f32.mrf.mxu0
      %v3237 = vpop.f32.mrf.mxu0
      %v3238 = vadd.f32 0.0, %v3237
      %v3239 = vpop.f32.mrf.mxu0
      %3240 = vmatprep.mubr.bf16.mxu0 0
      %3241 = vmatmul.mubr.bf16.gmra.mxu0 %v3072
      %v3242 = vpop.f32.mrf.mxu0
      %v3243 = vadd.f32 0.0, %v3242
      %v3244 = vpop.f32.mrf.mxu0
      %v3245 = vpop.f32.mrf.mxu0
      %v3246 = vadd.f32 0.0, %v3245
      %v3247 = vpop.f32.mrf.mxu0
      %3248 = vmatprep.mubr.bf16.mxu0 0
      %3249 = vmatmul.mubr.bf16.gmra.mxu0 %v3073
      %v3250 = vpop.f32.mrf.mxu0
      %v3251 = vadd.f32 0.0, %v3250
      %v3252 = vpop.f32.mrf.mxu0
      %v3253 = vpop.f32.mrf.mxu0
      %v3254 = vadd.f32 0.0, %v3253
      %v3255 = vpop.f32.mrf.mxu0
      %3256 = vmatprep.mubr.bf16.mxu0 0
      %3257 = vmatmul.mubr.bf16.gmra.mxu0 %v3074
      %v3258 = vpop.f32.mrf.mxu0
      %v3259 = vadd.f32 0.0, %v3258
      %v3260 = vpop.f32.mrf.mxu0
      %v3261 = vpop.f32.mrf.mxu0
      %v3262 = vadd.f32 0.0, %v3261
      %v3263 = vpop.f32.mrf.mxu0
      %3264 = vmatprep.mubr.bf16.mxu0 0
      %3265 = vmatmul.mubr.bf16.gmra.mxu0 %v3075
      %v3266 = vpop.f32.mrf.mxu0
      %v3267 = vadd.f32 0.0, %v3266
      %v3268 = vpop.f32.mrf.mxu0
      %v3269 = vpop.f32.mrf.mxu0
      %v3270 = vadd.f32 0.0, %v3269
      %v3271 = vpop.f32.mrf.mxu0
      %3272 = vmatprep.mubr.bf16.mxu0 0
      %3273 = vmatmul.mubr.bf16.gmra.mxu0 %v3076
      %v3274 = vpop.f32.mrf.mxu0
      %v3275 = vadd.f32 0.0, %v3274
      %v3276 = vpop.f32.mrf.mxu0
      %v3277 = vpop.f32.mrf.mxu0
      %v3278 = vadd.f32 0.0, %v3277
      %v3279 = vpop.f32.mrf.mxu0
      %3280 = vmatprep.mubr.bf16.mxu0 0
      %3281 = vmatmul.mubr.bf16.gmra.mxu0 %v3077
      %v3282 = vpop.f32.mrf.mxu0
      %v3283 = vadd.f32 0.0, %v3282
      %v3284 = vpop.f32.mrf.mxu0
      %v3285 = vpop.f32.mrf.mxu0
      %v3286 = vadd.f32 0.0, %v3285
      %v3287 = vpop.f32.mrf.mxu0
      %3288 = vmatprep.mubr.bf16.mxu0 0
      %3289 = vmatmul.mubr.bf16.gmra.mxu0 %v3078
      %v3290 = vpop.f32.mrf.mxu0
      %v3291 = vadd.f32 0.0, %v3290
      %v3292 = vpop.f32.mrf.mxu0
      %v3293 = vpop.f32.mrf.mxu0
      %v3294 = vadd.f32 0.0, %v3293
      %v3295 = vpop.f32.mrf.mxu0
      %3296 = vmatprep.mubr.bf16.mxu0 0
      %3297 = vmatmul.mubr.bf16.gmra.mxu0 %v3079
      %v3298 = vpop.f32.mrf.mxu0
      %v3299 = vadd.f32 0.0, %v3298
      %v3300 = vpop.f32.mrf.mxu0
      %v3301 = vpop.f32.mrf.mxu0
      %v3302 = vadd.f32 0.0, %v3301
      %v3303 = vpop.f32.mrf.mxu0
      %3304 = vdwg.mxu0
      %v3305 = vadd.f32 %v2808, %v3179
      %v3306 = vadd.f32 %v2809, %v3182
      %v3307 = vadd.f32 %v2810, %v3187
      %v3308 = vadd.f32 %v2811, %v3190
      %v3309 = vadd.f32 %v2812, %v3195
      %v3310 = vadd.f32 %v2813, %v3198
      %v3311 = vadd.f32 %v2814, %v3203
      %v3312 = vadd.f32 %v2815, %v3206
      %v3313 = vadd.f32 %v2816, %v3211
      %v3314 = vadd.f32 %v2817, %v3214
      %v3315 = vadd.f32 %v2818, %v3219
      %v3316 = vadd.f32 %v2819, %v3222
      %v3317 = vadd.f32 %v2820, %v3227
      %v3318 = vadd.f32 %v2821, %v3230
      %v3319 = vadd.f32 %v2822, %v3235
      %v3320 = vadd.f32 %v2823, %v3238
      %v3321 = vadd.f32 %v2824, %v3243
      %v3322 = vadd.f32 %v2825, %v3246
      %v3323 = vadd.f32 %v2826, %v3251
      %v3324 = vadd.f32 %v2827, %v3254
      %v3325 = vadd.f32 %v2828, %v3259
      %v3326 = vadd.f32 %v2829, %v3262
      %v3327 = vadd.f32 %v2830, %v3267
      %v3328 = vadd.f32 %v2831, %v3270
      %v3329 = vadd.f32 %v2832, %v3275
      %v3330 = vadd.f32 %v2833, %v3278
      %v3331 = vadd.f32 %v2834, %v3283
      %v3332 = vadd.f32 %v2835, %v3286
      %v3333 = vadd.f32 %v2836, %v3291
      %v3334 = vadd.f32 %v2837, %v3294
      %v3335 = vadd.f32 %v2838, %v3299
      %v3336 = vadd.f32 %v2839, %v3302
      %s3337 = scalar_lea.vmem %s165, 24
      %v3338 = vld [vmem:[%s3337] sm:$0xf]
      %v3339 = vld [vmem:[%s3337 + $0x4] sm:$0xf]
      %v3340 = vld [vmem:[%s3337 + $0xc] sm:$0xf]
      %v3341 = vld [vmem:[%s3337 + $0x10] sm:$0xf]
      %v3342 = vld [vmem:[%s3337 + $0x18] sm:$0xf]
      %v3343 = vld [vmem:[%s3337 + $0x1c] sm:$0xf]
      %v3344 = vld [vmem:[%s3337 + $0x24] sm:$0xf]
      %v3345 = vld [vmem:[%s3337 + $0x28] sm:$0xf]
      %v3346 = vld [vmem:[%s3337 + $0x30] sm:$0xf]
      %v3347 = vld [vmem:[%s3337 + $0x34] sm:$0xf]
      %v3348 = vld [vmem:[%s3337 + $0x3c] sm:$0xf]
      %v3349 = vld [vmem:[%s3337 + $0x40] sm:$0xf]
      %v3350 = vld [vmem:[%s3337 + $0x48] sm:$0xf]
      %v3351 = vld [vmem:[%s3337 + $0x4c] sm:$0xf]
      %v3352 = vld [vmem:[%s3337 + $0x54] sm:$0xf]
      %v3353 = vld [vmem:[%s3337 + $0x58] sm:$0xf]
      %v3354 = vld [vmem:[%s3337 + $0x60] sm:$0xf]
      %v3355 = vld [vmem:[%s3337 + $0x64] sm:$0xf]
      %v3356 = vld [vmem:[%s3337 + $0x6c] sm:$0xf]
      %v3357 = vld [vmem:[%s3337 + $0x70] sm:$0xf]
      %v3358 = vld [vmem:[%s3337 + $0x78] sm:$0xf]
      %v3359 = vld [vmem:[%s3337 + $0x7c] sm:$0xf]
      %v3360 = vld [vmem:[%s3337 + $0x84] sm:$0xf]
      %v3361 = vld [vmem:[%s3337 + $0x88] sm:$0xf]
      %v3362 = vld [vmem:[%s3337 + $0x90] sm:$0xf]
      %v3363 = vld [vmem:[%s3337 + $0x94] sm:$0xf]
      %v3364 = vld [vmem:[%s3337 + $0x9c] sm:$0xf]
      %v3365 = vld [vmem:[%s3337 + $0xa0] sm:$0xf]
      %v3366 = vld [vmem:[%s3337 + $0xa8] sm:$0xf]
      %v3367 = vld [vmem:[%s3337 + $0xac] sm:$0xf]
      %v3368 = vld [vmem:[%s3337 + $0xb4] sm:$0xf]
      %v3369 = vld [vmem:[%s3337 + $0xb8] sm:$0xf]
      %v3370 = vld [vmem:[%s1 + $0x180] sm:$0xf]
      %v3371 = vld [vmem:[%s1 + $0x184] sm:$0xf]
      %v3372 = vld [vmem:[%s1 + $0x188] sm:$0xf]
      %v3373 = vld [vmem:[%s1 + $0x18c] sm:$0xf]
      %v3374 = vld [vmem:[%s1 + $0x190] sm:$0xf]
      %v3375 = vld [vmem:[%s1 + $0x194] sm:$0xf]
      %v3376 = vld [vmem:[%s1 + $0x198] sm:$0xf]
      %v3377 = vld [vmem:[%s1 + $0x19c] sm:$0xf]
      %v3378 = vld [vmem:[%s1 + $0x1a0] sm:$0xf]
      %v3379 = vld [vmem:[%s1 + $0x1a4] sm:$0xf]
      %v3380 = vld [vmem:[%s1 + $0x1a8] sm:$0xf]
      %v3381 = vld [vmem:[%s1 + $0x1ac] sm:$0xf]
      %v3382 = vld [vmem:[%s1 + $0x1b0] sm:$0xf]
      %v3383 = vld [vmem:[%s1 + $0x1b4] sm:$0xf]
      %v3384 = vld [vmem:[%s1 + $0x1b8] sm:$0xf]
      %v3385 = vld [vmem:[%s1 + $0x1bc] sm:$0xf]
      %v3418 = vunpack.c.l.b16 %v3338
      %v3419 = vunpack.c.l.b16 %v3339
      %v3420 = vunpack.c.l.b16 %v3340
      %v3421 = vunpack.c.l.b16 %v3341
      %v3422 = vunpack.c.l.b16 %v3342
      %v3423 = vunpack.c.l.b16 %v3343
      %v3424 = vunpack.c.l.b16 %v3344
      %v3425 = vunpack.c.l.b16 %v3345
      %v3426 = vunpack.c.l.b16 %v3346
      %v3427 = vunpack.c.l.b16 %v3347
      %v3428 = vunpack.c.l.b16 %v3348
      %v3429 = vunpack.c.l.b16 %v3349
      %v3430 = vunpack.c.l.b16 %v3350
      %v3431 = vunpack.c.l.b16 %v3351
      %v3432 = vunpack.c.l.b16 %v3352
      %v3433 = vunpack.c.l.b16 %v3353
      %v3434 = vunpack.c.l.b16 %v3354
      %v3435 = vunpack.c.l.b16 %v3355
      %v3436 = vunpack.c.l.b16 %v3356
      %v3437 = vunpack.c.l.b16 %v3357
      %v3438 = vunpack.c.l.b16 %v3358
      %v3439 = vunpack.c.l.b16 %v3359
      %v3440 = vunpack.c.l.b16 %v3360
      %v3441 = vunpack.c.l.b16 %v3361
      %v3442 = vunpack.c.l.b16 %v3362
      %v3443 = vunpack.c.l.b16 %v3363
      %v3444 = vunpack.c.l.b16 %v3364
      %v3445 = vunpack.c.l.b16 %v3365
      %v3446 = vunpack.c.l.b16 %v3366
      %v3447 = vunpack.c.l.b16 %v3367
      %v3448 = vunpack.c.l.b16 %v3368
      %v3449 = vunpack.c.l.b16 %v3369
      %v3450 = vpack.c.b16 %v3419, %v3418
      %v3451 = vpack.c.b16 %v3421, %v3420
      %v3452 = vpack.c.b16 %v3423, %v3422
      %v3453 = vpack.c.b16 %v3425, %v3424
      %v3454 = vpack.c.b16 %v3427, %v3426
      %v3455 = vpack.c.b16 %v3429, %v3428
      %v3456 = vpack.c.b16 %v3431, %v3430
      %v3457 = vpack.c.b16 %v3433, %v3432
      %v3458 = vpack.c.b16 %v3435, %v3434
      %v3459 = vpack.c.b16 %v3437, %v3436
      %v3460 = vpack.c.b16 %v3439, %v3438
      %v3461 = vpack.c.b16 %v3441, %v3440
      %v3462 = vpack.c.b16 %v3443, %v3442
      %v3463 = vpack.c.b16 %v3445, %v3444
      %v3464 = vpack.c.b16 %v3447, %v3446
      %v3465 = vpack.c.b16 %v3449, %v3448
      %v3498 = vunpack.c.l.b16 %v3370
      %v3499 = vunpack.c.l.b16 %v3371
      %v3500 = vunpack.c.l.b16 %v3372
      %v3501 = vunpack.c.l.b16 %v3373
      %v3502 = vunpack.c.l.b16 %v3374
      %v3503 = vunpack.c.l.b16 %v3375
      %v3504 = vunpack.c.l.b16 %v3376
      %v3505 = vunpack.c.l.b16 %v3377
      %v3506 = vunpack.c.l.b16 %v3378
      %v3507 = vunpack.c.l.b16 %v3379
      %v3508 = vunpack.c.l.b16 %v3380
      %v3509 = vunpack.c.l.b16 %v3381
      %v3510 = vunpack.c.l.b16 %v3382
      %v3511 = vunpack.c.l.b16 %v3383
      %v3512 = vunpack.c.l.b16 %v3384
      %v3513 = vunpack.c.l.b16 %v3385
      %v3514 = vpack.c.b16 %v3499, %v3498
      %v3515 = vpack.c.b16 %v3501, %v3500
      %v3516 = vpack.c.b16 %v3503, %v3502
      %v3517 = vpack.c.b16 %v3505, %v3504
      %v3518 = vpack.c.b16 %v3507, %v3506
      %v3519 = vpack.c.b16 %v3509, %v3508
      %v3520 = vpack.c.b16 %v3511, %v3510
      %v3521 = vpack.c.b16 %v3513, %v3512
      %3530 = vmatprep.subr.bf16.mxu0 0
      %3531 = vmatpush1.bf16.msra.mxu0 %v3521
      %3532 = vmatprep.subr.bf16.mxu0 0
      %3533 = vmatpush1.bf16.msra.mxu0 %v3520
      %3534 = vmatprep.subr.bf16.mxu0 0
      %3535 = vmatpush1.bf16.msra.mxu0 %v3519
      %3536 = vmatprep.subr.bf16.mxu0 0
      %3537 = vmatpush1.bf16.msra.mxu0 %v3518
      %3538 = vmatprep.subr.bf16.mxu0 0
      %3539 = vmatpush1.bf16.msra.mxu0 %v3517
      %3540 = vmatprep.subr.bf16.mxu0 0
      %3541 = vmatpush1.bf16.msra.mxu0 %v3516
      %3542 = vmatprep.subr.bf16.mxu0 0
      %3543 = vmatpush1.bf16.msra.mxu0 %v3515
      %3544 = vmatprep.subr.bf16.mxu0 0
      %3545 = vmatpush1.bf16.msra.mxu0 %v3514
      %3546 = vmatprep.subr.bf16.mxu0 0
      %3547 = vmatpush2.bf16.msra.mxu0 0
      %3548 = vmatprep.subr.bf16.mxu0 0
      %3549 = vmatpush2.bf16.msra.mxu0 0
      %3550 = vmatprep.subr.bf16.mxu0 0
      %3551 = vmatpush2.bf16.msra.mxu0 0
      %3552 = vmatprep.subr.bf16.mxu0 0
      %3553 = vmatpush2.bf16.msra.mxu0 0
      %3554 = vmatprep.subr.bf16.mxu0 0
      %3555 = vmatpush2.bf16.msra.mxu0 0
      %3556 = vmatprep.subr.bf16.mxu0 0
      %3557 = vmatpush2.bf16.msra.mxu0 0
      %3558 = vmatprep.subr.bf16.mxu0 0
      %3559 = vmatpush2.bf16.msra.mxu0 0
      %3560 = vmatprep.subr.bf16.mxu0 0
      %3561 = vmatpush2.bf16.msra.mxu0 0
      %3562 = vmatprep.mubr.bf16.mxu0 0
      %3563 = vmatmul.mubr.bf16.gmra.mxu0 %v3450
      %v3564 = vpop.f32.mrf.mxu0
      %v3565 = vadd.f32 0.0, %v3564
      %v3566 = vpop.f32.mrf.mxu0
      %v3567 = vpop.f32.mrf.mxu0
      %v3568 = vadd.f32 0.0, %v3567
      %v3569 = vpop.f32.mrf.mxu0
      %3570 = vmatprep.mubr.bf16.mxu0 0
      %3571 = vmatmul.mubr.bf16.gmra.mxu0 %v3451
      %v3572 = vpop.f32.mrf.mxu0
      %v3573 = vadd.f32 0.0, %v3572
      %v3574 = vpop.f32.mrf.mxu0
      %v3575 = vpop.f32.mrf.mxu0
      %v3576 = vadd.f32 0.0, %v3575
      %v3577 = vpop.f32.mrf.mxu0
      %3578 = vmatprep.mubr.bf16.mxu0 0
      %3579 = vmatmul.mubr.bf16.gmra.mxu0 %v3452
      %v3580 = vpop.f32.mrf.mxu0
      %v3581 = vadd.f32 0.0, %v3580
      %v3582 = vpop.f32.mrf.mxu0
      %v3583 = vpop.f32.mrf.mxu0
      %v3584 = vadd.f32 0.0, %v3583
      %v3585 = vpop.f32.mrf.mxu0
      %3586 = vmatprep.mubr.bf16.mxu0 0
      %3587 = vmatmul.mubr.bf16.gmra.mxu0 %v3453
      %v3588 = vpop.f32.mrf.mxu0
      %v3589 = vadd.f32 0.0, %v3588
      %v3590 = vpop.f32.mrf.mxu0
      %v3591 = vpop.f32.mrf.mxu0
      %v3592 = vadd.f32 0.0, %v3591
      %v3593 = vpop.f32.mrf.mxu0
      %3594 = vmatprep.mubr.bf16.mxu0 0
      %3595 = vmatmul.mubr.bf16.gmra.mxu0 %v3454
      %v3596 = vpop.f32.mrf.mxu0
      %v3597 = vadd.f32 0.0, %v3596
      %v3598 = vpop.f32.mrf.mxu0
      %v3599 = vpop.f32.mrf.mxu0
      %v3600 = vadd.f32 0.0, %v3599
      %v3601 = vpop.f32.mrf.mxu0
      %3602 = vmatprep.mubr.bf16.mxu0 0
      %3603 = vmatmul.mubr.bf16.gmra.mxu0 %v3455
      %v3604 = vpop.f32.mrf.mxu0
      %v3605 = vadd.f32 0.0, %v3604
      %v3606 = vpop.f32.mrf.mxu0
      %v3607 = vpop.f32.mrf.mxu0
      %v3608 = vadd.f32 0.0, %v3607
      %v3609 = vpop.f32.mrf.mxu0
      %3610 = vmatprep.mubr.bf16.mxu0 0
      %3611 = vmatmul.mubr.bf16.gmra.mxu0 %v3456
      %v3612 = vpop.f32.mrf.mxu0
      %v3613 = vadd.f32 0.0, %v3612
      %v3614 = vpop.f32.mrf.mxu0
      %v3615 = vpop.f32.mrf.mxu0
      %v3616 = vadd.f32 0.0, %v3615
      %v3617 = vpop.f32.mrf.mxu0
      %3618 = vmatprep.mubr.bf16.mxu0 0
      %3619 = vmatmul.mubr.bf16.gmra.mxu0 %v3457
      %v3620 = vpop.f32.mrf.mxu0
      %v3621 = vadd.f32 0.0, %v3620
      %v3622 = vpop.f32.mrf.mxu0
      %v3623 = vpop.f32.mrf.mxu0
      %v3624 = vadd.f32 0.0, %v3623
      %v3625 = vpop.f32.mrf.mxu0
      %3626 = vmatprep.mubr.bf16.mxu0 0
      %3627 = vmatmul.mubr.bf16.gmra.mxu0 %v3458
      %v3628 = vpop.f32.mrf.mxu0
      %v3629 = vadd.f32 0.0, %v3628
      %v3630 = vpop.f32.mrf.mxu0
      %v3631 = vpop.f32.mrf.mxu0
      %v3632 = vadd.f32 0.0, %v3631
      %v3633 = vpop.f32.mrf.mxu0
      %3634 = vmatprep.mubr.bf16.mxu0 0
      %3635 = vmatmul.mubr.bf16.gmra.mxu0 %v3459
      %v3636 = vpop.f32.mrf.mxu0
      %v3637 = vadd.f32 0.0, %v3636
      %v3638 = vpop.f32.mrf.mxu0
      %v3639 = vpop.f32.mrf.mxu0
      %v3640 = vadd.f32 0.0, %v3639
      %v3641 = vpop.f32.mrf.mxu0
      %3642 = vmatprep.mubr.bf16.mxu0 0
      %3643 = vmatmul.mubr.bf16.gmra.mxu0 %v3460
      %v3644 = vpop.f32.mrf.mxu0
      %v3645 = vadd.f32 0.0, %v3644
      %v3646 = vpop.f32.mrf.mxu0
      %v3647 = vpop.f32.mrf.mxu0
      %v3648 = vadd.f32 0.0, %v3647
      %v3649 = vpop.f32.mrf.mxu0
      %3650 = vmatprep.mubr.bf16.mxu0 0
      %3651 = vmatmul.mubr.bf16.gmra.mxu0 %v3461
      %v3652 = vpop.f32.mrf.mxu0
      %v3653 = vadd.f32 0.0, %v3652
      %v3654 = vpop.f32.mrf.mxu0
      %v3655 = vpop.f32.mrf.mxu0
      %v3656 = vadd.f32 0.0, %v3655
      %v3657 = vpop.f32.mrf.mxu0
      %3658 = vmatprep.mubr.bf16.mxu0 0
      %3659 = vmatmul.mubr.bf16.gmra.mxu0 %v3462
      %v3660 = vpop.f32.mrf.mxu0
      %v3661 = vadd.f32 0.0, %v3660
      %v3662 = vpop.f32.mrf.mxu0
      %v3663 = vpop.f32.mrf.mxu0
      %v3664 = vadd.f32 0.0, %v3663
      %v3665 = vpop.f32.mrf.mxu0
      %3666 = vmatprep.mubr.bf16.mxu0 0
      %3667 = vmatmul.mubr.bf16.gmra.mxu0 %v3463
      %v3668 = vpop.f32.mrf.mxu0
      %v3669 = vadd.f32 0.0, %v3668
      %v3670 = vpop.f32.mrf.mxu0
      %v3671 = vpop.f32.mrf.mxu0
      %v3672 = vadd.f32 0.0, %v3671
      %v3673 = vpop.f32.mrf.mxu0
      %3674 = vmatprep.mubr.bf16.mxu0 0
      %3675 = vmatmul.mubr.bf16.gmra.mxu0 %v3464
      %v3676 = vpop.f32.mrf.mxu0
      %v3677 = vadd.f32 0.0, %v3676
      %v3678 = vpop.f32.mrf.mxu0
      %v3679 = vpop.f32.mrf.mxu0
      %v3680 = vadd.f32 0.0, %v3679
      %v3681 = vpop.f32.mrf.mxu0
      %3682 = vmatprep.mubr.bf16.mxu0 0
      %3683 = vmatmul.mubr.bf16.gmra.mxu0 %v3465
      %v3684 = vpop.f32.mrf.mxu0
      %v3685 = vadd.f32 0.0, %v3684
      %v3686 = vpop.f32.mrf.mxu0
      %v3687 = vpop.f32.mrf.mxu0
      %v3688 = vadd.f32 0.0, %v3687
      %v3689 = vpop.f32.mrf.mxu0
      %3690 = vdwg.mxu0
      %v3691 = vadd.f32 %v3305, %v3565
      %v3692 = vadd.f32 %v3306, %v3568
      %v3693 = vadd.f32 %v3307, %v3573
      %v3694 = vadd.f32 %v3308, %v3576
      %v3695 = vadd.f32 %v3309, %v3581
      %v3696 = vadd.f32 %v3310, %v3584
      %v3697 = vadd.f32 %v3311, %v3589
      %v3698 = vadd.f32 %v3312, %v3592
      %v3699 = vadd.f32 %v3313, %v3597
      %v3700 = vadd.f32 %v3314, %v3600
      %v3701 = vadd.f32 %v3315, %v3605
      %v3702 = vadd.f32 %v3316, %v3608
      %v3703 = vadd.f32 %v3317, %v3613
      %v3704 = vadd.f32 %v3318, %v3616
      %v3705 = vadd.f32 %v3319, %v3621
      %v3706 = vadd.f32 %v3320, %v3624
      %v3707 = vadd.f32 %v3321, %v3629
      %v3708 = vadd.f32 %v3322, %v3632
      %v3709 = vadd.f32 %v3323, %v3637
      %v3710 = vadd.f32 %v3324, %v3640
      %v3711 = vadd.f32 %v3325, %v3645
      %v3712 = vadd.f32 %v3326, %v3648
      %v3713 = vadd.f32 %v3327, %v3653
      %v3714 = vadd.f32 %v3328, %v3656
      %v3715 = vadd.f32 %v3329, %v3661
      %v3716 = vadd.f32 %v3330, %v3664
      %v3717 = vadd.f32 %v3331, %v3669
      %v3718 = vadd.f32 %v3332, %v3672
      %v3719 = vadd.f32 %v3333, %v3677
      %v3720 = vadd.f32 %v3334, %v3680
      %v3721 = vadd.f32 %v3335, %v3685
      %v3722 = vadd.f32 %v3336, %v3688
      %v3723 = vld [vmem:[%s3337] sm:$0xf]
      %v3724 = vld [vmem:[%s3337 + $0x4] sm:$0xf]
      %v3725 = vld [vmem:[%s3337 + $0x8] sm:$0x1]
      %v3726 = vld [vmem:[%s3337 + $0xc] sm:$0xf]
      %v3727 = vld [vmem:[%s3337 + $0x10] sm:$0xf]
      %v3728 = vld [vmem:[%s3337 + $0x14] sm:$0x1]
      %v3729 = vld [vmem:[%s3337 + $0x18] sm:$0xf]
      %v3730 = vld [vmem:[%s3337 + $0x1c] sm:$0xf]
      %v3731 = vld [vmem:[%s3337 + $0x20] sm:$0x1]
      %v3732 = vld [vmem:[%s3337 + $0x24] sm:$0xf]
      %v3733 = vld [vmem:[%s3337 + $0x28] sm:$0xf]
      %v3734 = vld [vmem:[%s3337 + $0x2c] sm:$0x1]
      %v3735 = vld [vmem:[%s3337 + $0x30] sm:$0xf]
      %v3736 = vld [vmem:[%s3337 + $0x34] sm:$0xf]
      %v3737 = vld [vmem:[%s3337 + $0x38] sm:$0x1]
      %v3738 = vld [vmem:[%s3337 + $0x3c] sm:$0xf]
      %v3739 = vld [vmem:[%s3337 + $0x40] sm:$0xf]
      %v3740 = vld [vmem:[%s3337 + $0x44] sm:$0x1]
      %v3741 = vld [vmem:[%s3337 + $0x48] sm:$0xf]
      %v3742 = vld [vmem:[%s3337 + $0x4c] sm:$0xf]
      %v3743 = vld [vmem:[%s3337 + $0x50] sm:$0x1]
      %v3744 = vld [vmem:[%s3337 + $0x54] sm:$0xf]
      %v3745 = vld [vmem:[%s3337 + $0x58] sm:$0xf]
      %v3746 = vld [vmem:[%s3337 + $0x5c] sm:$0x1]
      %v3747 = vld [vmem:[%s3337 + $0x60] sm:$0xf]
      %v3748 = vld [vmem:[%s3337 + $0x64] sm:$0xf]
      %v3749 = vld [vmem:[%s3337 + $0x68] sm:$0x1]
      %v3750 = vld [vmem:[%s3337 + $0x6c] sm:$0xf]
      %v3751 = vld [vmem:[%s3337 + $0x70] sm:$0xf]
      %v3752 = vld [vmem:[%s3337 + $0x74] sm:$0x1]
      %v3753 = vld [vmem:[%s3337 + $0x78] sm:$0xf]
      %v3754 = vld [vmem:[%s3337 + $0x7c] sm:$0xf]
      %v3755 = vld [vmem:[%s3337 + $0x80] sm:$0x1]
      %v3756 = vld [vmem:[%s3337 + $0x84] sm:$0xf]
      %v3757 = vld [vmem:[%s3337 + $0x88] sm:$0xf]
      %v3758 = vld [vmem:[%s3337 + $0x8c] sm:$0x1]
      %v3759 = vld [vmem:[%s3337 + $0x90] sm:$0xf]
      %v3760 = vld [vmem:[%s3337 + $0x94] sm:$0xf]
      %v3761 = vld [vmem:[%s3337 + $0x98] sm:$0x1]
      %v3762 = vld [vmem:[%s3337 + $0x9c] sm:$0xf]
      %v3763 = vld [vmem:[%s3337 + $0xa0] sm:$0xf]
      %v3764 = vld [vmem:[%s3337 + $0xa4] sm:$0x1]
      %v3765 = vld [vmem:[%s3337 + $0xa8] sm:$0xf]
      %v3766 = vld [vmem:[%s3337 + $0xac] sm:$0xf]
      %v3767 = vld [vmem:[%s3337 + $0xb0] sm:$0x1]
      %v3768 = vld [vmem:[%s3337 + $0xb4] sm:$0xf]
      %v3769 = vld [vmem:[%s3337 + $0xb8] sm:$0xf]
      %v3770 = vld [vmem:[%s3337 + $0xbc] sm:$0x1]
      %v3772 = vshrl.u32 %v3723, 16
      %v3774 = vrot.slane %v3772, 4
      %v3775 = vshll.u32 %v3723, 16
      %v3777 = vrot.slane %v3775, 5
      %v3778 = vor.u32 %v3774, %v3777
      %v3779 = vrot.slane %v3778, 4
      %v3781 = vshll.u32 %v3724, 16
      %v3783 = vrot.slane %v3781, 5
      %v3784 = vsel %vm238, %v3779, %v3783
      %v3785 = vshrl.u32 %v3724, 16
      %v3787 = vrot.slane %v3785, 4
      %v3788 = vor.u32 %v3787, %v3783
      %v3789 = vrot.slane %v3788, 4
      %v3791 = vshll.u32 %v3725, 16
      %v3793 = vrot.slane %v3791, 5
      %v3794 = vsel %vm238, %v3789, %v3793
      %v3796 = vshrl.u32 %v3726, 16
      %v3798 = vrot.slane %v3796, 4
      %v3799 = vshll.u32 %v3726, 16
      %v3801 = vrot.slane %v3799, 5
      %v3802 = vor.u32 %v3798, %v3801
      %v3803 = vrot.slane %v3802, 4
      %v3805 = vshll.u32 %v3727, 16
      %v3807 = vrot.slane %v3805, 5
      %v3808 = vsel %vm238, %v3803, %v3807
      %v3809 = vshrl.u32 %v3727, 16
      %v3811 = vrot.slane %v3809, 4
      %v3812 = vor.u32 %v3811, %v3807
      %v3813 = vrot.slane %v3812, 4
      %v3815 = vshll.u32 %v3728, 16
      %v3817 = vrot.slane %v3815, 5
      %v3818 = vsel %vm238, %v3813, %v3817
      %v3820 = vshrl.u32 %v3729, 16
      %v3822 = vrot.slane %v3820, 4
      %v3823 = vshll.u32 %v3729, 16
      %v3825 = vrot.slane %v3823, 5
      %v3826 = vor.u32 %v3822, %v3825
      %v3827 = vrot.slane %v3826, 4
      %v3829 = vshll.u32 %v3730, 16
      %v3831 = vrot.slane %v3829, 5
      %v3832 = vsel %vm238, %v3827, %v3831
      %v3833 = vshrl.u32 %v3730, 16
      %v3835 = vrot.slane %v3833, 4
      %v3836 = vor.u32 %v3835, %v3831
      %v3837 = vrot.slane %v3836, 4
      %v3839 = vshll.u32 %v3731, 16
      %v3841 = vrot.slane %v3839, 5
      %v3842 = vsel %vm238, %v3837, %v3841
      %v3844 = vshrl.u32 %v3732, 16
      %v3846 = vrot.slane %v3844, 4
      %v3847 = vshll.u32 %v3732, 16
      %v3849 = vrot.slane %v3847, 5
      %v3850 = vor.u32 %v3846, %v3849
      %v3851 = vrot.slane %v3850, 4
      %v3853 = vshll.u32 %v3733, 16
      %v3855 = vrot.slane %v3853, 5
      %v3856 = vsel %vm238, %v3851, %v3855
      %v3857 = vshrl.u32 %v3733, 16
      %v3859 = vrot.slane %v3857, 4
      %v3860 = vor.u32 %v3859, %v3855
      %v3861 = vrot.slane %v3860, 4
      %v3863 = vshll.u32 %v3734, 16
      %v3865 = vrot.slane %v3863, 5
      %v3866 = vsel %vm238, %v3861, %v3865
      %v3868 = vshrl.u32 %v3735, 16
      %v3870 = vrot.slane %v3868, 4
      %v3871 = vshll.u32 %v3735, 16
      %v3873 = vrot.slane %v3871, 5
      %v3874 = vor.u32 %v3870, %v3873
      %v3875 = vrot.slane %v3874, 4
      %v3877 = vshll.u32 %v3736, 16
      %v3879 = vrot.slane %v3877, 5
      %v3880 = vsel %vm238, %v3875, %v3879
      %v3881 = vshrl.u32 %v3736, 16
      %v3883 = vrot.slane %v3881, 4
      %v3884 = vor.u32 %v3883, %v3879
      %v3885 = vrot.slane %v3884, 4
      %v3887 = vshll.u32 %v3737, 16
      %v3889 = vrot.slane %v3887, 5
      %v3890 = vsel %vm238, %v3885, %v3889
      %v3892 = vshrl.u32 %v3738, 16
      %v3894 = vrot.slane %v3892, 4
      %v3895 = vshll.u32 %v3738, 16
      %v3897 = vrot.slane %v3895, 5
      %v3898 = vor.u32 %v3894, %v3897
      %v3899 = vrot.slane %v3898, 4
      %v3901 = vshll.u32 %v3739, 16
      %v3903 = vrot.slane %v3901, 5
      %v3904 = vsel %vm238, %v3899, %v3903
      %v3905 = vshrl.u32 %v3739, 16
      %v3907 = vrot.slane %v3905, 4
      %v3908 = vor.u32 %v3907, %v3903
      %v3909 = vrot.slane %v3908, 4
      %v3911 = vshll.u32 %v3740, 16
      %v3913 = vrot.slane %v3911, 5
      %v3914 = vsel %vm238, %v3909, %v3913
      %v3916 = vshrl.u32 %v3741, 16
      %v3918 = vrot.slane %v3916, 4
      %v3919 = vshll.u32 %v3741, 16
      %v3921 = vrot.slane %v3919, 5
      %v3922 = vor.u32 %v3918, %v3921
      %v3923 = vrot.slane %v3922, 4
      %v3925 = vshll.u32 %v3742, 16
      %v3927 = vrot.slane %v3925, 5
      %v3928 = vsel %vm238, %v3923, %v3927
      %v3929 = vshrl.u32 %v3742, 16
      %v3931 = vrot.slane %v3929, 4
      %v3932 = vor.u32 %v3931, %v3927
      %v3933 = vrot.slane %v3932, 4
      %v3935 = vshll.u32 %v3743, 16
      %v3937 = vrot.slane %v3935, 5
      %v3938 = vsel %vm238, %v3933, %v3937
      %v3940 = vshrl.u32 %v3744, 16
      %v3942 = vrot.slane %v3940, 4
      %v3943 = vshll.u32 %v3744, 16
      %v3945 = vrot.slane %v3943, 5
      %v3946 = vor.u32 %v3942, %v3945
      %v3947 = vrot.slane %v3946, 4
      %v3949 = vshll.u32 %v3745, 16
      %v3951 = vrot.slane %v3949, 5
      %v3952 = vsel %vm238, %v3947, %v3951
      %v3953 = vshrl.u32 %v3745, 16
      %v3955 = vrot.slane %v3953, 4
      %v3956 = vor.u32 %v3955, %v3951
      %v3957 = vrot.slane %v3956, 4
      %v3959 = vshll.u32 %v3746, 16
      %v3961 = vrot.slane %v3959, 5
      %v3962 = vsel %vm238, %v3957, %v3961
      %v3964 = vshrl.u32 %v3747, 16
      %v3966 = vrot.slane %v3964, 4
      %v3967 = vshll.u32 %v3747, 16
      %v3969 = vrot.slane %v3967, 5
      %v3970 = vor.u32 %v3966, %v3969
      %v3971 = vrot.slane %v3970, 4
      %v3973 = vshll.u32 %v3748, 16
      %v3975 = vrot.slane %v3973, 5
      %v3976 = vsel %vm238, %v3971, %v3975
      %v3977 = vshrl.u32 %v3748, 16
      %v3979 = vrot.slane %v3977, 4
      %v3980 = vor.u32 %v3979, %v3975
      %v3981 = vrot.slane %v3980, 4
      %v3983 = vshll.u32 %v3749, 16
      %v3985 = vrot.slane %v3983, 5
      %v3986 = vsel %vm238, %v3981, %v3985
      %v3988 = vshrl.u32 %v3750, 16
      %v3990 = vrot.slane %v3988, 4
      %v3991 = vshll.u32 %v3750, 16
      %v3993 = vrot.slane %v3991, 5
      %v3994 = vor.u32 %v3990, %v3993
      %v3995 = vrot.slane %v3994, 4
      %v3997 = vshll.u32 %v3751, 16
      %v3999 = vrot.slane %v3997, 5
      %v4000 = vsel %vm238, %v3995, %v3999
      %v4001 = vshrl.u32 %v3751, 16
      %v4003 = vrot.slane %v4001, 4
      %v4004 = vor.u32 %v4003, %v3999
      %v4005 = vrot.slane %v4004, 4
      %v4007 = vshll.u32 %v3752, 16
      %v4009 = vrot.slane %v4007, 5
      %v4010 = vsel %vm238, %v4005, %v4009
      %v4012 = vshrl.u32 %v3753, 16
      %v4014 = vrot.slane %v4012, 4
      %v4015 = vshll.u32 %v3753, 16
      %v4017 = vrot.slane %v4015, 5
      %v4018 = vor.u32 %v4014, %v4017
      %v4019 = vrot.slane %v4018, 4
      %v4021 = vshll.u32 %v3754, 16
      %v4023 = vrot.slane %v4021, 5
      %v4024 = vsel %vm238, %v4019, %v4023
      %v4025 = vshrl.u32 %v3754, 16
      %v4027 = vrot.slane %v4025, 4
      %v4028 = vor.u32 %v4027, %v4023
      %v4029 = vrot.slane %v4028, 4
      %v4031 = vshll.u32 %v3755, 16
      %v4033 = vrot.slane %v4031, 5
      %v4034 = vsel %vm238, %v4029, %v4033
      %v4036 = vshrl.u32 %v3756, 16
      %v4038 = vrot.slane %v4036, 4
      %v4039 = vshll.u32 %v3756, 16
      %v4041 = vrot.slane %v4039, 5
      %v4042 = vor.u32 %v4038, %v4041
      %v4043 = vrot.slane %v4042, 4
      %v4045 = vshll.u32 %v3757, 16
      %v4047 = vrot.slane %v4045, 5
      %v4048 = vsel %vm238, %v4043, %v4047
      %v4049 = vshrl.u32 %v3757, 16
      %v4051 = vrot.slane %v4049, 4
      %v4052 = vor.u32 %v4051, %v4047
      %v4053 = vrot.slane %v4052, 4
      %v4055 = vshll.u32 %v3758, 16
      %v4057 = vrot.slane %v4055, 5
      %v4058 = vsel %vm238, %v4053, %v4057
      %v4060 = vshrl.u32 %v3759, 16
      %v4062 = vrot.slane %v4060, 4
      %v4063 = vshll.u32 %v3759, 16
      %v4065 = vrot.slane %v4063, 5
      %v4066 = vor.u32 %v4062, %v4065
      %v4067 = vrot.slane %v4066, 4
      %v4069 = vshll.u32 %v3760, 16
      %v4071 = vrot.slane %v4069, 5
      %v4072 = vsel %vm238, %v4067, %v4071
      %v4073 = vshrl.u32 %v3760, 16
      %v4075 = vrot.slane %v4073, 4
      %v4076 = vor.u32 %v4075, %v4071
      %v4077 = vrot.slane %v4076, 4
      %v4079 = vshll.u32 %v3761, 16
      %v4081 = vrot.slane %v4079, 5
      %v4082 = vsel %vm238, %v4077, %v4081
      %v4084 = vshrl.u32 %v3762, 16
      %v4086 = vrot.slane %v4084, 4
      %v4087 = vshll.u32 %v3762, 16
      %v4089 = vrot.slane %v4087, 5
      %v4090 = vor.u32 %v4086, %v4089
      %v4091 = vrot.slane %v4090, 4
      %v4093 = vshll.u32 %v3763, 16
      %v4095 = vrot.slane %v4093, 5
      %v4096 = vsel %vm238, %v4091, %v4095
      %v4097 = vshrl.u32 %v3763, 16
      %v4099 = vrot.slane %v4097, 4
      %v4100 = vor.u32 %v4099, %v4095
      %v4101 = vrot.slane %v4100, 4
      %v4103 = vshll.u32 %v3764, 16
      %v4105 = vrot.slane %v4103, 5
      %v4106 = vsel %vm238, %v4101, %v4105
      %v4108 = vshrl.u32 %v3765, 16
      %v4110 = vrot.slane %v4108, 4
      %v4111 = vshll.u32 %v3765, 16
      %v4113 = vrot.slane %v4111, 5
      %v4114 = vor.u32 %v4110, %v4113
      %v4115 = vrot.slane %v4114, 4
      %v4117 = vshll.u32 %v3766, 16
      %v4119 = vrot.slane %v4117, 5
      %v4120 = vsel %vm238, %v4115, %v4119
      %v4121 = vshrl.u32 %v3766, 16
      %v4123 = vrot.slane %v4121, 4
      %v4124 = vor.u32 %v4123, %v4119
      %v4125 = vrot.slane %v4124, 4
      %v4127 = vshll.u32 %v3767, 16
      %v4129 = vrot.slane %v4127, 5
      %v4130 = vsel %vm238, %v4125, %v4129
      %v4132 = vshrl.u32 %v3768, 16
      %v4134 = vrot.slane %v4132, 4
      %v4135 = vshll.u32 %v3768, 16
      %v4137 = vrot.slane %v4135, 5
      %v4138 = vor.u32 %v4134, %v4137
      %v4139 = vrot.slane %v4138, 4
      %v4141 = vshll.u32 %v3769, 16
      %v4143 = vrot.slane %v4141, 5
      %v4144 = vsel %vm238, %v4139, %v4143
      %v4145 = vshrl.u32 %v3769, 16
      %v4147 = vrot.slane %v4145, 4
      %v4148 = vor.u32 %v4147, %v4143
      %v4149 = vrot.slane %v4148, 4
      %v4151 = vshll.u32 %v3770, 16
      %v4153 = vrot.slane %v4151, 5
      %v4154 = vsel %vm238, %v4149, %v4153
      %v4155 = vld [vmem:[%s1 + $0x1c0] sm:$0xf]
      %v4156 = vld [vmem:[%s1 + $0x1c4] sm:$0xf]
      %v4157 = vld [vmem:[%s1 + $0x1c8] sm:$0xf]
      %v4158 = vld [vmem:[%s1 + $0x1cc] sm:$0xf]
      %v4159 = vld [vmem:[%s1 + $0x1d0] sm:$0xf]
      %v4160 = vld [vmem:[%s1 + $0x1d4] sm:$0xf]
      %v4161 = vld [vmem:[%s1 + $0x1d8] sm:$0xf]
      %v4162 = vld [vmem:[%s1 + $0x1dc] sm:$0xf]
      %v4163 = vld [vmem:[%s1 + $0x1e0] sm:$0xf]
      %v4164 = vld [vmem:[%s1 + $0x1e4] sm:$0xf]
      %v4165 = vld [vmem:[%s1 + $0x1e8] sm:$0xf]
      %v4166 = vld [vmem:[%s1 + $0x1ec] sm:$0xf]
      %v4167 = vld [vmem:[%s1 + $0x1f0] sm:$0xf]
      %v4168 = vld [vmem:[%s1 + $0x1f4] sm:$0xf]
      %v4169 = vld [vmem:[%s1 + $0x1f8] sm:$0xf]
      %v4170 = vld [vmem:[%s1 + $0x1fc] sm:$0xf]
      %v4171 = vunpack.c.l.b16 %v3784
      %v4172 = vunpack.c.l.b16 %v3794
      %v4173 = vunpack.c.l.b16 %v3808
      %v4174 = vunpack.c.l.b16 %v3818
      %v4175 = vunpack.c.l.b16 %v3832
      %v4176 = vunpack.c.l.b16 %v3842
      %v4177 = vunpack.c.l.b16 %v3856
      %v4178 = vunpack.c.l.b16 %v3866
      %v4179 = vunpack.c.l.b16 %v3880
      %v4180 = vunpack.c.l.b16 %v3890
      %v4181 = vunpack.c.l.b16 %v3904
      %v4182 = vunpack.c.l.b16 %v3914
      %v4183 = vunpack.c.l.b16 %v3928
      %v4184 = vunpack.c.l.b16 %v3938
      %v4185 = vunpack.c.l.b16 %v3952
      %v4186 = vunpack.c.l.b16 %v3962
      %v4187 = vunpack.c.l.b16 %v3976
      %v4188 = vunpack.c.l.b16 %v3986
      %v4189 = vunpack.c.l.b16 %v4000
      %v4190 = vunpack.c.l.b16 %v4010
      %v4191 = vunpack.c.l.b16 %v4024
      %v4192 = vunpack.c.l.b16 %v4034
      %v4193 = vunpack.c.l.b16 %v4048
      %v4194 = vunpack.c.l.b16 %v4058
      %v4195 = vunpack.c.l.b16 %v4072
      %v4196 = vunpack.c.l.b16 %v4082
      %v4197 = vunpack.c.l.b16 %v4096
      %v4198 = vunpack.c.l.b16 %v4106
      %v4199 = vunpack.c.l.b16 %v4120
      %v4200 = vunpack.c.l.b16 %v4130
      %v4201 = vunpack.c.l.b16 %v4144
      %v4202 = vunpack.c.l.b16 %v4154
      %v4203 = vpack.c.b16 %v4172, %v4171
      %v4204 = vpack.c.b16 %v4174, %v4173
      %v4205 = vpack.c.b16 %v4176, %v4175
      %v4206 = vpack.c.b16 %v4178, %v4177
      %v4207 = vpack.c.b16 %v4180, %v4179
      %v4208 = vpack.c.b16 %v4182, %v4181
      %v4209 = vpack.c.b16 %v4184, %v4183
      %v4210 = vpack.c.b16 %v4186, %v4185
      %v4211 = vpack.c.b16 %v4188, %v4187
      %v4212 = vpack.c.b16 %v4190, %v4189
      %v4213 = vpack.c.b16 %v4192, %v4191
      %v4214 = vpack.c.b16 %v4194, %v4193
      %v4215 = vpack.c.b16 %v4196, %v4195
      %v4216 = vpack.c.b16 %v4198, %v4197
      %v4217 = vpack.c.b16 %v4200, %v4199
      %v4218 = vpack.c.b16 %v4202, %v4201
      %v4251 = vunpack.c.l.b16 %v4155
      %v4252 = vunpack.c.l.b16 %v4156
      %v4253 = vunpack.c.l.b16 %v4157
      %v4254 = vunpack.c.l.b16 %v4158
      %v4255 = vunpack.c.l.b16 %v4159
      %v4256 = vunpack.c.l.b16 %v4160
      %v4257 = vunpack.c.l.b16 %v4161
      %v4258 = vunpack.c.l.b16 %v4162
      %v4259 = vunpack.c.l.b16 %v4163
      %v4260 = vunpack.c.l.b16 %v4164
      %v4261 = vunpack.c.l.b16 %v4165
      %v4262 = vunpack.c.l.b16 %v4166
      %v4263 = vunpack.c.l.b16 %v4167
      %v4264 = vunpack.c.l.b16 %v4168
      %v4265 = vunpack.c.l.b16 %v4169
      %v4266 = vunpack.c.l.b16 %v4170
      %v4267 = vpack.c.b16 %v4252, %v4251
      %v4268 = vpack.c.b16 %v4254, %v4253
      %v4269 = vpack.c.b16 %v4256, %v4255
      %v4270 = vpack.c.b16 %v4258, %v4257
      %v4271 = vpack.c.b16 %v4260, %v4259
      %v4272 = vpack.c.b16 %v4262, %v4261
      %v4273 = vpack.c.b16 %v4264, %v4263
      %v4274 = vpack.c.b16 %v4266, %v4265
      %4283 = vmatprep.subr.bf16.mxu0 0
      %4284 = vmatpush1.bf16.msra.mxu0 %v4274
      %4285 = vmatprep.subr.bf16.mxu0 0
      %4286 = vmatpush1.bf16.msra.mxu0 %v4273
      %4287 = vmatprep.subr.bf16.mxu0 0
      %4288 = vmatpush1.bf16.msra.mxu0 %v4272
      %4289 = vmatprep.subr.bf16.mxu0 0
      %4290 = vmatpush1.bf16.msra.mxu0 %v4271
      %4291 = vmatprep.subr.bf16.mxu0 0
      %4292 = vmatpush1.bf16.msra.mxu0 %v4270
      %4293 = vmatprep.subr.bf16.mxu0 0
      %4294 = vmatpush1.bf16.msra.mxu0 %v4269
      %4295 = vmatprep.subr.bf16.mxu0 0
      %4296 = vmatpush1.bf16.msra.mxu0 %v4268
      %4297 = vmatprep.subr.bf16.mxu0 0
      %4298 = vmatpush1.bf16.msra.mxu0 %v4267
      %4299 = vmatprep.subr.bf16.mxu0 0
      %4300 = vmatpush2.bf16.msra.mxu0 0
      %4301 = vmatprep.subr.bf16.mxu0 0
      %4302 = vmatpush2.bf16.msra.mxu0 0
      %4303 = vmatprep.subr.bf16.mxu0 0
      %4304 = vmatpush2.bf16.msra.mxu0 0
      %4305 = vmatprep.subr.bf16.mxu0 0
      %4306 = vmatpush2.bf16.msra.mxu0 0
      %4307 = vmatprep.subr.bf16.mxu0 0
      %4308 = vmatpush2.bf16.msra.mxu0 0
      %4309 = vmatprep.subr.bf16.mxu0 0
      %4310 = vmatpush2.bf16.msra.mxu0 0
      %4311 = vmatprep.subr.bf16.mxu0 0
      %4312 = vmatpush2.bf16.msra.mxu0 0
      %4313 = vmatprep.subr.bf16.mxu0 0
      %4314 = vmatpush2.bf16.msra.mxu0 0
      %4315 = vmatprep.mubr.bf16.mxu0 0
      %4316 = vmatmul.mubr.bf16.gmra.mxu0 %v4203
      %v4317 = vpop.f32.mrf.mxu0
      %v4318 = vadd.f32 0.0, %v4317
      %v4319 = vpop.f32.mrf.mxu0
      %v4320 = vpop.f32.mrf.mxu0
      %v4321 = vadd.f32 0.0, %v4320
      %v4322 = vpop.f32.mrf.mxu0
      %4323 = vmatprep.mubr.bf16.mxu0 0
      %4324 = vmatmul.mubr.bf16.gmra.mxu0 %v4204
      %v4325 = vpop.f32.mrf.mxu0
      %v4326 = vadd.f32 0.0, %v4325
      %v4327 = vpop.f32.mrf.mxu0
      %v4328 = vpop.f32.mrf.mxu0
      %v4329 = vadd.f32 0.0, %v4328
      %v4330 = vpop.f32.mrf.mxu0
      %4331 = vmatprep.mubr.bf16.mxu0 0
      %4332 = vmatmul.mubr.bf16.gmra.mxu0 %v4205
      %v4333 = vpop.f32.mrf.mxu0
      %v4334 = vadd.f32 0.0, %v4333
      %v4335 = vpop.f32.mrf.mxu0
      %v4336 = vpop.f32.mrf.mxu0
      %v4337 = vadd.f32 0.0, %v4336
      %v4338 = vpop.f32.mrf.mxu0
      %4339 = vmatprep.mubr.bf16.mxu0 0
      %4340 = vmatmul.mubr.bf16.gmra.mxu0 %v4206
      %v4341 = vpop.f32.mrf.mxu0
      %v4342 = vadd.f32 0.0, %v4341
      %v4343 = vpop.f32.mrf.mxu0
      %v4344 = vpop.f32.mrf.mxu0
      %v4345 = vadd.f32 0.0, %v4344
      %v4346 = vpop.f32.mrf.mxu0
      %4347 = vmatprep.mubr.bf16.mxu0 0
      %4348 = vmatmul.mubr.bf16.gmra.mxu0 %v4207
      %v4349 = vpop.f32.mrf.mxu0
      %v4350 = vadd.f32 0.0, %v4349
      %v4351 = vpop.f32.mrf.mxu0
      %v4352 = vpop.f32.mrf.mxu0
      %v4353 = vadd.f32 0.0, %v4352
      %v4354 = vpop.f32.mrf.mxu0
      %4355 = vmatprep.mubr.bf16.mxu0 0
      %4356 = vmatmul.mubr.bf16.gmra.mxu0 %v4208
      %v4357 = vpop.f32.mrf.mxu0
      %v4358 = vadd.f32 0.0, %v4357
      %v4359 = vpop.f32.mrf.mxu0
      %v4360 = vpop.f32.mrf.mxu0
      %v4361 = vadd.f32 0.0, %v4360
      %v4362 = vpop.f32.mrf.mxu0
      %4363 = vmatprep.mubr.bf16.mxu0 0
      %4364 = vmatmul.mubr.bf16.gmra.mxu0 %v4209
      %v4365 = vpop.f32.mrf.mxu0
      %v4366 = vadd.f32 0.0, %v4365
      %v4367 = vpop.f32.mrf.mxu0
      %v4368 = vpop.f32.mrf.mxu0
      %v4369 = vadd.f32 0.0, %v4368
      %v4370 = vpop.f32.mrf.mxu0
      %4371 = vmatprep.mubr.bf16.mxu0 0
      %4372 = vmatmul.mubr.bf16.gmra.mxu0 %v4210
      %v4373 = vpop.f32.mrf.mxu0
      %v4374 = vadd.f32 0.0, %v4373
      %v4375 = vpop.f32.mrf.mxu0
      %v4376 = vpop.f32.mrf.mxu0
      %v4377 = vadd.f32 0.0, %v4376
      %v4378 = vpop.f32.mrf.mxu0
      %4379 = vmatprep.mubr.bf16.mxu0 0
      %4380 = vmatmul.mubr.bf16.gmra.mxu0 %v4211
      %v4381 = vpop.f32.mrf.mxu0
      %v4382 = vadd.f32 0.0, %v4381
      %v4383 = vpop.f32.mrf.mxu0
      %v4384 = vpop.f32.mrf.mxu0
      %v4385 = vadd.f32 0.0, %v4384
      %v4386 = vpop.f32.mrf.mxu0
      %4387 = vmatprep.mubr.bf16.mxu0 0
      %4388 = vmatmul.mubr.bf16.gmra.mxu0 %v4212
      %v4389 = vpop.f32.mrf.mxu0
      %v4390 = vadd.f32 0.0, %v4389
      %v4391 = vpop.f32.mrf.mxu0
      %v4392 = vpop.f32.mrf.mxu0
      %v4393 = vadd.f32 0.0, %v4392
      %v4394 = vpop.f32.mrf.mxu0
      %4395 = vmatprep.mubr.bf16.mxu0 0
      %4396 = vmatmul.mubr.bf16.gmra.mxu0 %v4213
      %v4397 = vpop.f32.mrf.mxu0
      %v4398 = vadd.f32 0.0, %v4397
      %v4399 = vpop.f32.mrf.mxu0
      %v4400 = vpop.f32.mrf.mxu0
      %v4401 = vadd.f32 0.0, %v4400
      %v4402 = vpop.f32.mrf.mxu0
      %4403 = vmatprep.mubr.bf16.mxu0 0
      %4404 = vmatmul.mubr.bf16.gmra.mxu0 %v4214
      %v4405 = vpop.f32.mrf.mxu0
      %v4406 = vadd.f32 0.0, %v4405
      %v4407 = vpop.f32.mrf.mxu0
      %v4408 = vpop.f32.mrf.mxu0
      %v4409 = vadd.f32 0.0, %v4408
      %v4410 = vpop.f32.mrf.mxu0
      %4411 = vmatprep.mubr.bf16.mxu0 0
      %4412 = vmatmul.mubr.bf16.gmra.mxu0 %v4215
      %v4413 = vpop.f32.mrf.mxu0
      %v4414 = vadd.f32 0.0, %v4413
      %v4415 = vpop.f32.mrf.mxu0
      %v4416 = vpop.f32.mrf.mxu0
      %v4417 = vadd.f32 0.0, %v4416
      %v4418 = vpop.f32.mrf.mxu0
      %4419 = vmatprep.mubr.bf16.mxu0 0
      %4420 = vmatmul.mubr.bf16.gmra.mxu0 %v4216
      %v4421 = vpop.f32.mrf.mxu0
      %v4422 = vadd.f32 0.0, %v4421
      %v4423 = vpop.f32.mrf.mxu0
      %v4424 = vpop.f32.mrf.mxu0
      %v4425 = vadd.f32 0.0, %v4424
      %v4426 = vpop.f32.mrf.mxu0
      %4427 = vmatprep.mubr.bf16.mxu0 0
      %4428 = vmatmul.mubr.bf16.gmra.mxu0 %v4217
      %v4429 = vpop.f32.mrf.mxu0
      %v4430 = vadd.f32 0.0, %v4429
      %v4431 = vpop.f32.mrf.mxu0
      %v4432 = vpop.f32.mrf.mxu0
      %v4433 = vadd.f32 0.0, %v4432
      %v4434 = vpop.f32.mrf.mxu0
      %4435 = vmatprep.mubr.bf16.mxu0 0
      %4436 = vmatmul.mubr.bf16.gmra.mxu0 %v4218
      %v4437 = vpop.f32.mrf.mxu0
      %v4438 = vadd.f32 0.0, %v4437
      %v4439 = vpop.f32.mrf.mxu0
      %v4440 = vpop.f32.mrf.mxu0
      %v4441 = vadd.f32 0.0, %v4440
      %v4442 = vpop.f32.mrf.mxu0
      %4443 = vdwg.mxu0
      %v4444 = vadd.f32 %v3691, %v4318
      %v4445 = vadd.f32 %v3692, %v4321
      %v4446 = vadd.f32 %v3693, %v4326
      %v4447 = vadd.f32 %v3694, %v4329
      %v4448 = vadd.f32 %v3695, %v4334
      %v4449 = vadd.f32 %v3696, %v4337
      %v4450 = vadd.f32 %v3697, %v4342
      %v4451 = vadd.f32 %v3698, %v4345
      %v4452 = vadd.f32 %v3699, %v4350
      %v4453 = vadd.f32 %v3700, %v4353
      %v4454 = vadd.f32 %v3701, %v4358
      %v4455 = vadd.f32 %v3702, %v4361
      %v4456 = vadd.f32 %v3703, %v4366
      %v4457 = vadd.f32 %v3704, %v4369
      %v4458 = vadd.f32 %v3705, %v4374
      %v4459 = vadd.f32 %v3706, %v4377
      %v4460 = vadd.f32 %v3707, %v4382
      %v4461 = vadd.f32 %v3708, %v4385
      %v4462 = vadd.f32 %v3709, %v4390
      %v4463 = vadd.f32 %v3710, %v4393
      %v4464 = vadd.f32 %v3711, %v4398
      %v4465 = vadd.f32 %v3712, %v4401
      %v4466 = vadd.f32 %v3713, %v4406
      %v4467 = vadd.f32 %v3714, %v4409
      %v4468 = vadd.f32 %v3715, %v4414
      %v4469 = vadd.f32 %v3716, %v4417
      %v4470 = vadd.f32 %v3717, %v4422
      %v4471 = vadd.f32 %v3718, %v4425
      %v4472 = vadd.f32 %v3719, %v4430
      %v4473 = vadd.f32 %v3720, %v4433
      %v4474 = vadd.f32 %v3721, %v4438
      %v4475 = vadd.f32 %v3722, %v4441
      %v4476 = vld [vmem:[%s3337] sm:$0xe]
      %v4477 = vld [vmem:[%s3337 + $0xc] sm:$0xe]
      %v4478 = vld [vmem:[%s3337 + $0x18] sm:$0xe]
      %v4479 = vld [vmem:[%s3337 + $0x24] sm:$0xe]
      %v4480 = vld [vmem:[%s3337 + $0x30] sm:$0xe]
      %v4481 = vld [vmem:[%s3337 + $0x3c] sm:$0xe]
      %v4482 = vld [vmem:[%s3337 + $0x48] sm:$0xe]
      %v4483 = vld [vmem:[%s3337 + $0x54] sm:$0xe]
      %v4484 = vld [vmem:[%s3337 + $0x60] sm:$0xe]
      %v4485 = vld [vmem:[%s3337 + $0x6c] sm:$0xe]
      %v4486 = vld [vmem:[%s3337 + $0x78] sm:$0xe]
      %v4487 = vld [vmem:[%s3337 + $0x84] sm:$0xe]
      %v4488 = vld [vmem:[%s3337 + $0x90] sm:$0xe]
      %v4489 = vld [vmem:[%s3337 + $0x9c] sm:$0xe]
      %v4490 = vld [vmem:[%s3337 + $0xa8] sm:$0xe]
      %v4491 = vld [vmem:[%s3337 + $0xb4] sm:$0xe]
      %v4540 = vrot.slane %v4476, 5
      %v4541 = vrot.slane %v4540, 4
      %v4542 = vrot.slane %v3724, 5
      %v4543 = vsel %vm1267, %v4541, %v4542
      %v4544 = vrot.slane %v4542, 4
      %v4545 = vrot.slane %v3725, 5
      %v4546 = vsel %vm1267, %v4544, %v4545
      %v4547 = vrot.slane %v4477, 5
      %v4548 = vrot.slane %v4547, 4
      %v4549 = vrot.slane %v3727, 5
      %v4550 = vsel %vm1267, %v4548, %v4549
      %v4551 = vrot.slane %v4549, 4
      %v4552 = vrot.slane %v3728, 5
      %v4553 = vsel %vm1267, %v4551, %v4552
      %v4554 = vrot.slane %v4478, 5
      %v4555 = vrot.slane %v4554, 4
      %v4556 = vrot.slane %v3730, 5
      %v4557 = vsel %vm1267, %v4555, %v4556
      %v4558 = vrot.slane %v4556, 4
      %v4559 = vrot.slane %v3731, 5
      %v4560 = vsel %vm1267, %v4558, %v4559
      %v4561 = vrot.slane %v4479, 5
      %v4562 = vrot.slane %v4561, 4
      %v4563 = vrot.slane %v3733, 5
      %v4564 = vsel %vm1267, %v4562, %v4563
      %v4565 = vrot.slane %v4563, 4
      %v4566 = vrot.slane %v3734, 5
      %v4567 = vsel %vm1267, %v4565, %v4566
      %v4568 = vrot.slane %v4480, 5
      %v4569 = vrot.slane %v4568, 4
      %v4570 = vrot.slane %v3736, 5
      %v4571 = vsel %vm1267, %v4569, %v4570
      %v4572 = vrot.slane %v4570, 4
      %v4573 = vrot.slane %v3737, 5
      %v4574 = vsel %vm1267, %v4572, %v4573
      %v4575 = vrot.slane %v4481, 5
      %v4576 = vrot.slane %v4575, 4
      %v4577 = vrot.slane %v3739, 5
      %v4578 = vsel %vm1267, %v4576, %v4577
      %v4579 = vrot.slane %v4577, 4
      %v4580 = vrot.slane %v3740, 5
      %v4581 = vsel %vm1267, %v4579, %v4580
      %v4582 = vrot.slane %v4482, 5
      %v4583 = vrot.slane %v4582, 4
      %v4584 = vrot.slane %v3742, 5
      %v4585 = vsel %vm1267, %v4583, %v4584
      %v4586 = vrot.slane %v4584, 4
      %v4587 = vrot.slane %v3743, 5
      %v4588 = vsel %vm1267, %v4586, %v4587
      %v4589 = vrot.slane %v4483, 5
      %v4590 = vrot.slane %v4589, 4
      %v4591 = vrot.slane %v3745, 5
      %v4592 = vsel %vm1267, %v4590, %v4591
      %v4593 = vrot.slane %v4591, 4
      %v4594 = vrot.slane %v3746, 5
      %v4595 = vsel %vm1267, %v4593, %v4594
      %v4596 = vrot.slane %v4484, 5
      %v4597 = vrot.slane %v4596, 4
      %v4598 = vrot.slane %v3748, 5
      %v4599 = vsel %vm1267, %v4597, %v4598
      %v4600 = vrot.slane %v4598, 4
      %v4601 = vrot.slane %v3749, 5
      %v4602 = vsel %vm1267, %v4600, %v4601
      %v4603 = vrot.slane %v4485, 5
      %v4604 = vrot.slane %v4603, 4
      %v4605 = vrot.slane %v3751, 5
      %v4606 = vsel %vm1267, %v4604, %v4605
      %v4607 = vrot.slane %v4605, 4
      %v4608 = vrot.slane %v3752, 5
      %v4609 = vsel %vm1267, %v4607, %v4608
      %v4610 = vrot.slane %v4486, 5
      %v4611 = vrot.slane %v4610, 4
      %v4612 = vrot.slane %v3754, 5
      %v4613 = vsel %vm1267, %v4611, %v4612
      %v4614 = vrot.slane %v4612, 4
      %v4615 = vrot.slane %v3755, 5
      %v4616 = vsel %vm1267, %v4614, %v4615
      %v4617 = vrot.slane %v4487, 5
      %v4618 = vrot.slane %v4617, 4
      %v4619 = vrot.slane %v3757, 5
      %v4620 = vsel %vm1267, %v4618, %v4619
      %v4621 = vrot.slane %v4619, 4
      %v4622 = vrot.slane %v3758, 5
      %v4623 = vsel %vm1267, %v4621, %v4622
      %v4624 = vrot.slane %v4488, 5
      %v4625 = vrot.slane %v4624, 4
      %v4626 = vrot.slane %v3760, 5
      %v4627 = vsel %vm1267, %v4625, %v4626
      %v4628 = vrot.slane %v4626, 4
      %v4629 = vrot.slane %v3761, 5
      %v4630 = vsel %vm1267, %v4628, %v4629
      %v4631 = vrot.slane %v4489, 5
      %v4632 = vrot.slane %v4631, 4
      %v4633 = vrot.slane %v3763, 5
      %v4634 = vsel %vm1267, %v4632, %v4633
      %v4635 = vrot.slane %v4633, 4
      %v4636 = vrot.slane %v3764, 5
      %v4637 = vsel %vm1267, %v4635, %v4636
      %v4638 = vrot.slane %v4490, 5
      %v4639 = vrot.slane %v4638, 4
      %v4640 = vrot.slane %v3766, 5
      %v4641 = vsel %vm1267, %v4639, %v4640
      %v4642 = vrot.slane %v4640, 4
      %v4643 = vrot.slane %v3767, 5
      %v4644 = vsel %vm1267, %v4642, %v4643
      %v4645 = vrot.slane %v4491, 5
      %v4646 = vrot.slane %v4645, 4
      %v4647 = vrot.slane %v3769, 5
      %v4648 = vsel %vm1267, %v4646, %v4647
      %v4649 = vrot.slane %v4647, 4
      %v4650 = vrot.slane %v3770, 5
      %v4651 = vsel %vm1267, %v4649, %v4650
      %v4652 = vld [vmem:[%s1 + $0x200] sm:$0xf]
      %v4653 = vld [vmem:[%s1 + $0x204] sm:$0xf]
      %v4654 = vld [vmem:[%s1 + $0x208] sm:$0xf]
      %v4655 = vld [vmem:[%s1 + $0x20c] sm:$0xf]
      %v4656 = vld [vmem:[%s1 + $0x210] sm:$0xf]
      %v4657 = vld [vmem:[%s1 + $0x214] sm:$0xf]
      %v4658 = vld [vmem:[%s1 + $0x218] sm:$0xf]
      %v4659 = vld [vmem:[%s1 + $0x21c] sm:$0xf]
      %v4660 = vld [vmem:[%s1 + $0x220] sm:$0xf]
      %v4661 = vld [vmem:[%s1 + $0x224] sm:$0xf]
      %v4662 = vld [vmem:[%s1 + $0x228] sm:$0xf]
      %v4663 = vld [vmem:[%s1 + $0x22c] sm:$0xf]
      %v4664 = vld [vmem:[%s1 + $0x230] sm:$0xf]
      %v4665 = vld [vmem:[%s1 + $0x234] sm:$0xf]
      %v4666 = vld [vmem:[%s1 + $0x238] sm:$0xf]
      %v4667 = vld [vmem:[%s1 + $0x23c] sm:$0xf]
      %v4668 = vunpack.c.l.b16 %v4543
      %v4669 = vunpack.c.l.b16 %v4546
      %v4670 = vunpack.c.l.b16 %v4550
      %v4671 = vunpack.c.l.b16 %v4553
      %v4672 = vunpack.c.l.b16 %v4557
      %v4673 = vunpack.c.l.b16 %v4560
      %v4674 = vunpack.c.l.b16 %v4564
      %v4675 = vunpack.c.l.b16 %v4567
      %v4676 = vunpack.c.l.b16 %v4571
      %v4677 = vunpack.c.l.b16 %v4574
      %v4678 = vunpack.c.l.b16 %v4578
      %v4679 = vunpack.c.l.b16 %v4581
      %v4680 = vunpack.c.l.b16 %v4585
      %v4681 = vunpack.c.l.b16 %v4588
      %v4682 = vunpack.c.l.b16 %v4592
      %v4683 = vunpack.c.l.b16 %v4595
      %v4684 = vunpack.c.l.b16 %v4599
      %v4685 = vunpack.c.l.b16 %v4602
      %v4686 = vunpack.c.l.b16 %v4606
      %v4687 = vunpack.c.l.b16 %v4609
      %v4688 = vunpack.c.l.b16 %v4613
      %v4689 = vunpack.c.l.b16 %v4616
      %v4690 = vunpack.c.l.b16 %v4620
      %v4691 = vunpack.c.l.b16 %v4623
      %v4692 = vunpack.c.l.b16 %v4627
      %v4693 = vunpack.c.l.b16 %v4630
      %v4694 = vunpack.c.l.b16 %v4634
      %v4695 = vunpack.c.l.b16 %v4637
      %v4696 = vunpack.c.l.b16 %v4641
      %v4697 = vunpack.c.l.b16 %v4644
      %v4698 = vunpack.c.l.b16 %v4648
      %v4699 = vunpack.c.l.b16 %v4651
      %v4700 = vpack.c.b16 %v4669, %v4668
      %v4701 = vpack.c.b16 %v4671, %v4670
      %v4702 = vpack.c.b16 %v4673, %v4672
      %v4703 = vpack.c.b16 %v4675, %v4674
      %v4704 = vpack.c.b16 %v4677, %v4676
      %v4705 = vpack.c.b16 %v4679, %v4678
      %v4706 = vpack.c.b16 %v4681, %v4680
      %v4707 = vpack.c.b16 %v4683, %v4682
      %v4708 = vpack.c.b16 %v4685, %v4684
      %v4709 = vpack.c.b16 %v4687, %v4686
      %v4710 = vpack.c.b16 %v4689, %v4688
      %v4711 = vpack.c.b16 %v4691, %v4690
      %v4712 = vpack.c.b16 %v4693, %v4692
      %v4713 = vpack.c.b16 %v4695, %v4694
      %v4714 = vpack.c.b16 %v4697, %v4696
      %v4715 = vpack.c.b16 %v4699, %v4698
      %v4748 = vunpack.c.l.b16 %v4652
      %v4749 = vunpack.c.l.b16 %v4653
      %v4750 = vunpack.c.l.b16 %v4654
      %v4751 = vunpack.c.l.b16 %v4655
      %v4752 = vunpack.c.l.b16 %v4656
      %v4753 = vunpack.c.l.b16 %v4657
      %v4754 = vunpack.c.l.b16 %v4658
      %v4755 = vunpack.c.l.b16 %v4659
      %v4756 = vunpack.c.l.b16 %v4660
      %v4757 = vunpack.c.l.b16 %v4661
      %v4758 = vunpack.c.l.b16 %v4662
      %v4759 = vunpack.c.l.b16 %v4663
      %v4760 = vunpack.c.l.b16 %v4664
      %v4761 = vunpack.c.l.b16 %v4665
      %v4762 = vunpack.c.l.b16 %v4666
      %v4763 = vunpack.c.l.b16 %v4667
      %v4764 = vpack.c.b16 %v4749, %v4748
      %v4765 = vpack.c.b16 %v4751, %v4750
      %v4766 = vpack.c.b16 %v4753, %v4752
      %v4767 = vpack.c.b16 %v4755, %v4754
      %v4768 = vpack.c.b16 %v4757, %v4756
      %v4769 = vpack.c.b16 %v4759, %v4758
      %v4770 = vpack.c.b16 %v4761, %v4760
      %v4771 = vpack.c.b16 %v4763, %v4762
      %4780 = vmatprep.subr.bf16.mxu0 0
      %4781 = vmatpush1.bf16.msra.mxu0 %v4771
      %4782 = vmatprep.subr.bf16.mxu0 0
      %4783 = vmatpush1.bf16.msra.mxu0 %v4770
      %4784 = vmatprep.subr.bf16.mxu0 0
      %4785 = vmatpush1.bf16.msra.mxu0 %v4769
      %4786 = vmatprep.subr.bf16.mxu0 0
      %4787 = vmatpush1.bf16.msra.mxu0 %v4768
      %4788 = vmatprep.subr.bf16.mxu0 0
      %4789 = vmatpush1.bf16.msra.mxu0 %v4767
      %4790 = vmatprep.subr.bf16.mxu0 0
      %4791 = vmatpush1.bf16.msra.mxu0 %v4766
      %4792 = vmatprep.subr.bf16.mxu0 0
      %4793 = vmatpush1.bf16.msra.mxu0 %v4765
      %4794 = vmatprep.subr.bf16.mxu0 0
      %4795 = vmatpush1.bf16.msra.mxu0 %v4764
      %4796 = vmatprep.subr.bf16.mxu0 0
      %4797 = vmatpush2.bf16.msra.mxu0 0
      %4798 = vmatprep.subr.bf16.mxu0 0
      %4799 = vmatpush2.bf16.msra.mxu0 0
      %4800 = vmatprep.subr.bf16.mxu0 0
      %4801 = vmatpush2.bf16.msra.mxu0 0
      %4802 = vmatprep.subr.bf16.mxu0 0
      %4803 = vmatpush2.bf16.msra.mxu0 0
      %4804 = vmatprep.subr.bf16.mxu0 0
      %4805 = vmatpush2.bf16.msra.mxu0 0
      %4806 = vmatprep.subr.bf16.mxu0 0
      %4807 = vmatpush2.bf16.msra.mxu0 0
      %4808 = vmatprep.subr.bf16.mxu0 0
      %4809 = vmatpush2.bf16.msra.mxu0 0
      %4810 = vmatprep.subr.bf16.mxu0 0
      %4811 = vmatpush2.bf16.msra.mxu0 0
      %4812 = vmatprep.mubr.bf16.mxu0 0
      %4813 = vmatmul.mubr.bf16.gmra.mxu0 %v4700
      %v4814 = vpop.f32.mrf.mxu0
      %v4815 = vadd.f32 0.0, %v4814
      %v4816 = vpop.f32.mrf.mxu0
      %v4817 = vpop.f32.mrf.mxu0
      %v4818 = vadd.f32 0.0, %v4817
      %v4819 = vpop.f32.mrf.mxu0
      %4820 = vmatprep.mubr.bf16.mxu0 0
      %4821 = vmatmul.mubr.bf16.gmra.mxu0 %v4701
      %v4822 = vpop.f32.mrf.mxu0
      %v4823 = vadd.f32 0.0, %v4822
      %v4824 = vpop.f32.mrf.mxu0
      %v4825 = vpop.f32.mrf.mxu0
      %v4826 = vadd.f32 0.0, %v4825
      %v4827 = vpop.f32.mrf.mxu0
      %4828 = vmatprep.mubr.bf16.mxu0 0
      %4829 = vmatmul.mubr.bf16.gmra.mxu0 %v4702
      %v4830 = vpop.f32.mrf.mxu0
      %v4831 = vadd.f32 0.0, %v4830
      %v4832 = vpop.f32.mrf.mxu0
      %v4833 = vpop.f32.mrf.mxu0
      %v4834 = vadd.f32 0.0, %v4833
      %v4835 = vpop.f32.mrf.mxu0
      %4836 = vmatprep.mubr.bf16.mxu0 0
      %4837 = vmatmul.mubr.bf16.gmra.mxu0 %v4703
      %v4838 = vpop.f32.mrf.mxu0
      %v4839 = vadd.f32 0.0, %v4838
      %v4840 = vpop.f32.mrf.mxu0
      %v4841 = vpop.f32.mrf.mxu0
      %v4842 = vadd.f32 0.0, %v4841
      %v4843 = vpop.f32.mrf.mxu0
      %4844 = vmatprep.mubr.bf16.mxu0 0
      %4845 = vmatmul.mubr.bf16.gmra.mxu0 %v4704
      %v4846 = vpop.f32.mrf.mxu0
      %v4847 = vadd.f32 0.0, %v4846
      %v4848 = vpop.f32.mrf.mxu0
      %v4849 = vpop.f32.mrf.mxu0
      %v4850 = vadd.f32 0.0, %v4849
      %v4851 = vpop.f32.mrf.mxu0
      %4852 = vmatprep.mubr.bf16.mxu0 0
      %4853 = vmatmul.mubr.bf16.gmra.mxu0 %v4705
      %v4854 = vpop.f32.mrf.mxu0
      %v4855 = vadd.f32 0.0, %v4854
      %v4856 = vpop.f32.mrf.mxu0
      %v4857 = vpop.f32.mrf.mxu0
      %v4858 = vadd.f32 0.0, %v4857
      %v4859 = vpop.f32.mrf.mxu0
      %4860 = vmatprep.mubr.bf16.mxu0 0
      %4861 = vmatmul.mubr.bf16.gmra.mxu0 %v4706
      %v4862 = vpop.f32.mrf.mxu0
      %v4863 = vadd.f32 0.0, %v4862
      %v4864 = vpop.f32.mrf.mxu0
      %v4865 = vpop.f32.mrf.mxu0
      %v4866 = vadd.f32 0.0, %v4865
      %v4867 = vpop.f32.mrf.mxu0
      %4868 = vmatprep.mubr.bf16.mxu0 0
      %4869 = vmatmul.mubr.bf16.gmra.mxu0 %v4707
      %v4870 = vpop.f32.mrf.mxu0
      %v4871 = vadd.f32 0.0, %v4870
      %v4872 = vpop.f32.mrf.mxu0
      %v4873 = vpop.f32.mrf.mxu0
      %v4874 = vadd.f32 0.0, %v4873
      %v4875 = vpop.f32.mrf.mxu0
      %4876 = vmatprep.mubr.bf16.mxu0 0
      %4877 = vmatmul.mubr.bf16.gmra.mxu0 %v4708
      %v4878 = vpop.f32.mrf.mxu0
      %v4879 = vadd.f32 0.0, %v4878
      %v4880 = vpop.f32.mrf.mxu0
      %v4881 = vpop.f32.mrf.mxu0
      %v4882 = vadd.f32 0.0, %v4881
      %v4883 = vpop.f32.mrf.mxu0
      %4884 = vmatprep.mubr.bf16.mxu0 0
      %4885 = vmatmul.mubr.bf16.gmra.mxu0 %v4709
      %v4886 = vpop.f32.mrf.mxu0
      %v4887 = vadd.f32 0.0, %v4886
      %v4888 = vpop.f32.mrf.mxu0
      %v4889 = vpop.f32.mrf.mxu0
      %v4890 = vadd.f32 0.0, %v4889
      %v4891 = vpop.f32.mrf.mxu0
      %4892 = vmatprep.mubr.bf16.mxu0 0
      %4893 = vmatmul.mubr.bf16.gmra.mxu0 %v4710
      %v4894 = vpop.f32.mrf.mxu0
      %v4895 = vadd.f32 0.0, %v4894
      %v4896 = vpop.f32.mrf.mxu0
      %v4897 = vpop.f32.mrf.mxu0
      %v4898 = vadd.f32 0.0, %v4897
      %v4899 = vpop.f32.mrf.mxu0
      %4900 = vmatprep.mubr.bf16.mxu0 0
      %4901 = vmatmul.mubr.bf16.gmra.mxu0 %v4711
      %v4902 = vpop.f32.mrf.mxu0
      %v4903 = vadd.f32 0.0, %v4902
      %v4904 = vpop.f32.mrf.mxu0
      %v4905 = vpop.f32.mrf.mxu0
      %v4906 = vadd.f32 0.0, %v4905
      %v4907 = vpop.f32.mrf.mxu0
      %4908 = vmatprep.mubr.bf16.mxu0 0
      %4909 = vmatmul.mubr.bf16.gmra.mxu0 %v4712
      %v4910 = vpop.f32.mrf.mxu0
      %v4911 = vadd.f32 0.0, %v4910
      %v4912 = vpop.f32.mrf.mxu0
      %v4913 = vpop.f32.mrf.mxu0
      %v4914 = vadd.f32 0.0, %v4913
      %v4915 = vpop.f32.mrf.mxu0
      %4916 = vmatprep.mubr.bf16.mxu0 0
      %4917 = vmatmul.mubr.bf16.gmra.mxu0 %v4713
      %v4918 = vpop.f32.mrf.mxu0
      %v4919 = vadd.f32 0.0, %v4918
      %v4920 = vpop.f32.mrf.mxu0
      %v4921 = vpop.f32.mrf.mxu0
      %v4922 = vadd.f32 0.0, %v4921
      %v4923 = vpop.f32.mrf.mxu0
      %4924 = vmatprep.mubr.bf16.mxu0 0
      %4925 = vmatmul.mubr.bf16.gmra.mxu0 %v4714
      %v4926 = vpop.f32.mrf.mxu0
      %v4927 = vadd.f32 0.0, %v4926
      %v4928 = vpop.f32.mrf.mxu0
      %v4929 = vpop.f32.mrf.mxu0
      %v4930 = vadd.f32 0.0, %v4929
      %v4931 = vpop.f32.mrf.mxu0
      %4932 = vmatprep.mubr.bf16.mxu0 0
      %4933 = vmatmul.mubr.bf16.gmra.mxu0 %v4715
      %v4934 = vpop.f32.mrf.mxu0
      %v4935 = vadd.f32 0.0, %v4934
      %v4936 = vpop.f32.mrf.mxu0
      %v4937 = vpop.f32.mrf.mxu0
      %v4938 = vadd.f32 0.0, %v4937
      %v4939 = vpop.f32.mrf.mxu0
      %4940 = vdwg.mxu0
      %v4941 = vadd.f32 %v4444, %v4815
      %v4942 = vadd.f32 %v4445, %v4818
      %v4943 = vadd.f32 %v4446, %v4823
      %v4944 = vadd.f32 %v4447, %v4826
      %v4945 = vadd.f32 %v4448, %v4831
      %v4946 = vadd.f32 %v4449, %v4834
      %v4947 = vadd.f32 %v4450, %v4839
      %v4948 = vadd.f32 %v4451, %v4842
      %v4949 = vadd.f32 %v4452, %v4847
      %v4950 = vadd.f32 %v4453, %v4850
      %v4951 = vadd.f32 %v4454, %v4855
      %v4952 = vadd.f32 %v4455, %v4858
      %v4953 = vadd.f32 %v4456, %v4863
      %v4954 = vadd.f32 %v4457, %v4866
      %v4955 = vadd.f32 %v4458, %v4871
      %v4956 = vadd.f32 %v4459, %v4874
      %v4957 = vadd.f32 %v4460, %v4879
      %v4958 = vadd.f32 %v4461, %v4882
      %v4959 = vadd.f32 %v4462, %v4887
      %v4960 = vadd.f32 %v4463, %v4890
      %v4961 = vadd.f32 %v4464, %v4895
      %v4962 = vadd.f32 %v4465, %v4898
      %v4963 = vadd.f32 %v4466, %v4903
      %v4964 = vadd.f32 %v4467, %v4906
      %v4965 = vadd.f32 %v4468, %v4911
      %v4966 = vadd.f32 %v4469, %v4914
      %v4967 = vadd.f32 %v4470, %v4919
      %v4968 = vadd.f32 %v4471, %v4922
      %v4969 = vadd.f32 %v4472, %v4927
      %v4970 = vadd.f32 %v4473, %v4930
      %v4971 = vadd.f32 %v4474, %v4935
      %v4972 = vadd.f32 %v4475, %v4938
      %v4973 = vld [vmem:[%s2] sm:$0x1]
      %v4975 = vlaneseq
      %v4976 = vshrl.u32 %v4975, 7
      %v4977 = vsub.s32 0, %v4976
      %v4978 = vrot.slane %v4973, %v4977
      %v4980 = vadd.f32 %v4941, %v4978
      %v4981 = vadd.f32 %v4942, %v4978
      %v4982 = vadd.f32 %v4943, %v4978
      %v4983 = vadd.f32 %v4944, %v4978
      %v4984 = vadd.f32 %v4945, %v4978
      %v4985 = vadd.f32 %v4946, %v4978
      %v4986 = vadd.f32 %v4947, %v4978
      %v4987 = vadd.f32 %v4948, %v4978
      %v4988 = vadd.f32 %v4949, %v4978
      %v4989 = vadd.f32 %v4950, %v4978
      %v4990 = vadd.f32 %v4951, %v4978
      %v4991 = vadd.f32 %v4952, %v4978
      %v4992 = vadd.f32 %v4953, %v4978
      %v4993 = vadd.f32 %v4954, %v4978
      %v4994 = vadd.f32 %v4955, %v4978
      %v4995 = vadd.f32 %v4956, %v4978
      %v4996 = vadd.f32 %v4957, %v4978
      %v4997 = vadd.f32 %v4958, %v4978
      %v4998 = vadd.f32 %v4959, %v4978
      %v4999 = vadd.f32 %v4960, %v4978
      %v5000 = vadd.f32 %v4961, %v4978
      %v5001 = vadd.f32 %v4962, %v4978
      %v5002 = vadd.f32 %v4963, %v4978
      %v5003 = vadd.f32 %v4964, %v4978
      %v5004 = vadd.f32 %v4965, %v4978
      %v5005 = vadd.f32 %v4966, %v4978
      %v5006 = vadd.f32 %v4967, %v4978
      %v5007 = vadd.f32 %v4968, %v4978
      %v5008 = vadd.f32 %v4969, %v4978
      %v5009 = vadd.f32 %v4970, %v4978
      %v5010 = vadd.f32 %v4971, %v4978
      %v5011 = vadd.f32 %v4972, %v4978
      %v5012 = vmax.f32 %v4980, 0.0
      %v5013 = vmax.f32 %v4981, 0.0
      %v5014 = vmax.f32 %v4982, 0.0
      %v5015 = vmax.f32 %v4983, 0.0
      %v5016 = vmax.f32 %v4984, 0.0
      %v5017 = vmax.f32 %v4985, 0.0
      %v5018 = vmax.f32 %v4986, 0.0
      %v5019 = vmax.f32 %v4987, 0.0
      %v5020 = vmax.f32 %v4988, 0.0
      %v5021 = vmax.f32 %v4989, 0.0
      %v5022 = vmax.f32 %v4990, 0.0
      %v5023 = vmax.f32 %v4991, 0.0
      %v5024 = vmax.f32 %v4992, 0.0
      %v5025 = vmax.f32 %v4993, 0.0
      %v5026 = vmax.f32 %v4994, 0.0
      %v5027 = vmax.f32 %v4995, 0.0
      %v5028 = vmax.f32 %v4996, 0.0
      %v5029 = vmax.f32 %v4997, 0.0
      %v5030 = vmax.f32 %v4998, 0.0
      %v5031 = vmax.f32 %v4999, 0.0
      %v5032 = vmax.f32 %v5000, 0.0
      %v5033 = vmax.f32 %v5001, 0.0
      %v5034 = vmax.f32 %v5002, 0.0
      %v5035 = vmax.f32 %v5003, 0.0
      %v5036 = vmax.f32 %v5004, 0.0
      %v5037 = vmax.f32 %v5005, 0.0
      %v5038 = vmax.f32 %v5006, 0.0
      %v5039 = vmax.f32 %v5007, 0.0
      %v5040 = vmax.f32 %v5008, 0.0
      %v5041 = vmax.f32 %v5009, 0.0
      %v5042 = vmax.f32 %v5010, 0.0
      %v5043 = vmax.f32 %v5011, 0.0
      %v5044 = vpack.c.bf16 %v5013, %v5012
      %v5045 = vpack.c.bf16 %v5015, %v5014
      %v5046 = vpack.c.bf16 %v5017, %v5016
      %v5047 = vpack.c.bf16 %v5019, %v5018
      %v5048 = vpack.c.bf16 %v5021, %v5020
      %v5049 = vpack.c.bf16 %v5023, %v5022
      %v5050 = vpack.c.bf16 %v5025, %v5024
      %v5051 = vpack.c.bf16 %v5027, %v5026
      %v5052 = vpack.c.bf16 %v5029, %v5028
      %v5053 = vpack.c.bf16 %v5031, %v5030
      %v5054 = vpack.c.bf16 %v5033, %v5032
      %v5055 = vpack.c.bf16 %v5035, %v5034
      %v5056 = vpack.c.bf16 %v5037, %v5036
      %v5057 = vpack.c.bf16 %v5039, %v5038
      %v5058 = vpack.c.bf16 %v5041, %v5040
      %v5059 = vpack.c.bf16 %v5043, %v5042
      %v5076 = vunpack.c.l.b16 %v5044
      %v5077 = vunpack.c.h.b16 %v5044
      %v5078 = vunpack.c.l.b16 %v5045
      %v5079 = vunpack.c.h.b16 %v5045
      %v5080 = vunpack.c.l.b16 %v5046
      %v5081 = vunpack.c.h.b16 %v5046
      %v5082 = vunpack.c.l.b16 %v5047
      %v5083 = vunpack.c.h.b16 %v5047
      %v5084 = vunpack.c.l.b16 %v5048
      %v5085 = vunpack.c.h.b16 %v5048
      %v5086 = vunpack.c.l.b16 %v5049
      %v5087 = vunpack.c.h.b16 %v5049
      %v5088 = vunpack.c.l.b16 %v5050
      %v5089 = vunpack.c.h.b16 %v5050
      %v5090 = vunpack.c.l.b16 %v5051
      %v5091 = vunpack.c.h.b16 %v5051
      %v5092 = vunpack.c.l.b16 %v5052
      %v5093 = vunpack.c.h.b16 %v5052
      %v5094 = vunpack.c.l.b16 %v5053
      %v5095 = vunpack.c.h.b16 %v5053
      %v5096 = vunpack.c.l.b16 %v5054
      %v5097 = vunpack.c.h.b16 %v5054
      %v5098 = vunpack.c.l.b16 %v5055
      %v5099 = vunpack.c.h.b16 %v5055
      %v5100 = vunpack.c.l.b16 %v5056
      %v5101 = vunpack.c.h.b16 %v5056
      %v5102 = vunpack.c.l.b16 %v5057
      %v5103 = vunpack.c.h.b16 %v5057
      %v5104 = vunpack.c.l.b16 %v5058
      %v5105 = vunpack.c.h.b16 %v5058
      %v5106 = vunpack.c.l.b16 %v5059
      %v5107 = vunpack.c.h.b16 %v5059
      %v5108 = vpack.c.b16 %v5076, %v5076
      %v5109 = vpack.c.b16 %v5077, %v5077
      %v5110 = vpack.c.b16 %v5078, %v5078
      %v5111 = vpack.c.b16 %v5079, %v5079
      %v5112 = vpack.c.b16 %v5080, %v5080
      %v5113 = vpack.c.b16 %v5081, %v5081
      %v5114 = vpack.c.b16 %v5082, %v5082
      %v5115 = vpack.c.b16 %v5083, %v5083
      %v5116 = vpack.c.b16 %v5084, %v5084
      %v5117 = vpack.c.b16 %v5085, %v5085
      %v5118 = vpack.c.b16 %v5086, %v5086
      %v5119 = vpack.c.b16 %v5087, %v5087
      %v5120 = vpack.c.b16 %v5088, %v5088
      %v5121 = vpack.c.b16 %v5089, %v5089
      %v5122 = vpack.c.b16 %v5090, %v5090
      %v5123 = vpack.c.b16 %v5091, %v5091
      %v5124 = vpack.c.b16 %v5092, %v5092
      %v5125 = vpack.c.b16 %v5093, %v5093
      %v5126 = vpack.c.b16 %v5094, %v5094
      %v5127 = vpack.c.b16 %v5095, %v5095
      %v5128 = vpack.c.b16 %v5096, %v5096
      %v5129 = vpack.c.b16 %v5097, %v5097
      %v5130 = vpack.c.b16 %v5098, %v5098
      %v5131 = vpack.c.b16 %v5099, %v5099
      %v5132 = vpack.c.b16 %v5100, %v5100
      %v5133 = vpack.c.b16 %v5101, %v5101
      %v5134 = vpack.c.b16 %v5102, %v5102
      %v5135 = vpack.c.b16 %v5103, %v5103
      %v5136 = vpack.c.b16 %v5104, %v5104
      %v5137 = vpack.c.b16 %v5105, %v5105
      %v5138 = vpack.c.b16 %v5106, %v5106
      %v5139 = vpack.c.b16 %v5107, %v5107
      %5172 = vst [vmem:[%s170] sm:$0xf] %v5108
      %5173 = vst [vmem:[%s170 + $0x4] sm:$0xf] %v5109
      %5174 = vst [vmem:[%s170 + $0x8] sm:$0xf] %v5110
      %5175 = vst [vmem:[%s170 + $0xc] sm:$0xf] %v5111
      %5176 = vst [vmem:[%s170 + $0x10] sm:$0xf] %v5112
      %5177 = vst [vmem:[%s170 + $0x14] sm:$0xf] %v5113
      %5178 = vst [vmem:[%s170 + $0x18] sm:$0xf] %v5114
      %5179 = vst [vmem:[%s170 + $0x1c] sm:$0xf] %v5115
      %5180 = vst [vmem:[%s170 + $0x20] sm:$0xf] %v5116
      %5181 = vst [vmem:[%s170 + $0x24] sm:$0xf] %v5117
      %5182 = vst [vmem:[%s170 + $0x28] sm:$0xf] %v5118
      %5183 = vst [vmem:[%s170 + $0x2c] sm:$0xf] %v5119
      %5184 = vst [vmem:[%s170 + $0x30] sm:$0xf] %v5120
      %5185 = vst [vmem:[%s170 + $0x34] sm:$0xf] %v5121
      %5186 = vst [vmem:[%s170 + $0x38] sm:$0xf] %v5122
      %5187 = vst [vmem:[%s170 + $0x3c] sm:$0xf] %v5123
      %5188 = vst [vmem:[%s170 + $0x40] sm:$0xf] %v5124
      %5189 = vst [vmem:[%s170 + $0x44] sm:$0xf] %v5125
      %5190 = vst [vmem:[%s170 + $0x48] sm:$0xf] %v5126
      %5191 = vst [vmem:[%s170 + $0x4c] sm:$0xf] %v5127
      %5192 = vst [vmem:[%s170 + $0x50] sm:$0xf] %v5128
      %5193 = vst [vmem:[%s170 + $0x54] sm:$0xf] %v5129
      %5194 = vst [vmem:[%s170 + $0x58] sm:$0xf] %v5130
      %5195 = vst [vmem:[%s170 + $0x5c] sm:$0xf] %v5131
      %5196 = vst [vmem:[%s170 + $0x60] sm:$0xf] %v5132
      %5197 = vst [vmem:[%s170 + $0x64] sm:$0xf] %v5133
      %5198 = vst [vmem:[%s170 + $0x68] sm:$0xf] %v5134
      %5199 = vst [vmem:[%s170 + $0x6c] sm:$0xf] %v5135
      %5200 = vst [vmem:[%s170 + $0x70] sm:$0xf] %v5136
      %5201 = vst [vmem:[%s170 + $0x74] sm:$0xf] %v5137
      %5202 = vst [vmem:[%s170 + $0x78] sm:$0xf] %v5138
      %5203 = vst [vmem:[%s170 + $0x7c] sm:$0xf] %v5139
      %p5204 = scmp.lt.s32.totalorder %s14, 1
      %s5205 = scalar_select %p5204, %s14, 1
      %s5206 = smul.addr %s5205, 32
      %s5207 = smul.addr %s5206, 4
      %s5208 = scalar_lea.vmem %s3, %s5207
      // Predicated region
      $region33: #{bottleneck_forward.4} parent=31 // pred_check
        %p5209 = pneg %p100
      $region34: #{bottleneck_forward.4} parent=31 // pred_check_branch
        %5211 = sbr.rel (%p5209) target = $region36
      $region35: #{bottleneck_forward.4} parent=31 // pred_region
        _
      $region36: #{bottleneck_forward.4} parent=31 // pred_fallthru
        _
    $region32: #{bottleneck_forward.4} parent=5 // pred_fallthru
      _
    %p5212 = scmp.le.s32.totalorder 2, %s9
    // Predicated region
    $region37: #{bottleneck_forward.4} parent=5 // pred_check
      %p5213 = pneg %p5212
    $region38: #{bottleneck_forward.4} parent=5 // pred_check_branch
      %5215 = sbr.rel (%p5213) target = $region40
    $region39: #{bottleneck_forward.4} parent=5 // pred_region
      %s5216 = ssub.s32 %s9, 2
      // Predicated region
      $region41: #{bottleneck_forward.4} parent=39 // pred_check
        %p5217 = pneg %p106
      $region42: #{bottleneck_forward.4} parent=39 // pred_check_branch
        %5219 = sbr.rel (%p5217) target = $region44
      $region43: #{bottleneck_forward.4} parent=39 // pred_region
        %p5220 = scmp.lt.s32.totalorder %s15, 1
        %s5221 = scalar_select %p5220, %s15, 1
        %s5222 = smul.addr %s5221, 32
        %s5223 = smul.addr %s5222, 4
        %s5224 = scalar_lea.vmem %s3, %s5223
      $region44: #{bottleneck_forward.4} parent=39 // pred_fallthru
        _
    $region40: #{bottleneck_forward.4} parent=5 // pred_fallthru
      _
  $region6: #{bottleneck_forward.4} parent=0 // loop_footer
    %s13 = sadd.s32 1, %s9
  $region7: #{bottleneck_forward.4} parent=0 // loop_footer_branch
    %8 = sbr.rel target = $region3
  $region8: #{bottleneck_forward.4} parent=0 // loop_exit
    _

</llo_original>
